<compile_context>
chip_gen: v6e
topology: v6e:2x2x1
jax: 0.10.0
libtpu: 0.0.40
codegen_flags: <defaults>
</compile_context>

<pallas_src>
import jax
import jax.numpy as jnp
from jax.experimental import pallas as pl
from jax.experimental.pallas import tpu as pltpu

# ----------------------------- config (small, synthetic) --------------------
EMB_DIM = 128          # embedding_dim (real CLIP-ViT-B/32 text hidden is 512)
HID_DIM = 256          # hidden_dim of the classifier FFN
N_HEADS = 4
HEAD_DIM = EMB_DIM // N_HEADS
N_CLASSES = 2
C_PAD = 128            # lane-padded classifier width (sliced to N_CLASSES)
LN_EPS = 1e-5
VOCAB = 64             # synthetic tokenizer vocab
VOCAB_PAD = 128        # lane-padded vocab for the one-hot embedding matmul
SEQ_TXT = 8            # text tokens
SEQ_PAD = 16           # padded joint sequence length (image rows + text rows)
BATCH = 2
IMG_C, IMG_H, IMG_W = 4, 16, 16
IMG_FEATS = IMG_C * IMG_H * IMG_W          # 1024

# ---- packed "wide" weight slab (128 rows, bf16): column offsets -------------
COL_LIN1 = 0
COL_QKV = COL_LIN1 + EMB_DIM               # 128
COL_WO = COL_QKV + 3 * EMB_DIM             # 512
COL_W1 = COL_WO + EMB_DIM                  # 640
COL_WC = COL_W1 + HID_DIM                  # 896
W_WIDE_COLS = COL_WC + C_PAD               # 1024

# ---- packed "tall" weight slab (128 cols, bf16): row offsets ----------------
ROW_WIMG = 0
ROW_W2 = ROW_WIMG + IMG_FEATS              # 1024
ROW_EMB = ROW_W2 + HID_DIM                 # 1280
W_TALL_ROWS = ROW_EMB + VOCAB_PAD          # 1408

# ---- packed bias / LN slab (rows of a (16, 384) f32 array) ------------------
R_B_IMG, R_B_LIN1, R_B_QKV, R_B_O = 0, 1, 2, 3
R_LN1_W, R_LN1_B, R_B_FF1, R_B_FF2 = 4, 5, 6, 7
R_LN2_W, R_LN2_B, R_B_CLS = 8, 9, 10
BIAS_ROWS = 16
BIAS_COLS = 3 * EMB_DIM                    # 384 (widest bias = bqkv)


def _vmem():
    return pl.BlockSpec(memory_space=pltpu.MemorySpace.VMEM)


# ------------------------ fused full-forward kernel --------------------------
def _fused_forward_kernel(ids_ref, img_ref, mask_ref,
                          w_wide_ref, w_tall_ref, bias_ref, o_ref):
    f32, bf16 = jnp.float32, jnp.bfloat16

    B, ST = ids_ref.shape                  # (2, 8)
    D, HID = EMB_DIM, HID_DIM
    SP = SEQ_PAD
    IMG_ROWS = SP - ST                     # 8 rows: row 0 = image token, rest masked
    H, HD = N_HEADS, HEAD_DIM
    scale = 1.0 / (HD ** 0.5)

    def brow(r, w):                        # one packed bias / LN row, (1, w) f32
        return bias_ref[r:r + 1, 0:w]

    # ---- build padded joint-sequence mask in-kernel (no wrapper glue) -------
    am = mask_ref[...]                                              # (B, ST)
    pos = jax.lax.broadcasted_iota(jnp.int32, (B, SP), 1)
    img_mask = jnp.where(pos == 0, 1.0, 0.0).astype(f32)            # image token
    txt_mask = jnp.concatenate([jnp.zeros((B, IMG_ROWS), f32), am], axis=1)
    mask = img_mask + txt_mask                                      # (B, SP)
    neg = (1.0 - mask) * (-1e9)                                     # key mask
    neg3 = neg[:, None, :]                                          # (B, 1, SP)

    # ---- frozen "CLIP" feature extraction (all on the MXU) ------------------
    # image token: (B, 1024) @ (1024, D)
    img_tok = jnp.dot(img_ref[...], w_tall_ref[ROW_WIMG:ROW_WIMG + IMG_FEATS, :],
                      preferred_element_type=f32) + brow(R_B_IMG, D)   # (B, D)
    # text tokens: embedding lookup as one-hot matmul, lane-padded to 128
    iota_v = jax.lax.broadcasted_iota(jnp.int32, (B, ST, VOCAB_PAD), 2)
    one_hot = jnp.where(ids_ref[...][:, :, None] == iota_v, 1.0, 0.0).astype(bf16)
    txt_tok = jnp.dot(one_hot.reshape(B * ST, VOCAB_PAD),
                      w_tall_ref[ROW_EMB:ROW_EMB + VOCAB_PAD, :],
                      preferred_element_type=f32)                   # (B*ST, D)

    # ---- assemble joint sequence: image rows first, then text rows ----------
    seq = jnp.concatenate(
        [jnp.broadcast_to(img_tok[:, None, :], (B, IMG_ROWS, D)),
         txt_tok.reshape(B, ST, D)], axis=1)                        # (B, SP, D)
    x = seq.reshape(B * SP, D)

    # trainable clip.linear1 projection (token-wise, batch vectorized)
    x = jnp.dot(x.astype(bf16), w_wide_ref[:, COL_LIN1:COL_LIN1 + D],
                preferred_element_type=f32) + brow(R_B_LIN1, D)     # (B*SP, D)

    # ---- multi-head self attention (wo applied once, un-folded) -------------
    qkv = jnp.dot(x.astype(bf16), w_wide_ref[:, COL_QKV:COL_QKV + 3 * D],
                  preferred_element_type=f32) + brow(R_B_QKV, 3 * D)
    q = qkv[:, 0:D].reshape(B, SP, D)
    k = qkv[:, D:2 * D].reshape(B, SP, D)
    v = qkv[:, 2 * D:3 * D].reshape(B, SP, D)
    head_out = []
    for h in range(H):                                  # static unroll, H = 4
        lo = h * HD
        qh = q[:, :, lo:lo + HD].astype(bf16)                       # (B, SP, HD)
        kh = k[:, :, lo:lo + HD].astype(bf16)
        vh = v[:, :, lo:lo + HD].astype(bf16)
        s = jnp.einsum('bqd,bkd->bqk', qh, kh,
                       preferred_element_type=f32) * scale + neg3   # (B, SP, SP)
        m = jnp.max(s, axis=-1, keepdims=True)
        p = jnp.exp(s - m)
        p = p / jnp.sum(p, axis=-1, keepdims=True)                  # exact division
        head_out.append(jnp.einsum('bqk,bkd->bqd', p.astype(bf16), vh,
                                   preferred_element_type=f32))     # (B, SP, HD)
    attn = jnp.concatenate(head_out, axis=-1).reshape(B * SP, D)    # (B*SP, D)
    attn = jnp.dot(attn.astype(bf16), w_wide_ref[:, COL_WO:COL_WO + D],
                   preferred_element_type=f32) + brow(R_B_O, D)     # one wo matmul

    # ---- residual + LayerNorm 1 (post-LN) -----------------------------------
    h1 = x + attn
    mu = jnp.mean(h1, axis=-1, keepdims=True)
    var = jnp.mean((h1 - mu) ** 2, axis=-1, keepdims=True)
    h1 = (h1 - mu) * jax.lax.rsqrt(var + LN_EPS) * brow(R_LN1_W, D) + brow(R_LN1_B, D)

    # ---- feed-forward (ReLU) + residual + LayerNorm 2 ------------------------
    f = jnp.dot(h1.astype(bf16), w_wide_ref[:, COL_W1:COL_W1 + HID],
                preferred_element_type=f32) + brow(R_B_FF1, HID)
    f = jnp.maximum(f, 0.0)
    f = jnp.dot(f.astype(bf16), w_tall_ref[ROW_W2:ROW_W2 + HID, :],
                preferred_element_type=f32) + brow(R_B_FF2, D)
    h2 = h1 + f
    mu2 = jnp.mean(h2, axis=-1, keepdims=True)
    var2 = jnp.mean((h2 - mu2) ** 2, axis=-1, keepdims=True)
    h2 = (h2 - mu2) * jax.lax.rsqrt(var2 + LN_EPS) * brow(R_LN2_W, D) + brow(R_LN2_B, D)

    # ---- masked mean pool over the sequence ----------------------------------
    pooled = jnp.sum(h2.reshape(B, SP, D) * mask[:, :, None], axis=1)   # (B, D)
    pooled = pooled / jnp.sum(mask, axis=-1, keepdims=True)

    # ---- classification head (lane-padded output, sliced in the wrapper) -----
    o_ref[...] = jnp.dot(pooled.astype(bf16), w_wide_ref[:, COL_WC:COL_WC + C_PAD],
                         preferred_element_type=f32) + brow(R_B_CLS, C_PAD)


# ------------------------------- parameters ----------------------------------
def init_params(key):
    ks = jax.random.split(key, 8)
    sc = 0.02
    f32 = jnp.float32

    def nrm(k, shape):
        return sc * jax.random.normal(k, shape, f32)

    # frozen "CLIP" proxies
    # TODO(synk): real FineTunedCLIP uses a frozen pretrained CLIP backbone;
    # replaced with a frozen linear image encoder + token embedding table.
    tok_emb = nrm(ks[0], (VOCAB, EMB_DIM))
    w_img = nrm(ks[1], (IMG_FEATS, EMB_DIM))
    w_lin1 = nrm(ks[2], (EMB_DIM, EMB_DIM))          # trainable clip.linear1
    wqkv = nrm(ks[3], (EMB_DIM, 3 * EMB_DIM))        # encoder layer
    wo = nrm(ks[4], (EMB_DIM, EMB_DIM))
    w1 = nrm(ks[5], (EMB_DIM, HID_DIM))
    w2 = nrm(ks[6], (HID_DIM, EMB_DIM))
    wc = nrm(ks[7], (EMB_DIM, N_CLASSES))            # classification head

    # ---- pack into three slabs (one DMA each) --------------------------------
    w_wide = jnp.zeros((EMB_DIM, W_WIDE_COLS), f32)
    w_wide = w_wide.at[:, COL_LIN1:COL_LIN1 + EMB_DIM].set(w_lin1)
    w_wide = w_wide.at[:, COL_QKV:COL_QKV + 3 * EMB_DIM].set(wqkv)
    w_wide = w_wide.at[:, COL_WO:COL_WO + EMB_DIM].set(wo)
    w_wide = w_wide.at[:, COL_W1:COL_W1 + HID_DIM].set(w1)
    w_wide = w_wide.at[:, COL_WC:COL_WC + N_CLASSES].set(wc)

    w_tall = jnp.zeros((W_TALL_ROWS, EMB_DIM), f32)
    w_tall = w_tall.at[ROW_WIMG:ROW_WIMG + IMG_FEATS, :].set(w_img)
    w_tall = w_tall.at[ROW_W2:ROW_W2 + HID_DIM, :].set(w2)
    w_tall = w_tall.at[ROW_EMB:ROW_EMB + VOCAB, :].set(tok_emb)

    biases = jnp.zeros((BIAS_ROWS, BIAS_COLS), f32)  # linear biases zero-init
    biases = biases.at[R_LN1_W, 0:EMB_DIM].set(1.0)  # LayerNorm scales
    biases = biases.at[R_LN2_W, 0:EMB_DIM].set(1.0)

    return {"w_wide": w_wide.astype(jnp.bfloat16),
            "w_tall": w_tall.astype(jnp.bfloat16),
            "biases": biases}


# ------------------------------- forward --------------------------------------
@jax.jit
def model_v0_forward(params, text_ids, images, attention_mask):
    b = images.shape[0]
    # only wrapper glue left: flatten + bf16-cast the image (halves its DMA)
    img_flat = images.reshape(b, -1).astype(jnp.bfloat16)           # (B, 1024)

    logits_pad = pl.pallas_call(
        _fused_forward_kernel,
        out_shape=jax.ShapeDtypeStruct((b, C_PAD), jnp.float32),
        in_specs=[_vmem()] * 6,
        out_specs=_vmem(),
        compiler_params=pltpu.CompilerParams(vmem_limit_bytes=4 * 1024 * 1024),
    )(text_ids.astype(jnp.int32), img_flat, attention_mask.astype(jnp.float32),
      params["w_wide"], params["w_tall"], params["biases"])
    return logits_pad[:, :N_CLASSES]                                # (B, 2)


def model_v0_predict(params, text_ids, images, attention_mask):
    return jax.nn.softmax(
        model_v0_forward(params, text_ids, images, attention_mask), axis=-1)


# --------------------------------- main ----------------------------------------
if __name__ == "__main__":
    key = jax.random.PRNGKey(0)
    k_img, k_txt, k_par = jax.random.split(key, 3)

    images = jax.random.normal(k_img, (BATCH, IMG_C, IMG_H, IMG_W), jnp.float32)
    text_ids = jax.random.randint(k_txt, (BATCH, SEQ_TXT), 0, VOCAB, jnp.int32)
    attention_mask = jnp.array(
        [[1, 1, 1, 1, 1, 1, 1, 1],
         [1, 1, 1, 1, 1, 1, 0, 0]], jnp.float32)                    # pad example 1

    params = init_params(k_par)

    logits = jax.block_until_ready(
        model_v0_forward(params, text_ids, images, attention_mask))
    probs = jax.block_until_ready(
        model_v0_predict(params, text_ids, images, attention_mask))

    assert logits.shape == (BATCH, N_CLASSES)
    assert probs.shape == (BATCH, N_CLASSES)
    assert bool(jnp.all(jnp.isfinite(logits)))
    print("KERNEL_OK")
</pallas_src>

<mosaic_0001>
module attributes {stable_mosaic.version = 11 : i64} {
  func.func @_fused_forward_kernel(%arg0: memref<2x8xi32, #tpu.memory_space<vmem>>, %arg1: memref<2x1024xbf16, #tpu.memory_space<vmem>>, %arg2: memref<2x8xf32, #tpu.memory_space<vmem>>, %arg3: memref<128x1024xbf16, #tpu.memory_space<vmem>>, %arg4: memref<1408x128xbf16, #tpu.memory_space<vmem>>, %arg5: memref<16x384xf32, #tpu.memory_space<vmem>>, %arg6: memref<2x128xf32, #tpu.memory_space<vmem>>) attributes {dimension_semantics = [], scalar_prefetch = 0 : i64, scratch_operands = 0 : i64, tpu.core_type = #tpu.core_type<tc>} {
    %c0 = arith.constant 0 : index
    %c0_0 = arith.constant 0 : index
    %0 = vector.load %arg2[%c0, %c0_0] : memref<2x8xf32, #tpu.memory_space<vmem>>, vector<2x8xf32>
    %1 = tpu.iota {dimensions = array<i32: 1>} : vector<2x16xi32>
    %c0_i32 = arith.constant 0 : i32
    %2 = vector.broadcast %c0_i32 : i32 to vector<2x16xi32>
    %3 = arith.cmpi eq, %1, %2 : vector<2x16xi32>
    %cst = arith.constant 1.000000e+00 : f32
    %cst_1 = arith.constant 0.000000e+00 : f32
    %4 = vector.broadcast %cst : f32 to vector<2x16xf32>
    %5 = vector.broadcast %cst_1 : f32 to vector<2x16xf32>
    %6 = arith.select %3, %4, %5 : vector<2x16xi1>, vector<2x16xf32>
    %cst_2 = arith.constant 0.000000e+00 : f32
    %7 = vector.broadcast %cst_2 : f32 to vector<2x8xf32>
    %8 = tpu.concatenate %7, %0 in 1 : vector<2x8xf32>, vector<2x8xf32> -> vector<2x16xf32>
    %9 = arith.addf %6, %8 : vector<2x16xf32>
    %cst_3 = arith.constant 1.000000e+00 : f32
    %10 = vector.broadcast %cst_3 : f32 to vector<2x16xf32>
    %11 = arith.subf %10, %9 : vector<2x16xf32>
    %cst_4 = arith.constant -1.000000e+09 : f32
    %12 = vector.broadcast %cst_4 : f32 to vector<2x16xf32>
    %13 = arith.mulf %11, %12 : vector<2x16xf32>
    %14 = vector.shape_cast %13 : vector<2x16xf32> to vector<2x1x16xf32>
    %c0_5 = arith.constant 0 : index
    %c0_6 = arith.constant 0 : index
    %15 = vector.load %arg1[%c0_5, %c0_6] : memref<2x1024xbf16, #tpu.memory_space<vmem>>, vector<2x1024xbf16>
    %c0_7 = arith.constant 0 : index
    %c0_8 = arith.constant 0 : index
    %16 = vector.load %arg4[%c0_7, %c0_8] : memref<1408x128xbf16, #tpu.memory_space<vmem>>, vector<1024x128xbf16>
    %cst_9 = arith.constant dense<0.000000e+00> : vector<2x128xf32>
    %17 = tpu.matmul %15, %16, %cst_9 {dimension_numbers = #tpu.dot_dimension_numbers<[1], [0], [0], [1], [0, 0, 1, 1], [], []>} : vector<2x1024xbf16>, vector<1024x128xbf16>, vector<2x128xf32> -> vector<2x128xf32>
    %c0_10 = arith.constant 0 : index
    %c0_11 = arith.constant 0 : index
    %18 = vector.load %arg5[%c0_10, %c0_11] : memref<16x384xf32, #tpu.memory_space<vmem>>, vector<1x128xf32>
    %19 = vector.broadcast %18 : vector<1x128xf32> to vector<2x128xf32>
    %20 = arith.addf %17, %19 : vector<2x128xf32>
    %21 = tpu.iota {dimensions = array<i32: 2>} : vector<2x8x128xi32>
    %c0_12 = arith.constant 0 : index
    %c0_13 = arith.constant 0 : index
    %22 = vector.load %arg0[%c0_12, %c0_13] : memref<2x8xi32, #tpu.memory_space<vmem>>, vector<2x8xi32>
    %23 = vector.shape_cast %22 : vector<2x8xi32> to vector<2x8x1xi32>
    %24 = vector.broadcast %23 : vector<2x8x1xi32> to vector<2x8x128xi32>
    %25 = arith.cmpi eq, %24, %21 : vector<2x8x128xi32>
    %cst_14 = arith.constant 1.000000e+00 : f32
    %cst_15 = arith.constant 0.000000e+00 : f32
    %26 = vector.broadcast %cst_14 : f32 to vector<2x8x128xf32>
    %27 = vector.broadcast %cst_15 : f32 to vector<2x8x128xf32>
    %28 = arith.select %25, %26, %27 : vector<2x8x128xi1>, vector<2x8x128xf32>
    %29 = arith.truncf %28 : vector<2x8x128xf32> to vector<2x8x128xbf16>
    %30 = vector.shape_cast %29 : vector<2x8x128xbf16> to vector<16x128xbf16>
    %c1280 = arith.constant 1280 : index
    %c0_16 = arith.constant 0 : index
    %31 = vector.load %arg4[%c1280, %c0_16] : memref<1408x128xbf16, #tpu.memory_space<vmem>>, vector<128x128xbf16>
    %cst_17 = arith.constant dense<0.000000e+00> : vector<16x128xf32>
    %32 = tpu.matmul %30, %31, %cst_17 {dimension_numbers = #tpu.dot_dimension_numbers<[1], [0], [0], [1], [0, 0, 1, 1], [], []>} : vector<16x128xbf16>, vector<128x128xbf16>, vector<16x128xf32> -> vector<16x128xf32>
    %33 = vector.shape_cast %20 : vector<2x128xf32> to vector<2x1x128xf32>
    %34 = vector.shape_cast %33 : vector<2x1x128xf32> to vector<2x1x128xf32>
    %35 = vector.broadcast %34 : vector<2x1x128xf32> to vector<2x8x128xf32>
    %36 = vector.shape_cast %32 : vector<16x128xf32> to vector<2x8x128xf32>
    %37 = tpu.concatenate %35, %36 in 1 : vector<2x8x128xf32>, vector<2x8x128xf32> -> vector<2x16x128xf32>
    %38 = vector.shape_cast %37 : vector<2x16x128xf32> to vector<32x128xf32>
    %39 = arith.truncf %38 : vector<32x128xf32> to vector<32x128xbf16>
    %c0_18 = arith.constant 0 : index
    %c0_19 = arith.constant 0 : index
    %40 = vector.load %arg3[%c0_18, %c0_19] : memref<128x1024xbf16, #tpu.memory_space<vmem>>, vector<128x128xbf16>
    %cst_20 = arith.constant dense<0.000000e+00> : vector<32x128xf32>
    %41 = tpu.matmul %39, %40, %cst_20 {dimension_numbers = #tpu.dot_dimension_numbers<[1], [0], [0], [1], [0, 0, 1, 1], [], []>} : vector<32x128xbf16>, vector<128x128xbf16>, vector<32x128xf32> -> vector<32x128xf32>
    %c1 = arith.constant 1 : index
    %c0_21 = arith.constant 0 : index
    %42 = vector.load %arg5[%c1, %c0_21] : memref<16x384xf32, #tpu.memory_space<vmem>>, vector<1x128xf32>
    %43 = vector.broadcast %42 : vector<1x128xf32> to vector<32x128xf32>
    %44 = arith.addf %41, %43 : vector<32x128xf32>
    %45 = arith.truncf %44 : vector<32x128xf32> to vector<32x128xbf16>
    %c0_22 = arith.constant 0 : index
    %c128 = arith.constant 128 : index
    %46 = vector.load %arg3[%c0_22, %c128] : memref<128x1024xbf16, #tpu.memory_space<vmem>>, vector<128x384xbf16>
    %cst_23 = arith.constant dense<0.000000e+00> : vector<32x384xf32>
    %47 = tpu.matmul %45, %46, %cst_23 {dimension_numbers = #tpu.dot_dimension_numbers<[1], [0], [0], [1], [0, 0, 1, 1], [], []>} : vector<32x128xbf16>, vector<128x384xbf16>, vector<32x384xf32> -> vector<32x384xf32>
    %c2 = arith.constant 2 : index
    %c0_24 = arith.constant 0 : index
    %48 = vector.load %arg5[%c2, %c0_24] : memref<16x384xf32, #tpu.memory_space<vmem>>, vector<1x384xf32>
    %49 = vector.broadcast %48 : vector<1x384xf32> to vector<32x384xf32>
    %50 = arith.addf %47, %49 : vector<32x384xf32>
    %51 = vector.extract_strided_slice %50 {offsets = [0, 0], sizes = [32, 128], strides = [1, 1]} : vector<32x384xf32> to vector<32x128xf32>
    %52 = vector.shape_cast %51 : vector<32x128xf32> to vector<2x16x128xf32>
    %53 = vector.extract_strided_slice %50 {offsets = [0, 128], sizes = [32, 128], strides = [1, 1]} : vector<32x384xf32> to vector<32x128xf32>
    %54 = vector.shape_cast %53 : vector<32x128xf32> to vector<2x16x128xf32>
    %55 = vector.extract_strided_slice %50 {offsets = [0, 256], sizes = [32, 128], strides = [1, 1]} : vector<32x384xf32> to vector<32x128xf32>
    %56 = vector.shape_cast %55 : vector<32x128xf32> to vector<2x16x128xf32>
    %57 = vector.extract_strided_slice %52 {offsets = [0, 0, 0], sizes = [2, 16, 32], strides = [1, 1, 1]} : vector<2x16x128xf32> to vector<2x16x32xf32>
    %58 = arith.truncf %57 : vector<2x16x32xf32> to vector<2x16x32xbf16>
    %59 = vector.extract_strided_slice %54 {offsets = [0, 0, 0], sizes = [2, 16, 32], strides = [1, 1, 1]} : vector<2x16x128xf32> to vector<2x16x32xf32>
    %60 = arith.truncf %59 : vector<2x16x32xf32> to vector<2x16x32xbf16>
    %61 = vector.extract_strided_slice %56 {offsets = [0, 0, 0], sizes = [2, 16, 32], strides = [1, 1, 1]} : vector<2x16x128xf32> to vector<2x16x32xf32>
    %62 = arith.truncf %61 : vector<2x16x32xf32> to vector<2x16x32xbf16>
    "tpu.trace_start"() <{level = 10 : i32, message = "bqd,bkd->bqk"}> : () -> ()
    %cst_25 = arith.constant dense<0.000000e+00> : vector<2x16x16xf32>
    %63 = tpu.matmul %58, %60, %cst_25 {dimension_numbers = #tpu.dot_dimension_numbers<[2], [2], [1], [1], [0, 0, 0, 1, 1, 1], [0], [0]>} : vector<2x16x32xbf16>, vector<2x16x32xbf16>, vector<2x16x16xf32> -> vector<2x16x16xf32>
    "tpu.trace_stop"() : () -> ()
    %cst_26 = arith.constant 0.176776692 : f32
    %64 = vector.broadcast %cst_26 : f32 to vector<2x16x16xf32>
    %65 = arith.mulf %63, %64 : vector<2x16x16xf32>
    %66 = vector.broadcast %14 : vector<2x1x16xf32> to vector<2x16x16xf32>
    %67 = arith.addf %65, %66 : vector<2x16x16xf32>
    %cst_27 = arith.constant dense<0xFF800000> : vector<2x16xf32>
    %68 = vector.multi_reduction <maximumf>, %67, %cst_27 [2] : vector<2x16x16xf32> to vector<2x16xf32>
    %69 = vector.shape_cast %68 : vector<2x16xf32> to vector<2x16x1xf32>
    %70 = vector.broadcast %69 : vector<2x16x1xf32> to vector<2x16x16xf32>
    %71 = arith.subf %67, %70 : vector<2x16x16xf32>
    %72 = math.exp %71 : vector<2x16x16xf32>
    %cst_28 = arith.constant dense<0.000000e+00> : vector<2x16xf32>
    %73 = vector.multi_reduction <add>, %72, %cst_28 [2] : vector<2x16x16xf32> to vector<2x16xf32>
    %74 = vector.shape_cast %73 : vector<2x16xf32> to vector<2x16x1xf32>
    %75 = vector.broadcast %74 : vector<2x16x1xf32> to vector<2x16x16xf32>
    %76 = arith.divf %72, %75 : vector<2x16x16xf32>
    %77 = arith.truncf %76 : vector<2x16x16xf32> to vector<2x16x16xbf16>
    "tpu.trace_start"() <{level = 10 : i32, message = "bqk,bkd->bqd"}> : () -> ()
    %cst_29 = arith.constant dense<0.000000e+00> : vector<2x16x32xf32>
    %78 = tpu.matmul %77, %62, %cst_29 {dimension_numbers = #tpu.dot_dimension_numbers<[2], [1], [1], [2], [0, 0, 0, 1, 1, 2], [0], [0]>} : vector<2x16x16xbf16>, vector<2x16x32xbf16>, vector<2x16x32xf32> -> vector<2x16x32xf32>
    "tpu.trace_stop"() : () -> ()
    %79 = vector.extract_strided_slice %52 {offsets = [0, 0, 32], sizes = [2, 16, 32], strides = [1, 1, 1]} : vector<2x16x128xf32> to vector<2x16x32xf32>
    %80 = arith.truncf %79 : vector<2x16x32xf32> to vector<2x16x32xbf16>
    %81 = vector.extract_strided_slice %54 {offsets = [0, 0, 32], sizes = [2, 16, 32], strides = [1, 1, 1]} : vector<2x16x128xf32> to vector<2x16x32xf32>
    %82 = arith.truncf %81 : vector<2x16x32xf32> to vector<2x16x32xbf16>
    %83 = vector.extract_strided_slice %56 {offsets = [0, 0, 32], sizes = [2, 16, 32], strides = [1, 1, 1]} : vector<2x16x128xf32> to vector<2x16x32xf32>
    %84 = arith.truncf %83 : vector<2x16x32xf32> to vector<2x16x32xbf16>
    "tpu.trace_start"() <{level = 10 : i32, message = "bqd,bkd->bqk"}> : () -> ()
    %cst_30 = arith.constant dense<0.000000e+00> : vector<2x16x16xf32>
    %85 = tpu.matmul %80, %82, %cst_30 {dimension_numbers = #tpu.dot_dimension_numbers<[2], [2], [1], [1], [0, 0, 0, 1, 1, 1], [0], [0]>} : vector<2x16x32xbf16>, vector<2x16x32xbf16>, vector<2x16x16xf32> -> vector<2x16x16xf32>
    "tpu.trace_stop"() : () -> ()
    %cst_31 = arith.constant 0.176776692 : f32
    %86 = vector.broadcast %cst_31 : f32 to vector<2x16x16xf32>
    %87 = arith.mulf %85, %86 : vector<2x16x16xf32>
    %88 = vector.broadcast %14 : vector<2x1x16xf32> to vector<2x16x16xf32>
    %89 = arith.addf %87, %88 : vector<2x16x16xf32>
    %cst_32 = arith.constant dense<0xFF800000> : vector<2x16xf32>
    %90 = vector.multi_reduction <maximumf>, %89, %cst_32 [2] : vector<2x16x16xf32> to vector<2x16xf32>
    %91 = vector.shape_cast %90 : vector<2x16xf32> to vector<2x16x1xf32>
    %92 = vector.broadcast %91 : vector<2x16x1xf32> to vector<2x16x16xf32>
    %93 = arith.subf %89, %92 : vector<2x16x16xf32>
    %94 = math.exp %93 : vector<2x16x16xf32>
    %cst_33 = arith.constant dense<0.000000e+00> : vector<2x16xf32>
    %95 = vector.multi_reduction <add>, %94, %cst_33 [2] : vector<2x16x16xf32> to vector<2x16xf32>
    %96 = vector.shape_cast %95 : vector<2x16xf32> to vector<2x16x1xf32>
    %97 = vector.broadcast %96 : vector<2x16x1xf32> to vector<2x16x16xf32>
    %98 = arith.divf %94, %97 : vector<2x16x16xf32>
    %99 = arith.truncf %98 : vector<2x16x16xf32> to vector<2x16x16xbf16>
    "tpu.trace_start"() <{level = 10 : i32, message = "bqk,bkd->bqd"}> : () -> ()
    %cst_34 = arith.constant dense<0.000000e+00> : vector<2x16x32xf32>
    %100 = tpu.matmul %99, %84, %cst_34 {dimension_numbers = #tpu.dot_dimension_numbers<[2], [1], [1], [2], [0, 0, 0, 1, 1, 2], [0], [0]>} : vector<2x16x16xbf16>, vector<2x16x32xbf16>, vector<2x16x32xf32> -> vector<2x16x32xf32>
    "tpu.trace_stop"() : () -> ()
    %101 = vector.extract_strided_slice %52 {offsets = [0, 0, 64], sizes = [2, 16, 32], strides = [1, 1, 1]} : vector<2x16x128xf32> to vector<2x16x32xf32>
    %102 = arith.truncf %101 : vector<2x16x32xf32> to vector<2x16x32xbf16>
    %103 = vector.extract_strided_slice %54 {offsets = [0, 0, 64], sizes = [2, 16, 32], strides = [1, 1, 1]} : vector<2x16x128xf32> to vector<2x16x32xf32>
    %104 = arith.truncf %103 : vector<2x16x32xf32> to vector<2x16x32xbf16>
    %105 = vector.extract_strided_slice %56 {offsets = [0, 0, 64], sizes = [2, 16, 32], strides = [1, 1, 1]} : vector<2x16x128xf32> to vector<2x16x32xf32>
    %106 = arith.truncf %105 : vector<2x16x32xf32> to vector<2x16x32xbf16>
    "tpu.trace_start"() <{level = 10 : i32, message = "bqd,bkd->bqk"}> : () -> ()
    %cst_35 = arith.constant dense<0.000000e+00> : vector<2x16x16xf32>
    %107 = tpu.matmul %102, %104, %cst_35 {dimension_numbers = #tpu.dot_dimension_numbers<[2], [2], [1], [1], [0, 0, 0, 1, 1, 1], [0], [0]>} : vector<2x16x32xbf16>, vector<2x16x32xbf16>, vector<2x16x16xf32> -> vector<2x16x16xf32>
    "tpu.trace_stop"() : () -> ()
    %cst_36 = arith.constant 0.176776692 : f32
    %108 = vector.broadcast %cst_36 : f32 to vector<2x16x16xf32>
    %109 = arith.mulf %107, %108 : vector<2x16x16xf32>
    %110 = vector.broadcast %14 : vector<2x1x16xf32> to vector<2x16x16xf32>
    %111 = arith.addf %109, %110 : vector<2x16x16xf32>
    %cst_37 = arith.constant dense<0xFF800000> : vector<2x16xf32>
    %112 = vector.multi_reduction <maximumf>, %111, %cst_37 [2] : vector<2x16x16xf32> to vector<2x16xf32>
    %113 = vector.shape_cast %112 : vector<2x16xf32> to vector<2x16x1xf32>
    %114 = vector.broadcast %113 : vector<2x16x1xf32> to vector<2x16x16xf32>
    %115 = arith.subf %111, %114 : vector<2x16x16xf32>
    %116 = math.exp %115 : vector<2x16x16xf32>
    %cst_38 = arith.constant dense<0.000000e+00> : vector<2x16xf32>
    %117 = vector.multi_reduction <add>, %116, %cst_38 [2] : vector<2x16x16xf32> to vector<2x16xf32>
    %118 = vector.shape_cast %117 : vector<2x16xf32> to vector<2x16x1xf32>
    %119 = vector.broadcast %118 : vector<2x16x1xf32> to vector<2x16x16xf32>
    %120 = arith.divf %116, %119 : vector<2x16x16xf32>
    %121 = arith.truncf %120 : vector<2x16x16xf32> to vector<2x16x16xbf16>
    "tpu.trace_start"() <{level = 10 : i32, message = "bqk,bkd->bqd"}> : () -> ()
    %cst_39 = arith.constant dense<0.000000e+00> : vector<2x16x32xf32>
    %122 = tpu.matmul %121, %106, %cst_39 {dimension_numbers = #tpu.dot_dimension_numbers<[2], [1], [1], [2], [0, 0, 0, 1, 1, 2], [0], [0]>} : vector<2x16x16xbf16>, vector<2x16x32xbf16>, vector<2x16x32xf32> -> vector<2x16x32xf32>
    "tpu.trace_stop"() : () -> ()
    %123 = vector.extract_strided_slice %52 {offsets = [0, 0, 96], sizes = [2, 16, 32], strides = [1, 1, 1]} : vector<2x16x128xf32> to vector<2x16x32xf32>
    %124 = arith.truncf %123 : vector<2x16x32xf32> to vector<2x16x32xbf16>
    %125 = vector.extract_strided_slice %54 {offsets = [0, 0, 96], sizes = [2, 16, 32], strides = [1, 1, 1]} : vector<2x16x128xf32> to vector<2x16x32xf32>
    %126 = arith.truncf %125 : vector<2x16x32xf32> to vector<2x16x32xbf16>
    %127 = vector.extract_strided_slice %56 {offsets = [0, 0, 96], sizes = [2, 16, 32], strides = [1, 1, 1]} : vector<2x16x128xf32> to vector<2x16x32xf32>
    %128 = arith.truncf %127 : vector<2x16x32xf32> to vector<2x16x32xbf16>
    "tpu.trace_start"() <{level = 10 : i32, message = "bqd,bkd->bqk"}> : () -> ()
    %cst_40 = arith.constant dense<0.000000e+00> : vector<2x16x16xf32>
    %129 = tpu.matmul %124, %126, %cst_40 {dimension_numbers = #tpu.dot_dimension_numbers<[2], [2], [1], [1], [0, 0, 0, 1, 1, 1], [0], [0]>} : vector<2x16x32xbf16>, vector<2x16x32xbf16>, vector<2x16x16xf32> -> vector<2x16x16xf32>
    "tpu.trace_stop"() : () -> ()
    %cst_41 = arith.constant 0.176776692 : f32
    %130 = vector.broadcast %cst_41 : f32 to vector<2x16x16xf32>
    %131 = arith.mulf %129, %130 : vector<2x16x16xf32>
    %132 = vector.broadcast %14 : vector<2x1x16xf32> to vector<2x16x16xf32>
    %133 = arith.addf %131, %132 : vector<2x16x16xf32>
    %cst_42 = arith.constant dense<0xFF800000> : vector<2x16xf32>
    %134 = vector.multi_reduction <maximumf>, %133, %cst_42 [2] : vector<2x16x16xf32> to vector<2x16xf32>
    %135 = vector.shape_cast %134 : vector<2x16xf32> to vector<2x16x1xf32>
    %136 = vector.broadcast %135 : vector<2x16x1xf32> to vector<2x16x16xf32>
    %137 = arith.subf %133, %136 : vector<2x16x16xf32>
    %138 = math.exp %137 : vector<2x16x16xf32>
    %cst_43 = arith.constant dense<0.000000e+00> : vector<2x16xf32>
    %139 = vector.multi_reduction <add>, %138, %cst_43 [2] : vector<2x16x16xf32> to vector<2x16xf32>
    %140 = vector.shape_cast %139 : vector<2x16xf32> to vector<2x16x1xf32>
    %141 = vector.broadcast %140 : vector<2x16x1xf32> to vector<2x16x16xf32>
    %142 = arith.divf %138, %141 : vector<2x16x16xf32>
    %143 = arith.truncf %142 : vector<2x16x16xf32> to vector<2x16x16xbf16>
    "tpu.trace_start"() <{level = 10 : i32, message = "bqk,bkd->bqd"}> : () -> ()
    %cst_44 = arith.constant dense<0.000000e+00> : vector<2x16x32xf32>
    %144 = tpu.matmul %143, %128, %cst_44 {dimension_numbers = #tpu.dot_dimension_numbers<[2], [1], [1], [2], [0, 0, 0, 1, 1, 2], [0], [0]>} : vector<2x16x16xbf16>, vector<2x16x32xbf16>, vector<2x16x32xf32> -> vector<2x16x32xf32>
    "tpu.trace_stop"() : () -> ()
    %145 = tpu.concatenate %78, %100, %122, %144 in 2 : vector<2x16x32xf32>, vector<2x16x32xf32>, vector<2x16x32xf32>, vector<2x16x32xf32> -> vector<2x16x128xf32>
    %146 = vector.shape_cast %145 : vector<2x16x128xf32> to vector<32x128xf32>
    %147 = arith.truncf %146 : vector<32x128xf32> to vector<32x128xbf16>
    %c0_45 = arith.constant 0 : index
    %c512 = arith.constant 512 : index
    %148 = vector.load %arg3[%c0_45, %c512] : memref<128x1024xbf16, #tpu.memory_space<vmem>>, vector<128x128xbf16>
    %cst_46 = arith.constant dense<0.000000e+00> : vector<32x128xf32>
    %149 = tpu.matmul %147, %148, %cst_46 {dimension_numbers = #tpu.dot_dimension_numbers<[1], [0], [0], [1], [0, 0, 1, 1], [], []>} : vector<32x128xbf16>, vector<128x128xbf16>, vector<32x128xf32> -> vector<32x128xf32>
    %c3 = arith.constant 3 : index
    %c0_47 = arith.constant 0 : index
    %150 = vector.load %arg5[%c3, %c0_47] : memref<16x384xf32, #tpu.memory_space<vmem>>, vector<1x128xf32>
    %151 = vector.broadcast %150 : vector<1x128xf32> to vector<32x128xf32>
    %152 = arith.addf %149, %151 : vector<32x128xf32>
    %153 = arith.addf %44, %152 : vector<32x128xf32>
    %cst_48 = arith.constant dense<0.000000e+00> : vector<32xf32>
    %154 = vector.multi_reduction <add>, %153, %cst_48 [1] : vector<32x128xf32> to vector<32xf32>
    %155 = vector.shape_cast %154 : vector<32xf32> to vector<32x1xf32>
    %cst_49 = arith.constant 1.280000e+02 : f32
    %156 = vector.broadcast %cst_49 : f32 to vector<32x1xf32>
    %157 = arith.divf %155, %156 : vector<32x1xf32>
    %158 = vector.broadcast %157 : vector<32x1xf32> to vector<32x128xf32>
    %159 = arith.subf %153, %158 : vector<32x128xf32>
    %160 = arith.mulf %159, %159 : vector<32x128xf32>
    %cst_50 = arith.constant dense<0.000000e+00> : vector<32xf32>
    %161 = vector.multi_reduction <add>, %160, %cst_50 [1] : vector<32x128xf32> to vector<32xf32>
    %162 = vector.shape_cast %161 : vector<32xf32> to vector<32x1xf32>
    %cst_51 = arith.constant 1.280000e+02 : f32
    %163 = vector.broadcast %cst_51 : f32 to vector<32x1xf32>
    %164 = arith.divf %162, %163 : vector<32x1xf32>
    %165 = vector.broadcast %157 : vector<32x1xf32> to vector<32x128xf32>
    %166 = arith.subf %153, %165 : vector<32x128xf32>
    %cst_52 = arith.constant 9.99999974E-6 : f32
    %167 = vector.broadcast %cst_52 : f32 to vector<32x1xf32>
    %168 = arith.addf %164, %167 : vector<32x1xf32>
    %169 = math.rsqrt %168 : vector<32x1xf32>
    %170 = vector.broadcast %169 : vector<32x1xf32> to vector<32x128xf32>
    %171 = arith.mulf %166, %170 : vector<32x128xf32>
    %c4 = arith.constant 4 : index
    %c0_53 = arith.constant 0 : index
    %172 = vector.load %arg5[%c4, %c0_53] : memref<16x384xf32, #tpu.memory_space<vmem>>, vector<1x128xf32>
    %173 = vector.broadcast %172 : vector<1x128xf32> to vector<32x128xf32>
    %174 = arith.mulf %171, %173 : vector<32x128xf32>
    %c5 = arith.constant 5 : index
    %c0_54 = arith.constant 0 : index
    %175 = vector.load %arg5[%c5, %c0_54] : memref<16x384xf32, #tpu.memory_space<vmem>>, vector<1x128xf32>
    %176 = vector.broadcast %175 : vector<1x128xf32> to vector<32x128xf32>
    %177 = arith.addf %174, %176 : vector<32x128xf32>
    %178 = arith.truncf %177 : vector<32x128xf32> to vector<32x128xbf16>
    %c0_55 = arith.constant 0 : index
    %c640 = arith.constant 640 : index
    %179 = vector.load %arg3[%c0_55, %c640] : memref<128x1024xbf16, #tpu.memory_space<vmem>>, vector<128x256xbf16>
    %cst_56 = arith.constant dense<0.000000e+00> : vector<32x256xf32>
    %180 = tpu.matmul %178, %179, %cst_56 {dimension_numbers = #tpu.dot_dimension_numbers<[1], [0], [0], [1], [0, 0, 1, 1], [], []>} : vector<32x128xbf16>, vector<128x256xbf16>, vector<32x256xf32> -> vector<32x256xf32>
    %c6 = arith.constant 6 : index
    %c0_57 = arith.constant 0 : index
    %181 = vector.load %arg5[%c6, %c0_57] : memref<16x384xf32, #tpu.memory_space<vmem>>, vector<1x256xf32>
    %182 = vector.broadcast %181 : vector<1x256xf32> to vector<32x256xf32>
    %183 = arith.addf %180, %182 : vector<32x256xf32>
    %cst_58 = arith.constant 0.000000e+00 : f32
    %184 = vector.broadcast %cst_58 : f32 to vector<32x256xf32>
    %185 = arith.maximumf %183, %184 : vector<32x256xf32>
    %186 = arith.truncf %185 : vector<32x256xf32> to vector<32x256xbf16>
    %c1024 = arith.constant 1024 : index
    %c0_59 = arith.constant 0 : index
    %187 = vector.load %arg4[%c1024, %c0_59] : memref<1408x128xbf16, #tpu.memory_space<vmem>>, vector<256x128xbf16>
    %cst_60 = arith.constant dense<0.000000e+00> : vector<32x128xf32>
    %188 = tpu.matmul %186, %187, %cst_60 {dimension_numbers = #tpu.dot_dimension_numbers<[1], [0], [0], [1], [0, 0, 1, 1], [], []>} : vector<32x256xbf16>, vector<256x128xbf16>, vector<32x128xf32> -> vector<32x128xf32>
    %c7 = arith.constant 7 : index
    %c0_61 = arith.constant 0 : index
    %189 = vector.load %arg5[%c7, %c0_61] : memref<16x384xf32, #tpu.memory_space<vmem>>, vector<1x128xf32>
    %190 = vector.broadcast %189 : vector<1x128xf32> to vector<32x128xf32>
    %191 = arith.addf %188, %190 : vector<32x128xf32>
    %192 = arith.addf %177, %191 : vector<32x128xf32>
    %cst_62 = arith.constant dense<0.000000e+00> : vector<32xf32>
    %193 = vector.multi_reduction <add>, %192, %cst_62 [1] : vector<32x128xf32> to vector<32xf32>
    %194 = vector.shape_cast %193 : vector<32xf32> to vector<32x1xf32>
    %cst_63 = arith.constant 1.280000e+02 : f32
    %195 = vector.broadcast %cst_63 : f32 to vector<32x1xf32>
    %196 = arith.divf %194, %195 : vector<32x1xf32>
    %197 = vector.broadcast %196 : vector<32x1xf32> to vector<32x128xf32>
    %198 = arith.subf %192, %197 : vector<32x128xf32>
    %199 = arith.mulf %198, %198 : vector<32x128xf32>
    %cst_64 = arith.constant dense<0.000000e+00> : vector<32xf32>
    %200 = vector.multi_reduction <add>, %199, %cst_64 [1] : vector<32x128xf32> to vector<32xf32>
    %201 = vector.shape_cast %200 : vector<32xf32> to vector<32x1xf32>
    %cst_65 = arith.constant 1.280000e+02 : f32
    %202 = vector.broadcast %cst_65 : f32 to vector<32x1xf32>
    %203 = arith.divf %201, %202 : vector<32x1xf32>
    %204 = vector.broadcast %196 : vector<32x1xf32> to vector<32x128xf32>
    %205 = arith.subf %192, %204 : vector<32x128xf32>
    %cst_66 = arith.constant 9.99999974E-6 : f32
    %206 = vector.broadcast %cst_66 : f32 to vector<32x1xf32>
    %207 = arith.addf %203, %206 : vector<32x1xf32>
    %208 = math.rsqrt %207 : vector<32x1xf32>
    %209 = vector.broadcast %208 : vector<32x1xf32> to vector<32x128xf32>
    %210 = arith.mulf %205, %209 : vector<32x128xf32>
    %c8 = arith.constant 8 : index
    %c0_67 = arith.constant 0 : index
    %211 = vector.load %arg5[%c8, %c0_67] : memref<16x384xf32, #tpu.memory_space<vmem>>, vector<1x128xf32>
    %212 = vector.broadcast %211 : vector<1x128xf32> to vector<32x128xf32>
    %213 = arith.mulf %210, %212 : vector<32x128xf32>
    %c9 = arith.constant 9 : index
    %c0_68 = arith.constant 0 : index
    %214 = vector.load %arg5[%c9, %c0_68] : memref<16x384xf32, #tpu.memory_space<vmem>>, vector<1x128xf32>
    %215 = vector.broadcast %214 : vector<1x128xf32> to vector<32x128xf32>
    %216 = arith.addf %213, %215 : vector<32x128xf32>
    %217 = vector.shape_cast %216 : vector<32x128xf32> to vector<2x16x128xf32>
    %218 = vector.shape_cast %9 : vector<2x16xf32> to vector<2x16x1xf32>
    %219 = vector.broadcast %218 : vector<2x16x1xf32> to vector<2x16x128xf32>
    %220 = arith.mulf %217, %219 : vector<2x16x128xf32>
    %cst_69 = arith.constant dense<0.000000e+00> : vector<2x128xf32>
    %221 = vector.multi_reduction <add>, %220, %cst_69 [1] : vector<2x16x128xf32> to vector<2x128xf32>
    %cst_70 = arith.constant dense<0.000000e+00> : vector<2xf32>
    %222 = vector.multi_reduction <add>, %9, %cst_70 [1] : vector<2x16xf32> to vector<2xf32>
    %223 = vector.shape_cast %222 : vector<2xf32> to vector<2x1xf32>
    %224 = vector.broadcast %223 : vector<2x1xf32> to vector<2x128xf32>
    %225 = arith.divf %221, %224 : vector<2x128xf32>
    %226 = arith.truncf %225 : vector<2x128xf32> to vector<2x128xbf16>
    %c0_71 = arith.constant 0 : index
    %c896 = arith.constant 896 : index
    %227 = vector.load %arg3[%c0_71, %c896] : memref<128x1024xbf16, #tpu.memory_space<vmem>>, vector<128x128xbf16>
    %cst_72 = arith.constant dense<0.000000e+00> : vector<2x128xf32>
    %228 = tpu.matmul %226, %227, %cst_72 {dimension_numbers = #tpu.dot_dimension_numbers<[1], [0], [0], [1], [0, 0, 1, 1], [], []>} : vector<2x128xbf16>, vector<128x128xbf16>, vector<2x128xf32> -> vector<2x128xf32>
    %c10 = arith.constant 10 : index
    %c0_73 = arith.constant 0 : index
    %229 = vector.load %arg5[%c10, %c0_73] : memref<16x384xf32, #tpu.memory_space<vmem>>, vector<1x128xf32>
    %230 = vector.broadcast %229 : vector<1x128xf32> to vector<2x128xf32>
    %231 = arith.addf %228, %230 : vector<2x128xf32>
    %c0_74 = arith.constant 0 : index
    %c0_75 = arith.constant 0 : index
    %232 = vector.load %arg6[%c0_74, %c0_75] : memref<2x128xf32, #tpu.memory_space<vmem>>, vector<2x128xf32>
    tpu.vector_store %arg6[%c0_74, %c0_75], %231 {strides = array<i32>} : memref<2x128xf32, #tpu.memory_space<vmem>>, vector<2x128xf32>,
    return
  }
}

</mosaic_0001>

<llo_original>
// kernel: model_v0_forward.1
$region0: #{model_v0_forward.1}
  #allocation0 [shape = 'u32[]', space=smem, size = 0x4, offset = 0x4, fixed_abs, tag = 'smem constant byte address 0x4 - core index']
  #allocation1 [shape = 'u32[144,128]{1,0:T(1,128)}', space=vmem, size = 0x12000, scoped, tag = 'internal scratch']
  %s0 = inlined_call_operand.vmem [shape: s32[2,8], index: 0, kind: input, shape index: {}]
  %s1 = inlined_call_operand.vmem [shape: bf16[2,1024], index: 1, kind: input, shape index: {}]
  %s2 = inlined_call_operand.vmem [shape: f32[2,8], index: 2, kind: input, shape index: {}]
  %s3 = inlined_call_operand.hbm [shape: bf16[128,1024], index: 3, kind: input, shape index: {}]
  %s4 = inlined_call_operand.hbm [shape: bf16[1408,128], index: 4, kind: input, shape index: {}]
  %s5 = inlined_call_operand.vmem [shape: f32[16,384], index: 5, kind: input, shape index: {}]
  %s6 = inlined_call_operand.hbm [shape: f32[2,128], index: 6, kind: output, shape index: {}]
  %s7 = sld [smem:[#allocation0]]
  $region42: #{model_v0_forward.1} parent=0
    _
  %s9 = ssub.s32 1, %s7
  %s10 = scalar_select 0, %s9, %s7
  $region1: #{model_v0_forward.1} parent=0
    #allocation2 [shape = 'u8[262144]{0}', space=vmem, size = 0x40000, scoped, tag = 'input window, operand 3, single buffered']
    #allocation3 [shape = 's32[1]{0}', space=sflag, size = 0x4, scoped, tag = 'scoped memory for model_v0_forward.1']
    #allocation4 [shape = 's32[1]{0}', space=sflag, size = 0x4, scoped, tag = 'scoped memory for model_v0_forward.1']
    #allocation5 [shape = 'u8[360448]{0}', space=vmem, size = 0x58000, scoped, tag = 'input window, operand 4, single buffered']
    #allocation6 [shape = 's32[1]{0}', space=sflag, size = 0x4, scoped, tag = 'scoped memory for model_v0_forward.1']
    #allocation7 [shape = 'u8[1024]{0}', space=vmem, size = 0x400, scoped, tag = 'output window, operand 0, single buffered']
    %11 = vsyncpa [#allocation3], 0
    %12 = vsyncpa [#allocation6], 0
    %13 = vsyncpa [#allocation4], 0
    // Predicated region
    $region2: #{model_v0_forward.1} parent=1 // pred_check
      _
    $region3: #{model_v0_forward.1} parent=1 // pred_check_branch
      %15 = sbr.rel (0) target = $region5
    $region4: #{model_v0_forward.1} parent=1 // pred_region
      _
    $region5: #{model_v0_forward.1} parent=1 // pred_fallthru
      _
    // Predicated region
    $region6: #{model_v0_forward.1} parent=1 // pred_check
      _
    $region7: #{model_v0_forward.1} parent=1 // pred_check_branch
      %17 = sbr.rel (0) target = $region9
    $region8: #{model_v0_forward.1} parent=1 // pred_region
      _
    $region9: #{model_v0_forward.1} parent=1 // pred_fallthru
      _
    // Predicated region
    $region10: #{model_v0_forward.1} parent=1 // pred_check
      _
    $region11: #{model_v0_forward.1} parent=1 // pred_check_branch
      %19 = sbr.rel (0) target = $region13
    $region12: #{model_v0_forward.1} parent=1 // pred_region
      _
    $region13: #{model_v0_forward.1} parent=1 // pred_fallthru
      _
    // Predicated region
    $region14: #{model_v0_forward.1} parent=1 // pred_check
      _
    $region15: #{model_v0_forward.1} parent=1 // pred_check_branch
      %21 = sbr.rel (0) target = $region17
    $region16: #{model_v0_forward.1} parent=1 // pred_region
      %s23 = ssub.s32 8192, 8192
      %24 = vsyncadd [#allocation3], %s23
      %s25 = sshll.u32 [#allocation2], 4
      %s26 = int_to_ptr.vmem [resolvable:$true] %s25
      %31 = dma.hbm_to_vmem [thread:$0]  %s3, 8192, %s26, [#allocation3], 512, 512, 32
    $region17: #{model_v0_forward.1} parent=1 // pred_fallthru
      _
    // Predicated region
    $region18: #{model_v0_forward.1} parent=1 // pred_check
      _
    $region19: #{model_v0_forward.1} parent=1 // pred_check_branch
      %33 = sbr.rel (0) target = $region21
    $region20: #{model_v0_forward.1} parent=1 // pred_region
      %s35 = ssub.s32 11264, 11264
      %36 = vsyncadd [#allocation6], %s35
      %s37 = sshll.u32 [#allocation5], 4
      %s38 = int_to_ptr.vmem [resolvable:$true] %s37
      %43 = dma.hbm_to_vmem [thread:$0]  %s4, 11264, %s38, [#allocation6], 64, 64, 4
    $region21: #{model_v0_forward.1} parent=1 // pred_fallthru
      _
    // Predicated region
    $region22: #{model_v0_forward.1} parent=1 // pred_check
      _
    $region23: #{model_v0_forward.1} parent=1 // pred_check_branch
      %45 = sbr.rel (0) target = $region25
    $region24: #{model_v0_forward.1} parent=1 // pred_region
      _
    $region25: #{model_v0_forward.1} parent=1 // pred_fallthru
      _
    // Predicated region
    $region26: #{model_v0_forward.1} parent=1 // pred_check
      _
    $region27: #{model_v0_forward.1} parent=1 // pred_check_branch
      %47 = sbr.rel (0) target = $region29
    $region28: #{model_v0_forward.1} parent=1 // pred_region
      %48 = dma.done [#allocation3], 8192
    $region29: #{model_v0_forward.1} parent=1 // pred_fallthru
      _
    // Predicated region
    $region30: #{model_v0_forward.1} parent=1 // pred_check
      _
    $region31: #{model_v0_forward.1} parent=1 // pred_check_branch
      %50 = sbr.rel (0) target = $region33
    $region32: #{model_v0_forward.1} parent=1 // pred_region
      %51 = dma.done [#allocation6], 11264
    $region33: #{model_v0_forward.1} parent=1 // pred_fallthru
      _
    %v53 = vld [vmem:[%s2] sm:$0x3]
    %v54 = vlaneseq
    %v55 = vand.u32 %v54, 127
    %vm56 = vcmp.eq.s32.totalorder %v55, 0
    %v57 = vsel %vm56, 1.0, 0.0
    %59 = vrot.lane.b32.xlu0 %v53, 8
    %v60 = vpop.permute.xlu0 %59
    %vm62 = vcmask 64512
    %v63 = vsel %vm62, 0.0, %v60
    %v64 = vadd.f32 %v57, %v63
    %v65 = vsub.f32 1.0, %v64
    %v66 = vmul.f32 %v65, -1e+09
    %v69 = vunpack.c.l.s4 1966171168
    %v70 = vunpack.c.0.s8 %v69
    %v71 = vlaneseq
    %v72 = vshrl.u32 %v71, 7
    %v73 = vsub.s32 %v70, %v72
    %v74 = vrot.slane %v66, %v73
    %v75 = vcombine.high %v74, %v74
    %v77 = vunpack.c.l.s4 1966171168
    %v78 = vunpack.c.0.s8 %v77
    %v79 = vlaneseq
    %v80 = vshrl.u32 %v79, 7
    %v81 = vsub.s32 %v78, %v80
    %v82 = vrot.slane %v74, %v81
    %v84 = vunpack.c.l.s4 1966171168
    %v85 = vunpack.c.0.s8 %v84
    %v86 = vlaneseq
    %v87 = vshrl.u32 %v86, 7
    %v88 = vsub.s32 %v85, %v87
    %v89 = vrot.slane %v75, %v88
    %v90 = vld [vmem:[%s1] sm:$0xff]
    %v91 = vld [vmem:[#allocation5] sm:$0xf]
    %v92 = vld [vmem:[#allocation5 + $0x4] sm:$0xf]
    %v93 = vld [vmem:[#allocation5 + $0x8] sm:$0xf]
    %v94 = vld [vmem:[#allocation5 + $0xc] sm:$0xf]
    %v95 = vld [vmem:[#allocation5 + $0x10] sm:$0xf]
    %v96 = vld [vmem:[#allocation5 + $0x14] sm:$0xf]
    %v97 = vld [vmem:[#allocation5 + $0x18] sm:$0xf]
    %v98 = vld [vmem:[#allocation5 + $0x1c] sm:$0xf]
    %v99 = vld [vmem:[#allocation5 + $0x20] sm:$0xf]
    %v100 = vld [vmem:[#allocation5 + $0x24] sm:$0xf]
    %v101 = vld [vmem:[#allocation5 + $0x28] sm:$0xf]
    %v102 = vld [vmem:[#allocation5 + $0x2c] sm:$0xf]
    %v103 = vld [vmem:[#allocation5 + $0x30] sm:$0xf]
    %v104 = vld [vmem:[#allocation5 + $0x34] sm:$0xf]
    %v105 = vld [vmem:[#allocation5 + $0x38] sm:$0xf]
    %v106 = vld [vmem:[#allocation5 + $0x3c] sm:$0xf]
    %v107 = vld [vmem:[#allocation5 + $0x40] sm:$0xf]
    %v108 = vld [vmem:[#allocation5 + $0x44] sm:$0xf]
    %v109 = vld [vmem:[#allocation5 + $0x48] sm:$0xf]
    %v110 = vld [vmem:[#allocation5 + $0x4c] sm:$0xf]
    %v111 = vld [vmem:[#allocation5 + $0x50] sm:$0xf]
    %v112 = vld [vmem:[#allocation5 + $0x54] sm:$0xf]
    %v113 = vld [vmem:[#allocation5 + $0x58] sm:$0xf]
    %v114 = vld [vmem:[#allocation5 + $0x5c] sm:$0xf]
    %v115 = vld [vmem:[#allocation5 + $0x60] sm:$0xf]
    %v116 = vld [vmem:[#allocation5 + $0x64] sm:$0xf]
    %v117 = vld [vmem:[#allocation5 + $0x68] sm:$0xf]
    %v118 = vld [vmem:[#allocation5 + $0x6c] sm:$0xf]
    %v119 = vld [vmem:[#allocation5 + $0x70] sm:$0xf]
    %v120 = vld [vmem:[#allocation5 + $0x74] sm:$0xf]
    %v121 = vld [vmem:[#allocation5 + $0x78] sm:$0xf]
    %v122 = vld [vmem:[#allocation5 + $0x7c] sm:$0xf]
    %v123 = vld [vmem:[#allocation5 + $0x80] sm:$0xf]
    %v124 = vld [vmem:[#allocation5 + $0x84] sm:$0xf]
    %v125 = vld [vmem:[#allocation5 + $0x88] sm:$0xf]
    %v126 = vld [vmem:[#allocation5 + $0x8c] sm:$0xf]
    %v127 = vld [vmem:[#allocation5 + $0x90] sm:$0xf]
    %v128 = vld [vmem:[#allocation5 + $0x94] sm:$0xf]
    %v129 = vld [vmem:[#allocation5 + $0x98] sm:$0xf]
    %v130 = vld [vmem:[#allocation5 + $0x9c] sm:$0xf]
    %v131 = vld [vmem:[#allocation5 + $0xa0] sm:$0xf]
    %v132 = vld [vmem:[#allocation5 + $0xa4] sm:$0xf]
    %v133 = vld [vmem:[#allocation5 + $0xa8] sm:$0xf]
    %v134 = vld [vmem:[#allocation5 + $0xac] sm:$0xf]
    %v135 = vld [vmem:[#allocation5 + $0xb0] sm:$0xf]
    %v136 = vld [vmem:[#allocation5 + $0xb4] sm:$0xf]
    %v137 = vld [vmem:[#allocation5 + $0xb8] sm:$0xf]
    %v138 = vld [vmem:[#allocation5 + $0xbc] sm:$0xf]
    %v139 = vld [vmem:[#allocation5 + $0xc0] sm:$0xf]
    %v140 = vld [vmem:[#allocation5 + $0xc4] sm:$0xf]
    %v141 = vld [vmem:[#allocation5 + $0xc8] sm:$0xf]
    %v142 = vld [vmem:[#allocation5 + $0xcc] sm:$0xf]
    %v143 = vld [vmem:[#allocation5 + $0xd0] sm:$0xf]
    %v144 = vld [vmem:[#allocation5 + $0xd4] sm:$0xf]
    %v145 = vld [vmem:[#allocation5 + $0xd8] sm:$0xf]
    %v146 = vld [vmem:[#allocation5 + $0xdc] sm:$0xf]
    %v147 = vld [vmem:[#allocation5 + $0xe0] sm:$0xf]
    %v148 = vld [vmem:[#allocation5 + $0xe4] sm:$0xf]
    %v149 = vld [vmem:[#allocation5 + $0xe8] sm:$0xf]
    %v150 = vld [vmem:[#allocation5 + $0xec] sm:$0xf]
    %v151 = vld [vmem:[#allocation5 + $0xf0] sm:$0xf]
    %v152 = vld [vmem:[#allocation5 + $0xf4] sm:$0xf]
    %v153 = vld [vmem:[#allocation5 + $0xf8] sm:$0xf]
    %v154 = vld [vmem:[#allocation5 + $0xfc] sm:$0xf]
    %v155 = vld [vmem:[#allocation5 + $0x100] sm:$0xf]
    %v156 = vld [vmem:[#allocation5 + $0x104] sm:$0xf]
    %v157 = vld [vmem:[#allocation5 + $0x108] sm:$0xf]
    %v158 = vld [vmem:[#allocation5 + $0x10c] sm:$0xf]
    %v159 = vld [vmem:[#allocation5 + $0x110] sm:$0xf]
    %v160 = vld [vmem:[#allocation5 + $0x114] sm:$0xf]
    %v161 = vld [vmem:[#allocation5 + $0x118] sm:$0xf]
    %v162 = vld [vmem:[#allocation5 + $0x11c] sm:$0xf]
    %v163 = vld [vmem:[#allocation5 + $0x120] sm:$0xf]
    %v164 = vld [vmem:[#allocation5 + $0x124] sm:$0xf]
    %v165 = vld [vmem:[#allocation5 + $0x128] sm:$0xf]
    %v166 = vld [vmem:[#allocation5 + $0x12c] sm:$0xf]
    %v167 = vld [vmem:[#allocation5 + $0x130] sm:$0xf]
    %v168 = vld [vmem:[#allocation5 + $0x134] sm:$0xf]
    %v169 = vld [vmem:[#allocation5 + $0x138] sm:$0xf]
    %v170 = vld [vmem:[#allocation5 + $0x13c] sm:$0xf]
    %v171 = vld [vmem:[#allocation5 + $0x140] sm:$0xf]
    %v172 = vld [vmem:[#allocation5 + $0x144] sm:$0xf]
    %v173 = vld [vmem:[#allocation5 + $0x148] sm:$0xf]
    %v174 = vld [vmem:[#allocation5 + $0x14c] sm:$0xf]
    %v175 = vld [vmem:[#allocation5 + $0x150] sm:$0xf]
    %v176 = vld [vmem:[#allocation5 + $0x154] sm:$0xf]
    %v177 = vld [vmem:[#allocation5 + $0x158] sm:$0xf]
    %v178 = vld [vmem:[#allocation5 + $0x15c] sm:$0xf]
    %v179 = vld [vmem:[#allocation5 + $0x160] sm:$0xf]
    %v180 = vld [vmem:[#allocation5 + $0x164] sm:$0xf]
    %v181 = vld [vmem:[#allocation5 + $0x168] sm:$0xf]
    %v182 = vld [vmem:[#allocation5 + $0x16c] sm:$0xf]
    %v183 = vld [vmem:[#allocation5 + $0x170] sm:$0xf]
    %v184 = vld [vmem:[#allocation5 + $0x174] sm:$0xf]
    %v185 = vld [vmem:[#allocation5 + $0x178] sm:$0xf]
    %v186 = vld [vmem:[#allocation5 + $0x17c] sm:$0xf]
    %v187 = vld [vmem:[#allocation5 + $0x180] sm:$0xf]
    %v188 = vld [vmem:[#allocation5 + $0x184] sm:$0xf]
    %v189 = vld [vmem:[#allocation5 + $0x188] sm:$0xf]
    %v190 = vld [vmem:[#allocation5 + $0x18c] sm:$0xf]
    %v191 = vld [vmem:[#allocation5 + $0x190] sm:$0xf]
    %v192 = vld [vmem:[#allocation5 + $0x194] sm:$0xf]
    %v193 = vld [vmem:[#allocation5 + $0x198] sm:$0xf]
    %v194 = vld [vmem:[#allocation5 + $0x19c] sm:$0xf]
    %v195 = vld [vmem:[#allocation5 + $0x1a0] sm:$0xf]
    %v196 = vld [vmem:[#allocation5 + $0x1a4] sm:$0xf]
    %v197 = vld [vmem:[#allocation5 + $0x1a8] sm:$0xf]
    %v198 = vld [vmem:[#allocation5 + $0x1ac] sm:$0xf]
    %v199 = vld [vmem:[#allocation5 + $0x1b0] sm:$0xf]
    %v200 = vld [vmem:[#allocation5 + $0x1b4] sm:$0xf]
    %v201 = vld [vmem:[#allocation5 + $0x1b8] sm:$0xf]
    %v202 = vld [vmem:[#allocation5 + $0x1bc] sm:$0xf]
    %v203 = vld [vmem:[#allocation5 + $0x1c0] sm:$0xf]
    %v204 = vld [vmem:[#allocation5 + $0x1c4] sm:$0xf]
    %v205 = vld [vmem:[#allocation5 + $0x1c8] sm:$0xf]
    %v206 = vld [vmem:[#allocation5 + $0x1cc] sm:$0xf]
    %v207 = vld [vmem:[#allocation5 + $0x1d0] sm:$0xf]
    %v208 = vld [vmem:[#allocation5 + $0x1d4] sm:$0xf]
    %v209 = vld [vmem:[#allocation5 + $0x1d8] sm:$0xf]
    %v210 = vld [vmem:[#allocation5 + $0x1dc] sm:$0xf]
    %v211 = vld [vmem:[#allocation5 + $0x1e0] sm:$0xf]
    %v212 = vld [vmem:[#allocation5 + $0x1e4] sm:$0xf]
    %v213 = vld [vmem:[#allocation5 + $0x1e8] sm:$0xf]
    %v214 = vld [vmem:[#allocation5 + $0x1ec] sm:$0xf]
    %v215 = vld [vmem:[#allocation5 + $0x1f0] sm:$0xf]
    %v216 = vld [vmem:[#allocation5 + $0x1f4] sm:$0xf]
    %v217 = vld [vmem:[#allocation5 + $0x1f8] sm:$0xf]
    %v218 = vld [vmem:[#allocation5 + $0x1fc] sm:$0xf]
    %v219 = vld [vmem:[%s5] ss:$0 sm:$0xff]
    %v221 = vcombine.high %v90, %v90
    %v223 = vunpack.c.l.s4 1966171168
    %v224 = vunpack.c.0.s8 %v223
    %v225 = vlaneseq
    %v226 = vshrl.u32 %v225, 7
    %v227 = vsub.s32 %v224, %v226
    %v228 = vrot.slane %v90, %v227
    %v230 = vunpack.c.l.s4 1966171168
    %v231 = vunpack.c.0.s8 %v230
    %v232 = vlaneseq
    %v233 = vshrl.u32 %v232, 7
    %v234 = vsub.s32 %v231, %v233
    %v235 = vrot.slane %v221, %v234
    %v236 = vcombine.high %v228, %v228
    %v237 = vcombine.high %v235, %v235
    %v239 = vunpack.c.l.s4 1966171168
    %v240 = vunpack.c.0.s8 %v239
    %v241 = vlaneseq
    %v242 = vshrl.u32 %v241, 7
    %v243 = vsub.s32 %v240, %v242
    %v244 = vrot.slane %v228, %v243
    %v246 = vunpack.c.l.s4 1966171168
    %v247 = vunpack.c.0.s8 %v246
    %v248 = vlaneseq
    %v249 = vshrl.u32 %v248, 7
    %v250 = vsub.s32 %v247, %v249
    %v251 = vrot.slane %v235, %v250
    %v253 = vunpack.c.l.s4 1966171168
    %v254 = vunpack.c.0.s8 %v253
    %v255 = vlaneseq
    %v256 = vshrl.u32 %v255, 7
    %v257 = vsub.s32 %v254, %v256
    %v258 = vrot.slane %v236, %v257
    %v260 = vunpack.c.l.s4 1966171168
    %v261 = vunpack.c.0.s8 %v260
    %v262 = vlaneseq
    %v263 = vshrl.u32 %v262, 7
    %v264 = vsub.s32 %v261, %v263
    %v265 = vrot.slane %v237, %v264
    %v266 = vcombine.high %v244, %v244
    %v267 = vcombine.high %v251, %v251
    %v268 = vcombine.high %v258, %v258
    %v269 = vcombine.high %v265, %v265
    %v406 = vunpack.c.l.b16 %v91
    %v407 = vunpack.c.l.b16 %v92
    %v408 = vunpack.c.l.b16 %v93
    %v409 = vunpack.c.l.b16 %v94
    %v410 = vunpack.c.l.b16 %v95
    %v411 = vunpack.c.l.b16 %v96
    %v412 = vunpack.c.l.b16 %v97
    %v413 = vunpack.c.l.b16 %v98
    %v414 = vunpack.c.l.b16 %v99
    %v415 = vunpack.c.l.b16 %v100
    %v416 = vunpack.c.l.b16 %v101
    %v417 = vunpack.c.l.b16 %v102
    %v418 = vunpack.c.l.b16 %v103
    %v419 = vunpack.c.l.b16 %v104
    %v420 = vunpack.c.l.b16 %v105
    %v421 = vunpack.c.l.b16 %v106
    %v422 = vunpack.c.l.b16 %v107
    %v423 = vunpack.c.l.b16 %v108
    %v424 = vunpack.c.l.b16 %v109
    %v425 = vunpack.c.l.b16 %v110
    %v426 = vunpack.c.l.b16 %v111
    %v427 = vunpack.c.l.b16 %v112
    %v428 = vunpack.c.l.b16 %v113
    %v429 = vunpack.c.l.b16 %v114
    %v430 = vunpack.c.l.b16 %v115
    %v431 = vunpack.c.l.b16 %v116
    %v432 = vunpack.c.l.b16 %v117
    %v433 = vunpack.c.l.b16 %v118
    %v434 = vunpack.c.l.b16 %v119
    %v435 = vunpack.c.l.b16 %v120
    %v436 = vunpack.c.l.b16 %v121
    %v437 = vunpack.c.l.b16 %v122
    %v438 = vunpack.c.l.b16 %v123
    %v439 = vunpack.c.l.b16 %v124
    %v440 = vunpack.c.l.b16 %v125
    %v441 = vunpack.c.l.b16 %v126
    %v442 = vunpack.c.l.b16 %v127
    %v443 = vunpack.c.l.b16 %v128
    %v444 = vunpack.c.l.b16 %v129
    %v445 = vunpack.c.l.b16 %v130
    %v446 = vunpack.c.l.b16 %v131
    %v447 = vunpack.c.l.b16 %v132
    %v448 = vunpack.c.l.b16 %v133
    %v449 = vunpack.c.l.b16 %v134
    %v450 = vunpack.c.l.b16 %v135
    %v451 = vunpack.c.l.b16 %v136
    %v452 = vunpack.c.l.b16 %v137
    %v453 = vunpack.c.l.b16 %v138
    %v454 = vunpack.c.l.b16 %v139
    %v455 = vunpack.c.l.b16 %v140
    %v456 = vunpack.c.l.b16 %v141
    %v457 = vunpack.c.l.b16 %v142
    %v458 = vunpack.c.l.b16 %v143
    %v459 = vunpack.c.l.b16 %v144
    %v460 = vunpack.c.l.b16 %v145
    %v461 = vunpack.c.l.b16 %v146
    %v462 = vunpack.c.l.b16 %v147
    %v463 = vunpack.c.l.b16 %v148
    %v464 = vunpack.c.l.b16 %v149
    %v465 = vunpack.c.l.b16 %v150
    %v466 = vunpack.c.l.b16 %v151
    %v467 = vunpack.c.l.b16 %v152
    %v468 = vunpack.c.l.b16 %v153
    %v469 = vunpack.c.l.b16 %v154
    %v470 = vunpack.c.l.b16 %v155
    %v471 = vunpack.c.l.b16 %v156
    %v472 = vunpack.c.l.b16 %v157
    %v473 = vunpack.c.l.b16 %v158
    %v474 = vunpack.c.l.b16 %v159
    %v475 = vunpack.c.l.b16 %v160
    %v476 = vunpack.c.l.b16 %v161
    %v477 = vunpack.c.l.b16 %v162
    %v478 = vunpack.c.l.b16 %v163
    %v479 = vunpack.c.l.b16 %v164
    %v480 = vunpack.c.l.b16 %v165
    %v481 = vunpack.c.l.b16 %v166
    %v482 = vunpack.c.l.b16 %v167
    %v483 = vunpack.c.l.b16 %v168
    %v484 = vunpack.c.l.b16 %v169
    %v485 = vunpack.c.l.b16 %v170
    %v486 = vunpack.c.l.b16 %v171
    %v487 = vunpack.c.l.b16 %v172
    %v488 = vunpack.c.l.b16 %v173
    %v489 = vunpack.c.l.b16 %v174
    %v490 = vunpack.c.l.b16 %v175
    %v491 = vunpack.c.l.b16 %v176
    %v492 = vunpack.c.l.b16 %v177
    %v493 = vunpack.c.l.b16 %v178
    %v494 = vunpack.c.l.b16 %v179
    %v495 = vunpack.c.l.b16 %v180
    %v496 = vunpack.c.l.b16 %v181
    %v497 = vunpack.c.l.b16 %v182
    %v498 = vunpack.c.l.b16 %v183
    %v499 = vunpack.c.l.b16 %v184
    %v500 = vunpack.c.l.b16 %v185
    %v501 = vunpack.c.l.b16 %v186
    %v502 = vunpack.c.l.b16 %v187
    %v503 = vunpack.c.l.b16 %v188
    %v504 = vunpack.c.l.b16 %v189
    %v505 = vunpack.c.l.b16 %v190
    %v506 = vunpack.c.l.b16 %v191
    %v507 = vunpack.c.l.b16 %v192
    %v508 = vunpack.c.l.b16 %v193
    %v509 = vunpack.c.l.b16 %v194
    %v510 = vunpack.c.l.b16 %v195
    %v511 = vunpack.c.l.b16 %v196
    %v512 = vunpack.c.l.b16 %v197
    %v513 = vunpack.c.l.b16 %v198
    %v514 = vunpack.c.l.b16 %v199
    %v515 = vunpack.c.l.b16 %v200
    %v516 = vunpack.c.l.b16 %v201
    %v517 = vunpack.c.l.b16 %v202
    %v518 = vunpack.c.l.b16 %v203
    %v519 = vunpack.c.l.b16 %v204
    %v520 = vunpack.c.l.b16 %v205
    %v521 = vunpack.c.l.b16 %v206
    %v522 = vunpack.c.l.b16 %v207
    %v523 = vunpack.c.l.b16 %v208
    %v524 = vunpack.c.l.b16 %v209
    %v525 = vunpack.c.l.b16 %v210
    %v526 = vunpack.c.l.b16 %v211
    %v527 = vunpack.c.l.b16 %v212
    %v528 = vunpack.c.l.b16 %v213
    %v529 = vunpack.c.l.b16 %v214
    %v530 = vunpack.c.l.b16 %v215
    %v531 = vunpack.c.l.b16 %v216
    %v532 = vunpack.c.l.b16 %v217
    %v533 = vunpack.c.l.b16 %v218
    %v534 = vpack.c.b16 %v407, %v406
    %v535 = vpack.c.b16 %v409, %v408
    %v536 = vpack.c.b16 %v411, %v410
    %v537 = vpack.c.b16 %v413, %v412
    %v538 = vpack.c.b16 %v415, %v414
    %v539 = vpack.c.b16 %v417, %v416
    %v540 = vpack.c.b16 %v419, %v418
    %v541 = vpack.c.b16 %v421, %v420
    %v542 = vpack.c.b16 %v423, %v422
    %v543 = vpack.c.b16 %v425, %v424
    %v544 = vpack.c.b16 %v427, %v426
    %v545 = vpack.c.b16 %v429, %v428
    %v546 = vpack.c.b16 %v431, %v430
    %v547 = vpack.c.b16 %v433, %v432
    %v548 = vpack.c.b16 %v435, %v434
    %v549 = vpack.c.b16 %v437, %v436
    %v550 = vpack.c.b16 %v439, %v438
    %v551 = vpack.c.b16 %v441, %v440
    %v552 = vpack.c.b16 %v443, %v442
    %v553 = vpack.c.b16 %v445, %v444
    %v554 = vpack.c.b16 %v447, %v446
    %v555 = vpack.c.b16 %v449, %v448
    %v556 = vpack.c.b16 %v451, %v450
    %v557 = vpack.c.b16 %v453, %v452
    %v558 = vpack.c.b16 %v455, %v454
    %v559 = vpack.c.b16 %v457, %v456
    %v560 = vpack.c.b16 %v459, %v458
    %v561 = vpack.c.b16 %v461, %v460
    %v562 = vpack.c.b16 %v463, %v462
    %v563 = vpack.c.b16 %v465, %v464
    %v564 = vpack.c.b16 %v467, %v466
    %v565 = vpack.c.b16 %v469, %v468
    %v566 = vpack.c.b16 %v471, %v470
    %v567 = vpack.c.b16 %v473, %v472
    %v568 = vpack.c.b16 %v475, %v474
    %v569 = vpack.c.b16 %v477, %v476
    %v570 = vpack.c.b16 %v479, %v478
    %v571 = vpack.c.b16 %v481, %v480
    %v572 = vpack.c.b16 %v483, %v482
    %v573 = vpack.c.b16 %v485, %v484
    %v574 = vpack.c.b16 %v487, %v486
    %v575 = vpack.c.b16 %v489, %v488
    %v576 = vpack.c.b16 %v491, %v490
    %v577 = vpack.c.b16 %v493, %v492
    %v578 = vpack.c.b16 %v495, %v494
    %v579 = vpack.c.b16 %v497, %v496
    %v580 = vpack.c.b16 %v499, %v498
    %v581 = vpack.c.b16 %v501, %v500
    %v582 = vpack.c.b16 %v503, %v502
    %v583 = vpack.c.b16 %v505, %v504
    %v584 = vpack.c.b16 %v507, %v506
    %v585 = vpack.c.b16 %v509, %v508
    %v586 = vpack.c.b16 %v511, %v510
    %v587 = vpack.c.b16 %v513, %v512
    %v588 = vpack.c.b16 %v515, %v514
    %v589 = vpack.c.b16 %v517, %v516
    %v590 = vpack.c.b16 %v519, %v518
    %v591 = vpack.c.b16 %v521, %v520
    %v592 = vpack.c.b16 %v523, %v522
    %v593 = vpack.c.b16 %v525, %v524
    %v594 = vpack.c.b16 %v527, %v526
    %v595 = vpack.c.b16 %v529, %v528
    %v596 = vpack.c.b16 %v531, %v530
    %v597 = vpack.c.b16 %v533, %v532
    %662 = vmatprep.subr.bf16.mxu0 0
    %663 = vmatpush1.bf16.msra.mxu0 %v541
    %664 = vmatprep.subr.bf16.mxu0 0
    %665 = vmatpush1.bf16.msra.mxu0 %v540
    %666 = vmatprep.subr.bf16.mxu0 0
    %667 = vmatpush1.bf16.msra.mxu0 %v539
    %668 = vmatprep.subr.bf16.mxu0 0
    %669 = vmatpush1.bf16.msra.mxu0 %v538
    %670 = vmatprep.subr.bf16.mxu0 0
    %671 = vmatpush1.bf16.msra.mxu0 %v537
    %672 = vmatprep.subr.bf16.mxu0 0
    %673 = vmatpush1.bf16.msra.mxu0 %v536
    %674 = vmatprep.subr.bf16.mxu0 0
    %675 = vmatpush1.bf16.msra.mxu0 %v535
    %676 = vmatprep.subr.bf16.mxu0 0
    %677 = vmatpush1.bf16.msra.mxu0 %v534
    %678 = vmatprep.subr.bf16.mxu0 0
    %679 = vmatpush2.bf16.msra.mxu0 %v549
    %680 = vmatprep.subr.bf16.mxu0 0
    %681 = vmatpush2.bf16.msra.mxu0 %v548
    %682 = vmatprep.subr.bf16.mxu0 0
    %683 = vmatpush2.bf16.msra.mxu0 %v547
    %684 = vmatprep.subr.bf16.mxu0 0
    %685 = vmatpush2.bf16.msra.mxu0 %v546
    %686 = vmatprep.subr.bf16.mxu0 0
    %687 = vmatpush2.bf16.msra.mxu0 %v545
    %688 = vmatprep.subr.bf16.mxu0 0
    %689 = vmatpush2.bf16.msra.mxu0 %v544
    %690 = vmatprep.subr.bf16.mxu0 0
    %691 = vmatpush2.bf16.msra.mxu0 %v543
    %692 = vmatprep.subr.bf16.mxu0 0
    %693 = vmatpush2.bf16.msra.mxu0 %v542
    %694 = vmatprep.mubr.bf16.mxu0 %v258
    %695 = vmatmul.mubr.bf16.gmra.mxu0 %v244
    %v696 = vpop.f32.mrf.mxu0
    %v697 = vadd.f32 %v219, %v696
    %v698 = vpop.f32.mrf.mxu0
    %v699 = vpop.f32.mrf.mxu0
    %v700 = vpop.f32.mrf.mxu0
    %701 = vdwg.mxu0
    %702 = vmatprep.subr.bf16.mxu0 0
    %703 = vmatpush1.bf16.msra.mxu0 %v557
    %704 = vmatprep.subr.bf16.mxu0 0
    %705 = vmatpush1.bf16.msra.mxu0 %v556
    %706 = vmatprep.subr.bf16.mxu0 0
    %707 = vmatpush1.bf16.msra.mxu0 %v555
    %708 = vmatprep.subr.bf16.mxu0 0
    %709 = vmatpush1.bf16.msra.mxu0 %v554
    %710 = vmatprep.subr.bf16.mxu0 0
    %711 = vmatpush1.bf16.msra.mxu0 %v553
    %712 = vmatprep.subr.bf16.mxu0 0
    %713 = vmatpush1.bf16.msra.mxu0 %v552
    %714 = vmatprep.subr.bf16.mxu0 0
    %715 = vmatpush1.bf16.msra.mxu0 %v551
    %716 = vmatprep.subr.bf16.mxu0 0
    %717 = vmatpush1.bf16.msra.mxu0 %v550
    %718 = vmatprep.subr.bf16.mxu0 0
    %719 = vmatpush2.bf16.msra.mxu0 %v565
    %720 = vmatprep.subr.bf16.mxu0 0
    %721 = vmatpush2.bf16.msra.mxu0 %v564
    %722 = vmatprep.subr.bf16.mxu0 0
    %723 = vmatpush2.bf16.msra.mxu0 %v563
    %724 = vmatprep.subr.bf16.mxu0 0
    %725 = vmatpush2.bf16.msra.mxu0 %v562
    %726 = vmatprep.subr.bf16.mxu0 0
    %727 = vmatpush2.bf16.msra.mxu0 %v561
    %728 = vmatprep.subr.bf16.mxu0 0
    %729 = vmatpush2.bf16.msra.mxu0 %v560
    %730 = vmatprep.subr.bf16.mxu0 0
    %731 = vmatpush2.bf16.msra.mxu0 %v559
    %732 = vmatprep.subr.bf16.mxu0 0
    %733 = vmatpush2.bf16.msra.mxu0 %v558
    %734 = vmatprep.mubr.bf16.mxu0 %v268
    %735 = vmatmul.mubr.bf16.gmra.mxu0 %v266
    %v736 = vpop.f32.mrf.mxu0
    %v737 = vadd.f32 %v697, %v736
    %v738 = vpop.f32.mrf.mxu0
    %v739 = vpop.f32.mrf.mxu0
    %v740 = vpop.f32.mrf.mxu0
    %741 = vdwg.mxu0
    %742 = vmatprep.subr.bf16.mxu0 0
    %743 = vmatpush1.bf16.msra.mxu0 %v573
    %744 = vmatprep.subr.bf16.mxu0 0
    %745 = vmatpush1.bf16.msra.mxu0 %v572
    %746 = vmatprep.subr.bf16.mxu0 0
    %747 = vmatpush1.bf16.msra.mxu0 %v571
    %748 = vmatprep.subr.bf16.mxu0 0
    %749 = vmatpush1.bf16.msra.mxu0 %v570
    %750 = vmatprep.subr.bf16.mxu0 0
    %751 = vmatpush1.bf16.msra.mxu0 %v569
    %752 = vmatprep.subr.bf16.mxu0 0
    %753 = vmatpush1.bf16.msra.mxu0 %v568
    %754 = vmatprep.subr.bf16.mxu0 0
    %755 = vmatpush1.bf16.msra.mxu0 %v567
    %756 = vmatprep.subr.bf16.mxu0 0
    %757 = vmatpush1.bf16.msra.mxu0 %v566
    %758 = vmatprep.subr.bf16.mxu0 0
    %759 = vmatpush2.bf16.msra.mxu0 %v581
    %760 = vmatprep.subr.bf16.mxu0 0
    %761 = vmatpush2.bf16.msra.mxu0 %v580
    %762 = vmatprep.subr.bf16.mxu0 0
    %763 = vmatpush2.bf16.msra.mxu0 %v579
    %764 = vmatprep.subr.bf16.mxu0 0
    %765 = vmatpush2.bf16.msra.mxu0 %v578
    %766 = vmatprep.subr.bf16.mxu0 0
    %767 = vmatpush2.bf16.msra.mxu0 %v577
    %768 = vmatprep.subr.bf16.mxu0 0
    %769 = vmatpush2.bf16.msra.mxu0 %v576
    %770 = vmatprep.subr.bf16.mxu0 0
    %771 = vmatpush2.bf16.msra.mxu0 %v575
    %772 = vmatprep.subr.bf16.mxu0 0
    %773 = vmatpush2.bf16.msra.mxu0 %v574
    %774 = vmatprep.mubr.bf16.mxu0 %v265
    %775 = vmatmul.mubr.bf16.gmra.mxu0 %v251
    %v776 = vpop.f32.mrf.mxu0
    %v777 = vadd.f32 %v737, %v776
    %v778 = vpop.f32.mrf.mxu0
    %v779 = vpop.f32.mrf.mxu0
    %v780 = vpop.f32.mrf.mxu0
    %781 = vdwg.mxu0
    %782 = vmatprep.subr.bf16.mxu0 0
    %783 = vmatpush1.bf16.msra.mxu0 %v589
    %784 = vmatprep.subr.bf16.mxu0 0
    %785 = vmatpush1.bf16.msra.mxu0 %v588
    %786 = vmatprep.subr.bf16.mxu0 0
    %787 = vmatpush1.bf16.msra.mxu0 %v587
    %788 = vmatprep.subr.bf16.mxu0 0
    %789 = vmatpush1.bf16.msra.mxu0 %v586
    %790 = vmatprep.subr.bf16.mxu0 0
    %791 = vmatpush1.bf16.msra.mxu0 %v585
    %792 = vmatprep.subr.bf16.mxu0 0
    %793 = vmatpush1.bf16.msra.mxu0 %v584
    %794 = vmatprep.subr.bf16.mxu0 0
    %795 = vmatpush1.bf16.msra.mxu0 %v583
    %796 = vmatprep.subr.bf16.mxu0 0
    %797 = vmatpush1.bf16.msra.mxu0 %v582
    %798 = vmatprep.subr.bf16.mxu0 0
    %799 = vmatpush2.bf16.msra.mxu0 %v597
    %800 = vmatprep.subr.bf16.mxu0 0
    %801 = vmatpush2.bf16.msra.mxu0 %v596
    %802 = vmatprep.subr.bf16.mxu0 0
    %803 = vmatpush2.bf16.msra.mxu0 %v595
    %804 = vmatprep.subr.bf16.mxu0 0
    %805 = vmatpush2.bf16.msra.mxu0 %v594
    %806 = vmatprep.subr.bf16.mxu0 0
    %807 = vmatpush2.bf16.msra.mxu0 %v593
    %808 = vmatprep.subr.bf16.mxu0 0
    %809 = vmatpush2.bf16.msra.mxu0 %v592
    %810 = vmatprep.subr.bf16.mxu0 0
    %811 = vmatpush2.bf16.msra.mxu0 %v591
    %812 = vmatprep.subr.bf16.mxu0 0
    %813 = vmatpush2.bf16.msra.mxu0 %v590
    %814 = vmatprep.mubr.bf16.mxu0 %v269
    %815 = vmatmul.mubr.bf16.gmra.mxu0 %v267
    %v816 = vpop.f32.mrf.mxu0
    %v817 = vadd.f32 %v777, %v816
    %v818 = vpop.f32.mrf.mxu0
    %v819 = vpop.f32.mrf.mxu0
    %v820 = vpop.f32.mrf.mxu0
    %821 = vdwg.mxu0
    %v822 = vld [vmem:[%s0] sm:$0x3]
    %v823 = vlaneseq
    %v824 = vshrl.u32 %v823, 7
    %v825 = vsub.s32 0, %v824
    %v826 = vrot.slane %v822, %v825
    %828 = vbcast.lane.b32.xlu0 %v826, 256
    %v829 = vpop.permute.xlu0 %828
    %v830 = vlaneseq
    %v831 = vshrl.u32 %v830, 7
    %v832 = vsub.s32 1, %v831
    %v833 = vrot.slane %v822, %v832
    %835 = vbcast.lane.b32.xlu0 %v833, 256
    %v836 = vpop.permute.xlu0 %835
    %vm837 = vcmp.eq.s32.totalorder %v829, %v55
    %vm838 = vcmp.eq.s32.totalorder %v836, %v55
    %v839 = vsel %vm837, 1.0, 0.0
    %v840 = vsel %vm838, 1.0, 0.0
    %v841 = vpack.c.bf16 %v839, %v839
    %v842 = vpack.c.bf16 %v840, %v840
    %v843 = vld [vmem:[#allocation5 + $0x280] sm:$0xf]
    %v844 = vld [vmem:[#allocation5 + $0x284] sm:$0xf]
    %v845 = vld [vmem:[#allocation5 + $0x288] sm:$0xf]
    %v846 = vld [vmem:[#allocation5 + $0x28c] sm:$0xf]
    %v847 = vld [vmem:[#allocation5 + $0x290] sm:$0xf]
    %v848 = vld [vmem:[#allocation5 + $0x294] sm:$0xf]
    %v849 = vld [vmem:[#allocation5 + $0x298] sm:$0xf]
    %v850 = vld [vmem:[#allocation5 + $0x29c] sm:$0xf]
    %v851 = vld [vmem:[#allocation5 + $0x2a0] sm:$0xf]
    %v852 = vld [vmem:[#allocation5 + $0x2a4] sm:$0xf]
    %v853 = vld [vmem:[#allocation5 + $0x2a8] sm:$0xf]
    %v854 = vld [vmem:[#allocation5 + $0x2ac] sm:$0xf]
    %v855 = vld [vmem:[#allocation5 + $0x2b0] sm:$0xf]
    %v856 = vld [vmem:[#allocation5 + $0x2b4] sm:$0xf]
    %v857 = vld [vmem:[#allocation5 + $0x2b8] sm:$0xf]
    %v858 = vld [vmem:[#allocation5 + $0x2bc] sm:$0xf]
    %v861 = vunpack.c.l.b16 %v841
    %v862 = vunpack.c.l.b16 %v842
    %v863 = vpack.c.b16 %v862, %v861
    %v881 = vunpack.c.l.b16 %v843
    %v882 = vunpack.c.l.b16 %v844
    %v883 = vunpack.c.l.b16 %v845
    %v884 = vunpack.c.l.b16 %v846
    %v885 = vunpack.c.l.b16 %v847
    %v886 = vunpack.c.l.b16 %v848
    %v887 = vunpack.c.l.b16 %v849
    %v888 = vunpack.c.l.b16 %v850
    %v889 = vunpack.c.l.b16 %v851
    %v890 = vunpack.c.l.b16 %v852
    %v891 = vunpack.c.l.b16 %v853
    %v892 = vunpack.c.l.b16 %v854
    %v893 = vunpack.c.l.b16 %v855
    %v894 = vunpack.c.l.b16 %v856
    %v895 = vunpack.c.l.b16 %v857
    %v896 = vunpack.c.l.b16 %v858
    %v897 = vpack.c.b16 %v882, %v881
    %v898 = vpack.c.b16 %v884, %v883
    %v899 = vpack.c.b16 %v886, %v885
    %v900 = vpack.c.b16 %v888, %v887
    %v901 = vpack.c.b16 %v890, %v889
    %v902 = vpack.c.b16 %v892, %v891
    %v903 = vpack.c.b16 %v894, %v893
    %v904 = vpack.c.b16 %v896, %v895
    %913 = vmatprep.subr.bf16.mxu0 0
    %914 = vmatpush1.bf16.msra.mxu0 %v904
    %915 = vmatprep.subr.bf16.mxu0 0
    %916 = vmatpush1.bf16.msra.mxu0 %v903
    %917 = vmatprep.subr.bf16.mxu0 0
    %918 = vmatpush1.bf16.msra.mxu0 %v902
    %919 = vmatprep.subr.bf16.mxu0 0
    %920 = vmatpush1.bf16.msra.mxu0 %v901
    %921 = vmatprep.subr.bf16.mxu0 0
    %922 = vmatpush1.bf16.msra.mxu0 %v900
    %923 = vmatprep.subr.bf16.mxu0 0
    %924 = vmatpush1.bf16.msra.mxu0 %v899
    %925 = vmatprep.subr.bf16.mxu0 0
    %926 = vmatpush1.bf16.msra.mxu0 %v898
    %927 = vmatprep.subr.bf16.mxu0 0
    %928 = vmatpush1.bf16.msra.mxu0 %v897
    %929 = vmatprep.subr.bf16.mxu0 0
    %930 = vmatpush2.bf16.msra.mxu0 0
    %931 = vmatprep.subr.bf16.mxu0 0
    %932 = vmatpush2.bf16.msra.mxu0 0
    %933 = vmatprep.subr.bf16.mxu0 0
    %934 = vmatpush2.bf16.msra.mxu0 0
    %935 = vmatprep.subr.bf16.mxu0 0
    %936 = vmatpush2.bf16.msra.mxu0 0
    %937 = vmatprep.subr.bf16.mxu0 0
    %938 = vmatpush2.bf16.msra.mxu0 0
    %939 = vmatprep.subr.bf16.mxu0 0
    %940 = vmatpush2.bf16.msra.mxu0 0
    %941 = vmatprep.subr.bf16.mxu0 0
    %942 = vmatpush2.bf16.msra.mxu0 0
    %943 = vmatprep.subr.bf16.mxu0 0
    %944 = vmatpush2.bf16.msra.mxu0 0
    %945 = vmatprep.mubr.bf16.mxu0 0
    %946 = vmatmul.mubr.bf16.gmra.mxu0 %v863
    %v947 = vpop.f32.mrf.mxu0
    %v948 = vadd.f32 0.0, %v947
    %v949 = vpop.f32.mrf.mxu0
    %v950 = vpop.f32.mrf.mxu0
    %v951 = vadd.f32 0.0, %v950
    %v952 = vpop.f32.mrf.mxu0
    %953 = vdwg.mxu0
    %v956 = vunpack.c.l.s4 1966171168
    %v957 = vunpack.c.0.s8 %v956
    %v958 = vlaneseq
    %v959 = vshrl.u32 %v958, 7
    %v960 = vsub.s32 %v957, %v959
    %v961 = vrot.slane %v817, %v960
    %v962 = vcombine.high %v961, %v961
    %v964 = vunpack.c.l.s4 1966171168
    %v965 = vunpack.c.0.s8 %v964
    %v966 = vlaneseq
    %v967 = vshrl.u32 %v966, 7
    %v968 = vsub.s32 %v965, %v967
    %v969 = vrot.slane %v961, %v968
    %v971 = vunpack.c.l.s4 1966171168
    %v972 = vunpack.c.0.s8 %v971
    %v973 = vlaneseq
    %v974 = vshrl.u32 %v973, 7
    %v975 = vsub.s32 %v972, %v974
    %v976 = vrot.slane %v962, %v975
    %v977 = vlaneseq
    %v978 = vshrl.u32 %v977, 7
    %v979 = vsub.s32 0, %v978
    %v980 = vrot.slane %v969, %v979
    %v981 = vlaneseq
    %v982 = vshrl.u32 %v981, 7
    %v983 = vsub.s32 0, %v982
    %v984 = vrot.slane %v976, %v983
    %v987 = vpack.c.bf16 %v948, %v980
    %v988 = vpack.c.bf16 %v951, %v984
    %v989 = vld [vmem:[#allocation2] sm:$0xf]
    %v990 = vld [vmem:[#allocation2 + $0x20] sm:$0xf]
    %v991 = vld [vmem:[#allocation2 + $0x40] sm:$0xf]
    %v992 = vld [vmem:[#allocation2 + $0x60] sm:$0xf]
    %v993 = vld [vmem:[#allocation2 + $0x80] sm:$0xf]
    %v994 = vld [vmem:[#allocation2 + $0xa0] sm:$0xf]
    %v995 = vld [vmem:[#allocation2 + $0xc0] sm:$0xf]
    %v996 = vld [vmem:[#allocation2 + $0xe0] sm:$0xf]
    %v997 = vld [vmem:[#allocation2 + $0x100] sm:$0xf]
    %v998 = vld [vmem:[#allocation2 + $0x120] sm:$0xf]
    %v999 = vld [vmem:[#allocation2 + $0x140] sm:$0xf]
    %v1000 = vld [vmem:[#allocation2 + $0x160] sm:$0xf]
    %v1001 = vld [vmem:[#allocation2 + $0x180] sm:$0xf]
    %v1002 = vld [vmem:[#allocation2 + $0x1a0] sm:$0xf]
    %v1003 = vld [vmem:[#allocation2 + $0x1c0] sm:$0xf]
    %v1004 = vld [vmem:[#allocation2 + $0x1e0] sm:$0xf]
    %v1005 = vld [vmem:[%s5 + $0x1] ss:$0 sm:$0xff]
    %v1022 = vunpack.c.l.b16 %v989
    %v1023 = vunpack.c.l.b16 %v990
    %v1024 = vunpack.c.l.b16 %v991
    %v1025 = vunpack.c.l.b16 %v992
    %v1026 = vunpack.c.l.b16 %v993
    %v1027 = vunpack.c.l.b16 %v994
    %v1028 = vunpack.c.l.b16 %v995
    %v1029 = vunpack.c.l.b16 %v996
    %v1030 = vunpack.c.l.b16 %v997
    %v1031 = vunpack.c.l.b16 %v998
    %v1032 = vunpack.c.l.b16 %v999
    %v1033 = vunpack.c.l.b16 %v1000
    %v1034 = vunpack.c.l.b16 %v1001
    %v1035 = vunpack.c.l.b16 %v1002
    %v1036 = vunpack.c.l.b16 %v1003
    %v1037 = vunpack.c.l.b16 %v1004
    %v1038 = vpack.c.b16 %v1023, %v1022
    %v1039 = vpack.c.b16 %v1025, %v1024
    %v1040 = vpack.c.b16 %v1027, %v1026
    %v1041 = vpack.c.b16 %v1029, %v1028
    %v1042 = vpack.c.b16 %v1031, %v1030
    %v1043 = vpack.c.b16 %v1033, %v1032
    %v1044 = vpack.c.b16 %v1035, %v1034
    %v1045 = vpack.c.b16 %v1037, %v1036
    %1054 = vmatprep.subr.bf16.mxu0 0
    %1055 = vmatpush1.bf16.msra.mxu0 %v1045
    %1056 = vmatprep.subr.bf16.mxu0 0
    %1057 = vmatpush1.bf16.msra.mxu0 %v1044
    %1058 = vmatprep.subr.bf16.mxu0 0
    %1059 = vmatpush1.bf16.msra.mxu0 %v1043
    %1060 = vmatprep.subr.bf16.mxu0 0
    %1061 = vmatpush1.bf16.msra.mxu0 %v1042
    %1062 = vmatprep.subr.bf16.mxu0 0
    %1063 = vmatpush1.bf16.msra.mxu0 %v1041
    %1064 = vmatprep.subr.bf16.mxu0 0
    %1065 = vmatpush1.bf16.msra.mxu0 %v1040
    %1066 = vmatprep.subr.bf16.mxu0 0
    %1067 = vmatpush1.bf16.msra.mxu0 %v1039
    %1068 = vmatprep.subr.bf16.mxu0 0
    %1069 = vmatpush1.bf16.msra.mxu0 %v1038
    %1070 = vmatprep.subr.bf16.mxu0 0
    %1071 = vmatpush2.bf16.msra.mxu0 0
    %1072 = vmatprep.subr.bf16.mxu0 0
    %1073 = vmatpush2.bf16.msra.mxu0 0
    %1074 = vmatprep.subr.bf16.mxu0 0
    %1075 = vmatpush2.bf16.msra.mxu0 0
    %1076 = vmatprep.subr.bf16.mxu0 0
    %1077 = vmatpush2.bf16.msra.mxu0 0
    %1078 = vmatprep.subr.bf16.mxu0 0
    %1079 = vmatpush2.bf16.msra.mxu0 0
    %1080 = vmatprep.subr.bf16.mxu0 0
    %1081 = vmatpush2.bf16.msra.mxu0 0
    %1082 = vmatprep.subr.bf16.mxu0 0
    %1083 = vmatpush2.bf16.msra.mxu0 0
    %1084 = vmatprep.subr.bf16.mxu0 0
    %1085 = vmatpush2.bf16.msra.mxu0 0
    %1086 = vmatprep.mubr.bf16.mxu0 0
    %1087 = vmatmul.mubr.bf16.gmra.mxu0 %v987
    %v1088 = vpop.f32.mrf.mxu0
    %v1089 = vadd.f32 %v1005, %v1088
    %v1090 = vpop.f32.mrf.mxu0
    %v1091 = vpop.f32.mrf.mxu0
    %v1092 = vadd.f32 %v1005, %v1091
    %v1093 = vpop.f32.mrf.mxu0
    %1094 = vmatprep.mubr.bf16.mxu0 0
    %1095 = vmatmul.mubr.bf16.gmra.mxu0 %v988
    %v1096 = vpop.f32.mrf.mxu0
    %v1097 = vadd.f32 %v1005, %v1096
    %v1098 = vpop.f32.mrf.mxu0
    %v1099 = vpop.f32.mrf.mxu0
    %v1100 = vadd.f32 %v1005, %v1099
    %v1101 = vpop.f32.mrf.mxu0
    %1102 = vdwg.mxu0
    %v1103 = vpack.c.bf16 %v1092, %v1089
    %v1104 = vpack.c.bf16 %v1100, %v1097
    %v1105 = vld [vmem:[#allocation2 + $0x4] sm:$0xff]
    %v1106 = vld [vmem:[#allocation2 + $0xc] sm:$0xf]
    %v1107 = vld [vmem:[#allocation2 + $0x24] sm:$0xff]
    %v1108 = vld [vmem:[#allocation2 + $0x2c] sm:$0xf]
    %v1109 = vld [vmem:[#allocation2 + $0x44] sm:$0xff]
    %v1110 = vld [vmem:[#allocation2 + $0x4c] sm:$0xf]
    %v1111 = vld [vmem:[#allocation2 + $0x64] sm:$0xff]
    %v1112 = vld [vmem:[#allocation2 + $0x6c] sm:$0xf]
    %v1113 = vld [vmem:[#allocation2 + $0x84] sm:$0xff]
    %v1114 = vld [vmem:[#allocation2 + $0x8c] sm:$0xf]
    %v1115 = vld [vmem:[#allocation2 + $0xa4] sm:$0xff]
    %v1116 = vld [vmem:[#allocation2 + $0xac] sm:$0xf]
    %v1117 = vld [vmem:[#allocation2 + $0xc4] sm:$0xff]
    %v1118 = vld [vmem:[#allocation2 + $0xcc] sm:$0xf]
    %v1119 = vld [vmem:[#allocation2 + $0xe4] sm:$0xff]
    %v1120 = vld [vmem:[#allocation2 + $0xec] sm:$0xf]
    %v1121 = vld [vmem:[#allocation2 + $0x104] sm:$0xff]
    %v1122 = vld [vmem:[#allocation2 + $0x10c] sm:$0xf]
    %v1123 = vld [vmem:[#allocation2 + $0x124] sm:$0xff]
    %v1124 = vld [vmem:[#allocation2 + $0x12c] sm:$0xf]
    %v1125 = vld [vmem:[#allocation2 + $0x144] sm:$0xff]
    %v1126 = vld [vmem:[#allocation2 + $0x14c] sm:$0xf]
    %v1127 = vld [vmem:[#allocation2 + $0x164] sm:$0xff]
    %v1128 = vld [vmem:[#allocation2 + $0x16c] sm:$0xf]
    %v1129 = vld [vmem:[#allocation2 + $0x184] sm:$0xff]
    %v1130 = vld [vmem:[#allocation2 + $0x18c] sm:$0xf]
    %v1131 = vld [vmem:[#allocation2 + $0x1a4] sm:$0xff]
    %v1132 = vld [vmem:[#allocation2 + $0x1ac] sm:$0xf]
    %v1133 = vld [vmem:[#allocation2 + $0x1c4] sm:$0xff]
    %v1134 = vld [vmem:[#allocation2 + $0x1cc] sm:$0xf]
    %v1135 = vld [vmem:[#allocation2 + $0x1e4] sm:$0xff]
    %v1136 = vld [vmem:[#allocation2 + $0x1ec] sm:$0xf]
    %s1137 = scalar_lea.vmem %s5, 2
    %v1138 = vld [vmem:[%s1137] ss:$8 sm:$0x7]
    %v1140 = vlaneseq
    %v1141 = vshrl.u32 %v1140, 7
    %v1142 = vsub.s32 0, %v1141
    %v1143 = vrot.slane %v1138, %v1142
    %v1144 = vlaneseq
    %v1145 = vshrl.u32 %v1144, 7
    %v1146 = vsub.s32 1, %v1145
    %v1147 = vrot.slane %v1138, %v1146
    %v1148 = vlaneseq
    %v1149 = vshrl.u32 %v1148, 7
    %v1150 = vsub.s32 2, %v1149
    %v1151 = vrot.slane %v1138, %v1150
    %v1187 = vunpack.c.l.b16 %v1105
    %v1188 = vunpack.c.h.b16 %v1105
    %v1189 = vunpack.c.l.b16 %v1106
    %v1190 = vunpack.c.l.b16 %v1107
    %v1191 = vunpack.c.h.b16 %v1107
    %v1192 = vunpack.c.l.b16 %v1108
    %v1193 = vunpack.c.l.b16 %v1109
    %v1194 = vunpack.c.h.b16 %v1109
    %v1195 = vunpack.c.l.b16 %v1110
    %v1196 = vunpack.c.l.b16 %v1111
    %v1197 = vunpack.c.h.b16 %v1111
    %v1198 = vunpack.c.l.b16 %v1112
    %v1199 = vunpack.c.l.b16 %v1113
    %v1200 = vunpack.c.h.b16 %v1113
    %v1201 = vunpack.c.l.b16 %v1114
    %v1202 = vunpack.c.l.b16 %v1115
    %v1203 = vunpack.c.h.b16 %v1115
    %v1204 = vunpack.c.l.b16 %v1116
    %v1205 = vunpack.c.l.b16 %v1117
    %v1206 = vunpack.c.h.b16 %v1117
    %v1207 = vunpack.c.l.b16 %v1118
    %v1208 = vunpack.c.l.b16 %v1119
    %v1209 = vunpack.c.h.b16 %v1119
    %v1210 = vunpack.c.l.b16 %v1120
    %v1211 = vunpack.c.l.b16 %v1121
    %v1212 = vunpack.c.h.b16 %v1121
    %v1213 = vunpack.c.l.b16 %v1122
    %v1214 = vunpack.c.l.b16 %v1123
    %v1215 = vunpack.c.h.b16 %v1123
    %v1216 = vunpack.c.l.b16 %v1124
    %v1217 = vunpack.c.l.b16 %v1125
    %v1218 = vunpack.c.h.b16 %v1125
    %v1219 = vunpack.c.l.b16 %v1126
    %v1220 = vunpack.c.l.b16 %v1127
    %v1221 = vunpack.c.h.b16 %v1127
    %v1222 = vunpack.c.l.b16 %v1128
    %v1223 = vunpack.c.l.b16 %v1129
    %v1224 = vunpack.c.h.b16 %v1129
    %v1225 = vunpack.c.l.b16 %v1130
    %v1226 = vunpack.c.l.b16 %v1131
    %v1227 = vunpack.c.h.b16 %v1131
    %v1228 = vunpack.c.l.b16 %v1132
    %v1229 = vunpack.c.l.b16 %v1133
    %v1230 = vunpack.c.h.b16 %v1133
    %v1231 = vunpack.c.l.b16 %v1134
    %v1232 = vunpack.c.l.b16 %v1135
    %v1233 = vunpack.c.h.b16 %v1135
    %v1234 = vunpack.c.l.b16 %v1136
    %v1235 = vpack.c.b16 %v1190, %v1187
    %v1236 = vpack.c.b16 %v1191, %v1188
    %v1237 = vpack.c.b16 %v1192, %v1189
    %v1238 = vpack.c.b16 %v1196, %v1193
    %v1239 = vpack.c.b16 %v1197, %v1194
    %v1240 = vpack.c.b16 %v1198, %v1195
    %v1241 = vpack.c.b16 %v1202, %v1199
    %v1242 = vpack.c.b16 %v1203, %v1200
    %v1243 = vpack.c.b16 %v1204, %v1201
    %v1244 = vpack.c.b16 %v1208, %v1205
    %v1245 = vpack.c.b16 %v1209, %v1206
    %v1246 = vpack.c.b16 %v1210, %v1207
    %v1247 = vpack.c.b16 %v1214, %v1211
    %v1248 = vpack.c.b16 %v1215, %v1212
    %v1249 = vpack.c.b16 %v1216, %v1213
    %v1250 = vpack.c.b16 %v1220, %v1217
    %v1251 = vpack.c.b16 %v1221, %v1218
    %v1252 = vpack.c.b16 %v1222, %v1219
    %v1253 = vpack.c.b16 %v1226, %v1223
    %v1254 = vpack.c.b16 %v1227, %v1224
    %v1255 = vpack.c.b16 %v1228, %v1225
    %v1256 = vpack.c.b16 %v1232, %v1229
    %v1257 = vpack.c.b16 %v1233, %v1230
    %v1258 = vpack.c.b16 %v1234, %v1231
    %1283 = vmatprep.subr.bf16.mxu0 %v1257
    %1284 = vmatpush1.bf16.msra.mxu0 %v1256
    %1285 = vmatprep.subr.bf16.mxu0 %v1254
    %1286 = vmatpush1.bf16.msra.mxu0 %v1253
    %1287 = vmatprep.subr.bf16.mxu0 %v1251
    %1288 = vmatpush1.bf16.msra.mxu0 %v1250
    %1289 = vmatprep.subr.bf16.mxu0 %v1248
    %1290 = vmatpush1.bf16.msra.mxu0 %v1247
    %1291 = vmatprep.subr.bf16.mxu0 %v1245
    %1292 = vmatpush1.bf16.msra.mxu0 %v1244
    %1293 = vmatprep.subr.bf16.mxu0 %v1242
    %1294 = vmatpush1.bf16.msra.mxu0 %v1241
    %1295 = vmatprep.subr.bf16.mxu0 %v1239
    %1296 = vmatpush1.bf16.msra.mxu0 %v1238
    %1297 = vmatprep.subr.bf16.mxu0 %v1236
    %1298 = vmatpush1.bf16.msra.mxu0 %v1235
    %1299 = vmatprep.subr.bf16.mxu0 0
    %1300 = vmatpush2.bf16.msra.mxu0 0
    %1301 = vmatprep.subr.bf16.mxu0 0
    %1302 = vmatpush2.bf16.msra.mxu0 0
    %1303 = vmatprep.subr.bf16.mxu0 0
    %1304 = vmatpush2.bf16.msra.mxu0 0
    %1305 = vmatprep.subr.bf16.mxu0 0
    %1306 = vmatpush2.bf16.msra.mxu0 0
    %1307 = vmatprep.subr.bf16.mxu0 0
    %1308 = vmatpush2.bf16.msra.mxu0 0
    %1309 = vmatprep.subr.bf16.mxu0 0
    %1310 = vmatpush2.bf16.msra.mxu0 0
    %1311 = vmatprep.subr.bf16.mxu0 0
    %1312 = vmatpush2.bf16.msra.mxu0 0
    %1313 = vmatprep.subr.bf16.mxu0 0
    %1314 = vmatpush2.bf16.msra.mxu0 0
    %1315 = vmatprep.mubr.bf16.mxu0 0
    %1316 = vmatmul.mubr.bf16.gmra.mxu0 %v1103
    %v1317 = vpop.f32.mrf.mxu0
    %v1318 = vadd.f32 %v1143, %v1317
    %v1319 = vpop.f32.mrf.mxu0
    %v1320 = vadd.f32 %v1147, %v1319
    %v1321 = vpop.f32.mrf.mxu0
    %v1322 = vadd.f32 %v1143, %v1321
    %v1323 = vpop.f32.mrf.mxu0
    %v1324 = vadd.f32 %v1147, %v1323
    %1325 = vmatprep.mubr.bf16.mxu0 0
    %1326 = vmatmul.mubr.bf16.gmra.mxu0 %v1104
    %v1327 = vpop.f32.mrf.mxu0
    %v1328 = vadd.f32 %v1143, %v1327
    %v1329 = vpop.f32.mrf.mxu0
    %v1330 = vadd.f32 %v1147, %v1329
    %v1331 = vpop.f32.mrf.mxu0
    %v1332 = vadd.f32 %v1143, %v1331
    %v1333 = vpop.f32.mrf.mxu0
    %v1334 = vadd.f32 %v1147, %v1333
    %1335 = vdwg.mxu0
    %1336 = vmatprep.subr.bf16.mxu0 0
    %1337 = vmatpush1.bf16.msra.mxu0 %v1258
    %1338 = vmatprep.subr.bf16.mxu0 0
    %1339 = vmatpush1.bf16.msra.mxu0 %v1255
    %1340 = vmatprep.subr.bf16.mxu0 0
    %1341 = vmatpush1.bf16.msra.mxu0 %v1252
    %1342 = vmatprep.subr.bf16.mxu0 0
    %1343 = vmatpush1.bf16.msra.mxu0 %v1249
    %1344 = vmatprep.subr.bf16.mxu0 0
    %1345 = vmatpush1.bf16.msra.mxu0 %v1246
    %1346 = vmatprep.subr.bf16.mxu0 0
    %1347 = vmatpush1.bf16.msra.mxu0 %v1243
    %1348 = vmatprep.subr.bf16.mxu0 0
    %1349 = vmatpush1.bf16.msra.mxu0 %v1240
    %1350 = vmatprep.subr.bf16.mxu0 0
    %1351 = vmatpush1.bf16.msra.mxu0 %v1237
    %1352 = vmatprep.subr.bf16.mxu0 0
    %1353 = vmatpush2.bf16.msra.mxu0 0
    %1354 = vmatprep.subr.bf16.mxu0 0
    %1355 = vmatpush2.bf16.msra.mxu0 0
    %1356 = vmatprep.subr.bf16.mxu0 0
    %1357 = vmatpush2.bf16.msra.mxu0 0
    %1358 = vmatprep.subr.bf16.mxu0 0
    %1359 = vmatpush2.bf16.msra.mxu0 0
    %1360 = vmatprep.subr.bf16.mxu0 0
    %1361 = vmatpush2.bf16.msra.mxu0 0
    %1362 = vmatprep.subr.bf16.mxu0 0
    %1363 = vmatpush2.bf16.msra.mxu0 0
    %1364 = vmatprep.subr.bf16.mxu0 0
    %1365 = vmatpush2.bf16.msra.mxu0 0
    %1366 = vmatprep.subr.bf16.mxu0 0
    %1367 = vmatpush2.bf16.msra.mxu0 0
    %1368 = vmatprep.mubr.bf16.mxu0 0
    %1369 = vmatmul.mubr.bf16.gmra.mxu0 %v1103
    %v1370 = vpop.f32.mrf.mxu0
    %v1371 = vadd.f32 %v1151, %v1370
    %v1372 = vpop.f32.mrf.mxu0
    %v1373 = vpop.f32.mrf.mxu0
    %v1374 = vadd.f32 %v1151, %v1373
    %v1375 = vpop.f32.mrf.mxu0
    %1376 = vmatprep.mubr.bf16.mxu0 0
    %1377 = vmatmul.mubr.bf16.gmra.mxu0 %v1104
    %v1378 = vpop.f32.mrf.mxu0
    %v1379 = vadd.f32 %v1151, %v1378
    %v1380 = vpop.f32.mrf.mxu0
    %v1381 = vpop.f32.mrf.mxu0
    %v1382 = vadd.f32 %v1151, %v1381
    %v1383 = vpop.f32.mrf.mxu0
    %1384 = vdwg.mxu0
    %v1385 = vpack.c.bf16 %v1322, %v1318
    %v1386 = vpack.c.bf16 %v1332, %v1328
    %v1387 = vpack.c.bf16 %v1324, %v1320
    %v1388 = vpack.c.bf16 %v1334, %v1330
    %v1389 = vpack.c.bf16 %v1374, %v1371
    %v1390 = vpack.c.bf16 %v1382, %v1379
    %vm1391 = vcmask 261120
    %v1393 = vsel %vm1391, %v1385, 0
    %v1396 = vsel %vm1391, %v1387, 0
    %1398 = vmatprep.subr.bf16.mxu0 0
    %1399 = vmatpush1.bf16.xpose.msra.mxu0 0
    %1400 = vmatprep.subr.bf16.mxu0 0
    %1401 = vmatpush1.bf16.xpose.msra.mxu0 0
    %1402 = vmatprep.subr.bf16.mxu0 0
    %1403 = vmatpush1.bf16.xpose.msra.mxu0 0
    %1404 = vmatprep.subr.bf16.mxu0 0
    %1405 = vmatpush1.bf16.xpose.msra.mxu0 0
    %1406 = vmatprep.subr.bf16.mxu0 0
    %1407 = vmatpush1.bf16.xpose.msra.mxu0 0
    %1408 = vmatprep.subr.bf16.mxu0 0
    %1409 = vmatpush1.bf16.xpose.msra.mxu0 0
    %1410 = vmatprep.subr.bf16.mxu0 0
    %1411 = vmatpush1.bf16.xpose.msra.mxu0 0
    %1412 = vmatprep.subr.bf16.mxu0 0
    %1413 = vmatpush1.bf16.xpose.msra.mxu0 %v1396
    %1414 = vmatprep.subr.bf16.mxu0 0
    %1415 = vmatpush2.bf16.xpose.msra.mxu0 0
    %1416 = vmatprep.subr.bf16.mxu0 0
    %1417 = vmatpush2.bf16.xpose.msra.mxu0 0
    %1418 = vmatprep.subr.bf16.mxu0 0
    %1419 = vmatpush2.bf16.xpose.msra.mxu0 0
    %1420 = vmatprep.subr.bf16.mxu0 0
    %1421 = vmatpush2.bf16.xpose.msra.mxu0 0
    %1422 = vmatprep.subr.bf16.mxu0 0
    %1423 = vmatpush2.bf16.xpose.msra.mxu0 0
    %1424 = vmatprep.subr.bf16.mxu0 0
    %1425 = vmatpush2.bf16.xpose.msra.mxu0 0
    %1426 = vmatprep.subr.bf16.mxu0 0
    %1427 = vmatpush2.bf16.xpose.msra.mxu0 0
    %1428 = vmatprep.subr.bf16.mxu0 0
    %1429 = vmatpush2.bf16.xpose.msra.mxu0 0
    %1430 = vmatprep.mubr.bf16.mxu0 0
    %1431 = vmatmul.mubr.bf16.gmra.mxu0 %v1393
    %v1432 = vpop.f32.mrf.mxu0
    %v1433 = vadd.f32 0.0, %v1432
    %v1434 = vpop.f32.mrf.mxu0
    %v1435 = vpop.f32.mrf.mxu0
    %v1436 = vadd.f32 0.0, %v1435
    %v1437 = vpop.f32.mrf.mxu0
    %1438 = vdwg.mxu0
    %v1440 = vsel %vm1391, %v1386, 0
    %v1443 = vsel %vm1391, %v1388, 0
    %1445 = vmatprep.subr.bf16.mxu0 0
    %1446 = vmatpush1.bf16.xpose.msra.mxu0 0
    %1447 = vmatprep.subr.bf16.mxu0 0
    %1448 = vmatpush1.bf16.xpose.msra.mxu0 0
    %1449 = vmatprep.subr.bf16.mxu0 0
    %1450 = vmatpush1.bf16.xpose.msra.mxu0 0
    %1451 = vmatprep.subr.bf16.mxu0 0
    %1452 = vmatpush1.bf16.xpose.msra.mxu0 0
    %1453 = vmatprep.subr.bf16.mxu0 0
    %1454 = vmatpush1.bf16.xpose.msra.mxu0 0
    %1455 = vmatprep.subr.bf16.mxu0 0
    %1456 = vmatpush1.bf16.xpose.msra.mxu0 0
    %1457 = vmatprep.subr.bf16.mxu0 0
    %1458 = vmatpush1.bf16.xpose.msra.mxu0 0
    %1459 = vmatprep.subr.bf16.mxu0 0
    %1460 = vmatpush1.bf16.xpose.msra.mxu0 %v1443
    %1461 = vmatprep.subr.bf16.mxu0 0
    %1462 = vmatpush2.bf16.xpose.msra.mxu0 0
    %1463 = vmatprep.subr.bf16.mxu0 0
    %1464 = vmatpush2.bf16.xpose.msra.mxu0 0
    %1465 = vmatprep.subr.bf16.mxu0 0
    %1466 = vmatpush2.bf16.xpose.msra.mxu0 0
    %1467 = vmatprep.subr.bf16.mxu0 0
    %1468 = vmatpush2.bf16.xpose.msra.mxu0 0
    %1469 = vmatprep.subr.bf16.mxu0 0
    %1470 = vmatpush2.bf16.xpose.msra.mxu0 0
    %1471 = vmatprep.subr.bf16.mxu0 0
    %1472 = vmatpush2.bf16.xpose.msra.mxu0 0
    %1473 = vmatprep.subr.bf16.mxu0 0
    %1474 = vmatpush2.bf16.xpose.msra.mxu0 0
    %1475 = vmatprep.subr.bf16.mxu0 0
    %1476 = vmatpush2.bf16.xpose.msra.mxu0 0
    %1477 = vmatprep.mubr.bf16.mxu0 0
    %1478 = vmatmul.mubr.bf16.gmra.mxu0 %v1440
    %v1479 = vpop.f32.mrf.mxu0
    %v1480 = vadd.f32 0.0, %v1479
    %v1481 = vpop.f32.mrf.mxu0
    %v1482 = vpop.f32.mrf.mxu0
    %v1483 = vadd.f32 0.0, %v1482
    %v1484 = vpop.f32.mrf.mxu0
    %1485 = vdwg.mxu0
    %v1486 = vmul.f32 %v1433, 0.17677669
    %v1487 = vmul.f32 %v1436, 0.17677669
    %v1488 = vmul.f32 %v1480, 0.17677669
    %v1489 = vmul.f32 %v1483, 0.17677669
    %v1490 = vlaneseq
    %v1491 = vshrl.u32 %v1490, 7
    %v1492 = vsub.s32 0, %v1491
    %v1493 = vrot.slane %v82, %v1492
    %v1494 = vlaneseq
    %v1495 = vshrl.u32 %v1494, 7
    %v1496 = vsub.s32 0, %v1495
    %v1497 = vrot.slane %v89, %v1496
    %v1500 = vadd.f32 %v1486, %v1493
    %v1501 = vadd.f32 %v1487, %v1493
    %v1502 = vadd.f32 %v1488, %v1497
    %v1503 = vadd.f32 %v1489, %v1497
    %vm1504 = vcmask 130048
    %v1505 = vsel %vm1504, %v1500, -inf
    %1506 = vmax.xlane.f32.xlu0 %v1505
    %v1507 = vpop.xlane.xlu0 %1506
    %v1508 = vsel %vm1504, %v1501, -inf
    %1509 = vmax.xlane.f32.xlu0 %v1508
    %v1510 = vpop.xlane.xlu0 %1509
    %v1511 = vsel %vm1504, %v1502, -inf
    %1512 = vmax.xlane.f32.xlu0 %v1511
    %v1513 = vpop.xlane.xlu0 %1512
    %v1514 = vsel %vm1504, %v1503, -inf
    %1515 = vmax.xlane.f32.xlu0 %v1514
    %v1516 = vpop.xlane.xlu0 %1515
    %v1517 = vsub.f32 %v1500, %v1507
    %v1518 = vsub.f32 %v1501, %v1510
    %v1519 = vsub.f32 %v1502, %v1513
    %v1520 = vsub.f32 %v1503, %v1516
    %v1521 = vmul.f32 %v1517, 1.442695
    %v1522 = vpow.pop %v1521
    %v1523 = vmul.f32 %v1518, 1.442695
    %v1524 = vpow.pop %v1523
    %v1525 = vmul.f32 %v1519, 1.442695
    %v1526 = vpow.pop %v1525
    %v1527 = vmul.f32 %v1520, 1.442695
    %v1528 = vpow.pop %v1527
    %v1529 = vsel %vm1504, %v1522, 0.0
    %1530 = vadd.xlane.f32.xlu0 %v1529
    %v1531 = vpop.xlane.xlu0 %1530
    %v1532 = vsel %vm1504, %v1524, 0.0
    %1533 = vadd.xlane.f32.xlu0 %v1532
    %v1534 = vpop.xlane.xlu0 %1533
    %v1535 = vsel %vm1504, %v1526, 0.0
    %1536 = vadd.xlane.f32.xlu0 %v1535
    %v1537 = vpop.xlane.xlu0 %1536
    %v1538 = vsel %vm1504, %v1528, 0.0
    %1539 = vadd.xlane.f32.xlu0 %v1538
    %v1540 = vpop.xlane.xlu0 %1539
    %v1541 = vrcp.pop %v1531
    %v1542 = vmul.f32 %v1522, %v1541
    %v1543 = vrcp.pop %v1534
    %v1544 = vmul.f32 %v1524, %v1543
    %v1545 = vrcp.pop %v1537
    %v1546 = vmul.f32 %v1526, %v1545
    %v1547 = vrcp.pop %v1540
    %v1548 = vmul.f32 %v1528, %v1547
    %v1549 = vpack.c.bf16 %v1544, %v1542
    %v1550 = vpack.c.bf16 %v1548, %v1546
    %v1552 = vsel %vm1504, %v1549, 0
    %1554 = vmatprep.subr.bf16.mxu0 0
    %1555 = vmatpush1.bf16.msra.mxu0 0
    %1556 = vmatprep.subr.bf16.mxu0 0
    %1557 = vmatpush1.bf16.msra.mxu0 0
    %1558 = vmatprep.subr.bf16.mxu0 0
    %1559 = vmatpush1.bf16.msra.mxu0 0
    %1560 = vmatprep.subr.bf16.mxu0 0
    %1561 = vmatpush1.bf16.msra.mxu0 0
    %1562 = vmatprep.subr.bf16.mxu0 0
    %1563 = vmatpush1.bf16.msra.mxu0 0
    %1564 = vmatprep.subr.bf16.mxu0 0
    %1565 = vmatpush1.bf16.msra.mxu0 0
    %1566 = vmatprep.subr.bf16.mxu0 0
    %1567 = vmatpush1.bf16.msra.mxu0 0
    %1568 = vmatprep.subr.bf16.mxu0 0
    %1569 = vmatpush1.bf16.msra.mxu0 %v1389
    %1570 = vmatprep.subr.bf16.mxu0 0
    %1571 = vmatpush2.bf16.msra.mxu0 0
    %1572 = vmatprep.subr.bf16.mxu0 0
    %1573 = vmatpush2.bf16.msra.mxu0 0
    %1574 = vmatprep.subr.bf16.mxu0 0
    %1575 = vmatpush2.bf16.msra.mxu0 0
    %1576 = vmatprep.subr.bf16.mxu0 0
    %1577 = vmatpush2.bf16.msra.mxu0 0
    %1578 = vmatprep.subr.bf16.mxu0 0
    %1579 = vmatpush2.bf16.msra.mxu0 0
    %1580 = vmatprep.subr.bf16.mxu0 0
    %1581 = vmatpush2.bf16.msra.mxu0 0
    %1582 = vmatprep.subr.bf16.mxu0 0
    %1583 = vmatpush2.bf16.msra.mxu0 0
    %1584 = vmatprep.subr.bf16.mxu0 0
    %1585 = vmatpush2.bf16.msra.mxu0 0
    %1586 = vmatprep.mubr.bf16.mxu0 0
    %1587 = vmatmul.mubr.bf16.gmra.mxu0 %v1552
    %v1588 = vpop.f32.mrf.mxu0
    %v1589 = vadd.f32 0.0, %v1588
    %v1590 = vpop.f32.mrf.mxu0
    %v1591 = vpop.f32.mrf.mxu0
    %v1592 = vadd.f32 0.0, %v1591
    %v1593 = vpop.f32.mrf.mxu0
    %1594 = vdwg.mxu0
    %v1596 = vsel %vm1504, %v1550, 0
    %1598 = vmatprep.subr.bf16.mxu0 0
    %1599 = vmatpush1.bf16.msra.mxu0 0
    %1600 = vmatprep.subr.bf16.mxu0 0
    %1601 = vmatpush1.bf16.msra.mxu0 0
    %1602 = vmatprep.subr.bf16.mxu0 0
    %1603 = vmatpush1.bf16.msra.mxu0 0
    %1604 = vmatprep.subr.bf16.mxu0 0
    %1605 = vmatpush1.bf16.msra.mxu0 0
    %1606 = vmatprep.subr.bf16.mxu0 0
    %1607 = vmatpush1.bf16.msra.mxu0 0
    %1608 = vmatprep.subr.bf16.mxu0 0
    %1609 = vmatpush1.bf16.msra.mxu0 0
    %1610 = vmatprep.subr.bf16.mxu0 0
    %1611 = vmatpush1.bf16.msra.mxu0 0
    %1612 = vmatprep.subr.bf16.mxu0 0
    %1613 = vmatpush1.bf16.msra.mxu0 %v1390
    %1614 = vmatprep.subr.bf16.mxu0 0
    %1615 = vmatpush2.bf16.msra.mxu0 0
    %1616 = vmatprep.subr.bf16.mxu0 0
    %1617 = vmatpush2.bf16.msra.mxu0 0
    %1618 = vmatprep.subr.bf16.mxu0 0
    %1619 = vmatpush2.bf16.msra.mxu0 0
    %1620 = vmatprep.subr.bf16.mxu0 0
    %1621 = vmatpush2.bf16.msra.mxu0 0
    %1622 = vmatprep.subr.bf16.mxu0 0
    %1623 = vmatpush2.bf16.msra.mxu0 0
    %1624 = vmatprep.subr.bf16.mxu0 0
    %1625 = vmatpush2.bf16.msra.mxu0 0
    %1626 = vmatprep.subr.bf16.mxu0 0
    %1627 = vmatpush2.bf16.msra.mxu0 0
    %1628 = vmatprep.subr.bf16.mxu0 0
    %1629 = vmatpush2.bf16.msra.mxu0 0
    %1630 = vmatprep.mubr.bf16.mxu0 0
    %1631 = vmatmul.mubr.bf16.gmra.mxu0 %v1596
    %v1632 = vpop.f32.mrf.mxu0
    %v1633 = vadd.f32 0.0, %v1632
    %v1634 = vpop.f32.mrf.mxu0
    %v1635 = vpop.f32.mrf.mxu0
    %v1636 = vadd.f32 0.0, %v1635
    %v1637 = vpop.f32.mrf.mxu0
    %1638 = vdwg.mxu0
    %1640 = vrot.lane.b32.xlu0 %v1385, 96
    %v1641 = vpop.permute.xlu0 %1640
    %1643 = vrot.lane.b32.xlu0 %v1387, 96
    %v1644 = vpop.permute.xlu0 %1643
    %v1646 = vsel %vm1391, %v1641, 0
    %v1649 = vsel %vm1391, %v1644, 0
    %1651 = vmatprep.subr.bf16.mxu0 0
    %1652 = vmatpush1.bf16.xpose.msra.mxu0 0
    %1653 = vmatprep.subr.bf16.mxu0 0
    %1654 = vmatpush1.bf16.xpose.msra.mxu0 0
    %1655 = vmatprep.subr.bf16.mxu0 0
    %1656 = vmatpush1.bf16.xpose.msra.mxu0 0
    %1657 = vmatprep.subr.bf16.mxu0 0
    %1658 = vmatpush1.bf16.xpose.msra.mxu0 0
    %1659 = vmatprep.subr.bf16.mxu0 0
    %1660 = vmatpush1.bf16.xpose.msra.mxu0 0
    %1661 = vmatprep.subr.bf16.mxu0 0
    %1662 = vmatpush1.bf16.xpose.msra.mxu0 0
    %1663 = vmatprep.subr.bf16.mxu0 0
    %1664 = vmatpush1.bf16.xpose.msra.mxu0 0
    %1665 = vmatprep.subr.bf16.mxu0 0
    %1666 = vmatpush1.bf16.xpose.msra.mxu0 %v1649
    %1667 = vmatprep.subr.bf16.mxu0 0
    %1668 = vmatpush2.bf16.xpose.msra.mxu0 0
    %1669 = vmatprep.subr.bf16.mxu0 0
    %1670 = vmatpush2.bf16.xpose.msra.mxu0 0
    %1671 = vmatprep.subr.bf16.mxu0 0
    %1672 = vmatpush2.bf16.xpose.msra.mxu0 0
    %1673 = vmatprep.subr.bf16.mxu0 0
    %1674 = vmatpush2.bf16.xpose.msra.mxu0 0
    %1675 = vmatprep.subr.bf16.mxu0 0
    %1676 = vmatpush2.bf16.xpose.msra.mxu0 0
    %1677 = vmatprep.subr.bf16.mxu0 0
    %1678 = vmatpush2.bf16.xpose.msra.mxu0 0
    %1679 = vmatprep.subr.bf16.mxu0 0
    %1680 = vmatpush2.bf16.xpose.msra.mxu0 0
    %1681 = vmatprep.subr.bf16.mxu0 0
    %1682 = vmatpush2.bf16.xpose.msra.mxu0 0
    %1683 = vmatprep.mubr.bf16.mxu0 0
    %1684 = vmatmul.mubr.bf16.gmra.mxu0 %v1646
    %v1685 = vpop.f32.mrf.mxu0
    %v1686 = vadd.f32 0.0, %v1685
    %v1687 = vpop.f32.mrf.mxu0
    %v1688 = vpop.f32.mrf.mxu0
    %v1689 = vadd.f32 0.0, %v1688
    %v1690 = vpop.f32.mrf.mxu0
    %1691 = vdwg.mxu0
    %1693 = vrot.lane.b32.xlu0 %v1386, 96
    %v1694 = vpop.permute.xlu0 %1693
    %1696 = vrot.lane.b32.xlu0 %v1388, 96
    %v1697 = vpop.permute.xlu0 %1696
    %v1699 = vsel %vm1391, %v1694, 0
    %v1702 = vsel %vm1391, %v1697, 0
    %1704 = vmatprep.subr.bf16.mxu0 0
    %1705 = vmatpush1.bf16.xpose.msra.mxu0 0
    %1706 = vmatprep.subr.bf16.mxu0 0
    %1707 = vmatpush1.bf16.xpose.msra.mxu0 0
    %1708 = vmatprep.subr.bf16.mxu0 0
    %1709 = vmatpush1.bf16.xpose.msra.mxu0 0
    %1710 = vmatprep.subr.bf16.mxu0 0
    %1711 = vmatpush1.bf16.xpose.msra.mxu0 0
    %1712 = vmatprep.subr.bf16.mxu0 0
    %1713 = vmatpush1.bf16.xpose.msra.mxu0 0
    %1714 = vmatprep.subr.bf16.mxu0 0
    %1715 = vmatpush1.bf16.xpose.msra.mxu0 0
    %1716 = vmatprep.subr.bf16.mxu0 0
    %1717 = vmatpush1.bf16.xpose.msra.mxu0 0
    %1718 = vmatprep.subr.bf16.mxu0 0
    %1719 = vmatpush1.bf16.xpose.msra.mxu0 %v1702
    %1720 = vmatprep.subr.bf16.mxu0 0
    %1721 = vmatpush2.bf16.xpose.msra.mxu0 0
    %1722 = vmatprep.subr.bf16.mxu0 0
    %1723 = vmatpush2.bf16.xpose.msra.mxu0 0
    %1724 = vmatprep.subr.bf16.mxu0 0
    %1725 = vmatpush2.bf16.xpose.msra.mxu0 0
    %1726 = vmatprep.subr.bf16.mxu0 0
    %1727 = vmatpush2.bf16.xpose.msra.mxu0 0
    %1728 = vmatprep.subr.bf16.mxu0 0
    %1729 = vmatpush2.bf16.xpose.msra.mxu0 0
    %1730 = vmatprep.subr.bf16.mxu0 0
    %1731 = vmatpush2.bf16.xpose.msra.mxu0 0
    %1732 = vmatprep.subr.bf16.mxu0 0
    %1733 = vmatpush2.bf16.xpose.msra.mxu0 0
    %1734 = vmatprep.subr.bf16.mxu0 0
    %1735 = vmatpush2.bf16.xpose.msra.mxu0 0
    %1736 = vmatprep.mubr.bf16.mxu0 0
    %1737 = vmatmul.mubr.bf16.gmra.mxu0 %v1699
    %v1738 = vpop.f32.mrf.mxu0
    %v1739 = vadd.f32 0.0, %v1738
    %v1740 = vpop.f32.mrf.mxu0
    %v1741 = vpop.f32.mrf.mxu0
    %v1742 = vadd.f32 0.0, %v1741
    %v1743 = vpop.f32.mrf.mxu0
    %1744 = vdwg.mxu0
    %v1745 = vmul.f32 %v1686, 0.17677669
    %v1746 = vmul.f32 %v1689, 0.17677669
    %v1747 = vmul.f32 %v1739, 0.17677669
    %v1748 = vmul.f32 %v1742, 0.17677669
    %v1749 = vadd.f32 %v1745, %v1493
    %v1750 = vadd.f32 %v1746, %v1493
    %v1751 = vadd.f32 %v1747, %v1497
    %v1752 = vadd.f32 %v1748, %v1497
    %v1753 = vsel %vm1504, %v1749, -inf
    %1754 = vmax.xlane.f32.xlu0 %v1753
    %v1755 = vpop.xlane.xlu0 %1754
    %v1756 = vsel %vm1504, %v1750, -inf
    %1757 = vmax.xlane.f32.xlu0 %v1756
    %v1758 = vpop.xlane.xlu0 %1757
    %v1759 = vsel %vm1504, %v1751, -inf
    %1760 = vmax.xlane.f32.xlu0 %v1759
    %v1761 = vpop.xlane.xlu0 %1760
    %v1762 = vsel %vm1504, %v1752, -inf
    %1763 = vmax.xlane.f32.xlu0 %v1762
    %v1764 = vpop.xlane.xlu0 %1763
    %v1765 = vsub.f32 %v1749, %v1755
    %v1766 = vsub.f32 %v1750, %v1758
    %v1767 = vsub.f32 %v1751, %v1761
    %v1768 = vsub.f32 %v1752, %v1764
    %v1769 = vmul.f32 %v1765, 1.442695
    %v1770 = vpow.pop %v1769
    %v1771 = vmul.f32 %v1766, 1.442695
    %v1772 = vpow.pop %v1771
    %v1773 = vmul.f32 %v1767, 1.442695
    %v1774 = vpow.pop %v1773
    %v1775 = vmul.f32 %v1768, 1.442695
    %v1776 = vpow.pop %v1775
    %v1777 = vsel %vm1504, %v1770, 0.0
    %1778 = vadd.xlane.f32.xlu0 %v1777
    %v1779 = vpop.xlane.xlu0 %1778
    %v1780 = vsel %vm1504, %v1772, 0.0
    %1781 = vadd.xlane.f32.xlu0 %v1780
    %v1782 = vpop.xlane.xlu0 %1781
    %v1783 = vsel %vm1504, %v1774, 0.0
    %1784 = vadd.xlane.f32.xlu0 %v1783
    %v1785 = vpop.xlane.xlu0 %1784
    %v1786 = vsel %vm1504, %v1776, 0.0
    %1787 = vadd.xlane.f32.xlu0 %v1786
    %v1788 = vpop.xlane.xlu0 %1787
    %v1789 = vrcp.pop %v1779
    %v1790 = vmul.f32 %v1770, %v1789
    %v1791 = vrcp.pop %v1782
    %v1792 = vmul.f32 %v1772, %v1791
    %v1793 = vrcp.pop %v1785
    %v1794 = vmul.f32 %v1774, %v1793
    %v1795 = vrcp.pop %v1788
    %v1796 = vmul.f32 %v1776, %v1795
    %v1797 = vpack.c.bf16 %v1792, %v1790
    %v1798 = vpack.c.bf16 %v1796, %v1794
    %1800 = vrot.lane.b32.xlu0 %v1389, 96
    %v1801 = vpop.permute.xlu0 %1800
    %v1804 = vsel %vm1504, %v1797, 0
    %1806 = vmatprep.subr.bf16.mxu0 0
    %1807 = vmatpush1.bf16.msra.mxu0 0
    %1808 = vmatprep.subr.bf16.mxu0 0
    %1809 = vmatpush1.bf16.msra.mxu0 0
    %1810 = vmatprep.subr.bf16.mxu0 0
    %1811 = vmatpush1.bf16.msra.mxu0 0
    %1812 = vmatprep.subr.bf16.mxu0 0
    %1813 = vmatpush1.bf16.msra.mxu0 0
    %1814 = vmatprep.subr.bf16.mxu0 0
    %1815 = vmatpush1.bf16.msra.mxu0 0
    %1816 = vmatprep.subr.bf16.mxu0 0
    %1817 = vmatpush1.bf16.msra.mxu0 0
    %1818 = vmatprep.subr.bf16.mxu0 0
    %1819 = vmatpush1.bf16.msra.mxu0 0
    %1820 = vmatprep.subr.bf16.mxu0 0
    %1821 = vmatpush1.bf16.msra.mxu0 %v1801
    %1822 = vmatprep.subr.bf16.mxu0 0
    %1823 = vmatpush2.bf16.msra.mxu0 0
    %1824 = vmatprep.subr.bf16.mxu0 0
    %1825 = vmatpush2.bf16.msra.mxu0 0
    %1826 = vmatprep.subr.bf16.mxu0 0
    %1827 = vmatpush2.bf16.msra.mxu0 0
    %1828 = vmatprep.subr.bf16.mxu0 0
    %1829 = vmatpush2.bf16.msra.mxu0 0
    %1830 = vmatprep.subr.bf16.mxu0 0
    %1831 = vmatpush2.bf16.msra.mxu0 0
    %1832 = vmatprep.subr.bf16.mxu0 0
    %1833 = vmatpush2.bf16.msra.mxu0 0
    %1834 = vmatprep.subr.bf16.mxu0 0
    %1835 = vmatpush2.bf16.msra.mxu0 0
    %1836 = vmatprep.subr.bf16.mxu0 0
    %1837 = vmatpush2.bf16.msra.mxu0 0
    %1838 = vmatprep.mubr.bf16.mxu0 0
    %1839 = vmatmul.mubr.bf16.gmra.mxu0 %v1804
    %v1840 = vpop.f32.mrf.mxu0
    %v1841 = vadd.f32 0.0, %v1840
    %v1842 = vpop.f32.mrf.mxu0
    %v1843 = vpop.f32.mrf.mxu0
    %v1844 = vadd.f32 0.0, %v1843
    %v1845 = vpop.f32.mrf.mxu0
    %1846 = vdwg.mxu0
    %1848 = vrot.lane.b32.xlu0 %v1390, 96
    %v1849 = vpop.permute.xlu0 %1848
    %v1852 = vsel %vm1504, %v1798, 0
    %1854 = vmatprep.subr.bf16.mxu0 0
    %1855 = vmatpush1.bf16.msra.mxu0 0
    %1856 = vmatprep.subr.bf16.mxu0 0
    %1857 = vmatpush1.bf16.msra.mxu0 0
    %1858 = vmatprep.subr.bf16.mxu0 0
    %1859 = vmatpush1.bf16.msra.mxu0 0
    %1860 = vmatprep.subr.bf16.mxu0 0
    %1861 = vmatpush1.bf16.msra.mxu0 0
    %1862 = vmatprep.subr.bf16.mxu0 0
    %1863 = vmatpush1.bf16.msra.mxu0 0
    %1864 = vmatprep.subr.bf16.mxu0 0
    %1865 = vmatpush1.bf16.msra.mxu0 0
    %1866 = vmatprep.subr.bf16.mxu0 0
    %1867 = vmatpush1.bf16.msra.mxu0 0
    %1868 = vmatprep.subr.bf16.mxu0 0
    %1869 = vmatpush1.bf16.msra.mxu0 %v1849
    %1870 = vmatprep.subr.bf16.mxu0 0
    %1871 = vmatpush2.bf16.msra.mxu0 0
    %1872 = vmatprep.subr.bf16.mxu0 0
    %1873 = vmatpush2.bf16.msra.mxu0 0
    %1874 = vmatprep.subr.bf16.mxu0 0
    %1875 = vmatpush2.bf16.msra.mxu0 0
    %1876 = vmatprep.subr.bf16.mxu0 0
    %1877 = vmatpush2.bf16.msra.mxu0 0
    %1878 = vmatprep.subr.bf16.mxu0 0
    %1879 = vmatpush2.bf16.msra.mxu0 0
    %1880 = vmatprep.subr.bf16.mxu0 0
    %1881 = vmatpush2.bf16.msra.mxu0 0
    %1882 = vmatprep.subr.bf16.mxu0 0
    %1883 = vmatpush2.bf16.msra.mxu0 0
    %1884 = vmatprep.subr.bf16.mxu0 0
    %1885 = vmatpush2.bf16.msra.mxu0 0
    %1886 = vmatprep.mubr.bf16.mxu0 0
    %1887 = vmatmul.mubr.bf16.gmra.mxu0 %v1852
    %v1888 = vpop.f32.mrf.mxu0
    %v1889 = vadd.f32 0.0, %v1888
    %v1890 = vpop.f32.mrf.mxu0
    %v1891 = vpop.f32.mrf.mxu0
    %v1892 = vadd.f32 0.0, %v1891
    %v1893 = vpop.f32.mrf.mxu0
    %1894 = vdwg.mxu0
    %1895 = vrot.lane.b32.xlu0 %v1385, 64
    %v1896 = vpop.permute.xlu0 %1895
    %1897 = vrot.lane.b32.xlu0 %v1387, 64
    %v1898 = vpop.permute.xlu0 %1897
    %v1900 = vsel %vm1391, %v1896, 0
    %v1903 = vsel %vm1391, %v1898, 0
    %1905 = vmatprep.subr.bf16.mxu0 0
    %1906 = vmatpush1.bf16.xpose.msra.mxu0 0
    %1907 = vmatprep.subr.bf16.mxu0 0
    %1908 = vmatpush1.bf16.xpose.msra.mxu0 0
    %1909 = vmatprep.subr.bf16.mxu0 0
    %1910 = vmatpush1.bf16.xpose.msra.mxu0 0
    %1911 = vmatprep.subr.bf16.mxu0 0
    %1912 = vmatpush1.bf16.xpose.msra.mxu0 0
    %1913 = vmatprep.subr.bf16.mxu0 0
    %1914 = vmatpush1.bf16.xpose.msra.mxu0 0
    %1915 = vmatprep.subr.bf16.mxu0 0
    %1916 = vmatpush1.bf16.xpose.msra.mxu0 0
    %1917 = vmatprep.subr.bf16.mxu0 0
    %1918 = vmatpush1.bf16.xpose.msra.mxu0 0
    %1919 = vmatprep.subr.bf16.mxu0 0
    %1920 = vmatpush1.bf16.xpose.msra.mxu0 %v1903
    %1921 = vmatprep.subr.bf16.mxu0 0
    %1922 = vmatpush2.bf16.xpose.msra.mxu0 0
    %1923 = vmatprep.subr.bf16.mxu0 0
    %1924 = vmatpush2.bf16.xpose.msra.mxu0 0
    %1925 = vmatprep.subr.bf16.mxu0 0
    %1926 = vmatpush2.bf16.xpose.msra.mxu0 0
    %1927 = vmatprep.subr.bf16.mxu0 0
    %1928 = vmatpush2.bf16.xpose.msra.mxu0 0
    %1929 = vmatprep.subr.bf16.mxu0 0
    %1930 = vmatpush2.bf16.xpose.msra.mxu0 0
    %1931 = vmatprep.subr.bf16.mxu0 0
    %1932 = vmatpush2.bf16.xpose.msra.mxu0 0
    %1933 = vmatprep.subr.bf16.mxu0 0
    %1934 = vmatpush2.bf16.xpose.msra.mxu0 0
    %1935 = vmatprep.subr.bf16.mxu0 0
    %1936 = vmatpush2.bf16.xpose.msra.mxu0 0
    %1937 = vmatprep.mubr.bf16.mxu0 0
    %1938 = vmatmul.mubr.bf16.gmra.mxu0 %v1900
    %v1939 = vpop.f32.mrf.mxu0
    %v1940 = vadd.f32 0.0, %v1939
    %v1941 = vpop.f32.mrf.mxu0
    %v1942 = vpop.f32.mrf.mxu0
    %v1943 = vadd.f32 0.0, %v1942
    %v1944 = vpop.f32.mrf.mxu0
    %1945 = vdwg.mxu0
    %1946 = vrot.lane.b32.xlu0 %v1386, 64
    %v1947 = vpop.permute.xlu0 %1946
    %1948 = vrot.lane.b32.xlu0 %v1388, 64
    %v1949 = vpop.permute.xlu0 %1948
    %v1951 = vsel %vm1391, %v1947, 0
    %v1954 = vsel %vm1391, %v1949, 0
    %1956 = vmatprep.subr.bf16.mxu0 0
    %1957 = vmatpush1.bf16.xpose.msra.mxu0 0
    %1958 = vmatprep.subr.bf16.mxu0 0
    %1959 = vmatpush1.bf16.xpose.msra.mxu0 0
    %1960 = vmatprep.subr.bf16.mxu0 0
    %1961 = vmatpush1.bf16.xpose.msra.mxu0 0
    %1962 = vmatprep.subr.bf16.mxu0 0
    %1963 = vmatpush1.bf16.xpose.msra.mxu0 0
    %1964 = vmatprep.subr.bf16.mxu0 0
    %1965 = vmatpush1.bf16.xpose.msra.mxu0 0
    %1966 = vmatprep.subr.bf16.mxu0 0
    %1967 = vmatpush1.bf16.xpose.msra.mxu0 0
    %1968 = vmatprep.subr.bf16.mxu0 0
    %1969 = vmatpush1.bf16.xpose.msra.mxu0 0
    %1970 = vmatprep.subr.bf16.mxu0 0
    %1971 = vmatpush1.bf16.xpose.msra.mxu0 %v1954
    %1972 = vmatprep.subr.bf16.mxu0 0
    %1973 = vmatpush2.bf16.xpose.msra.mxu0 0
    %1974 = vmatprep.subr.bf16.mxu0 0
    %1975 = vmatpush2.bf16.xpose.msra.mxu0 0
    %1976 = vmatprep.subr.bf16.mxu0 0
    %1977 = vmatpush2.bf16.xpose.msra.mxu0 0
    %1978 = vmatprep.subr.bf16.mxu0 0
    %1979 = vmatpush2.bf16.xpose.msra.mxu0 0
    %1980 = vmatprep.subr.bf16.mxu0 0
    %1981 = vmatpush2.bf16.xpose.msra.mxu0 0
    %1982 = vmatprep.subr.bf16.mxu0 0
    %1983 = vmatpush2.bf16.xpose.msra.mxu0 0
    %1984 = vmatprep.subr.bf16.mxu0 0
    %1985 = vmatpush2.bf16.xpose.msra.mxu0 0
    %1986 = vmatprep.subr.bf16.mxu0 0
    %1987 = vmatpush2.bf16.xpose.msra.mxu0 0
    %1988 = vmatprep.mubr.bf16.mxu0 0
    %1989 = vmatmul.mubr.bf16.gmra.mxu0 %v1951
    %v1990 = vpop.f32.mrf.mxu0
    %v1991 = vadd.f32 0.0, %v1990
    %v1992 = vpop.f32.mrf.mxu0
    %v1993 = vpop.f32.mrf.mxu0
    %v1994 = vadd.f32 0.0, %v1993
    %v1995 = vpop.f32.mrf.mxu0
    %1996 = vdwg.mxu0
    %v1997 = vmul.f32 %v1940, 0.17677669
    %v1998 = vmul.f32 %v1943, 0.17677669
    %v1999 = vmul.f32 %v1991, 0.17677669
    %v2000 = vmul.f32 %v1994, 0.17677669
    %v2001 = vadd.f32 %v1997, %v1493
    %v2002 = vadd.f32 %v1998, %v1493
    %v2003 = vadd.f32 %v1999, %v1497
    %v2004 = vadd.f32 %v2000, %v1497
    %v2005 = vsel %vm1504, %v2001, -inf
    %2006 = vmax.xlane.f32.xlu0 %v2005
    %v2007 = vpop.xlane.xlu0 %2006
    %v2008 = vsel %vm1504, %v2002, -inf
    %2009 = vmax.xlane.f32.xlu0 %v2008
    %v2010 = vpop.xlane.xlu0 %2009
    %v2011 = vsel %vm1504, %v2003, -inf
    %2012 = vmax.xlane.f32.xlu0 %v2011
    %v2013 = vpop.xlane.xlu0 %2012
    %v2014 = vsel %vm1504, %v2004, -inf
    %2015 = vmax.xlane.f32.xlu0 %v2014
    %v2016 = vpop.xlane.xlu0 %2015
    %v2017 = vsub.f32 %v2001, %v2007
    %v2018 = vsub.f32 %v2002, %v2010
    %v2019 = vsub.f32 %v2003, %v2013
    %v2020 = vsub.f32 %v2004, %v2016
    %v2021 = vmul.f32 %v2017, 1.442695
    %v2022 = vpow.pop %v2021
    %v2023 = vmul.f32 %v2018, 1.442695
    %v2024 = vpow.pop %v2023
    %v2025 = vmul.f32 %v2019, 1.442695
    %v2026 = vpow.pop %v2025
    %v2027 = vmul.f32 %v2020, 1.442695
    %v2028 = vpow.pop %v2027
    %v2029 = vsel %vm1504, %v2022, 0.0
    %2030 = vadd.xlane.f32.xlu0 %v2029
    %v2031 = vpop.xlane.xlu0 %2030
    %v2032 = vsel %vm1504, %v2024, 0.0
    %2033 = vadd.xlane.f32.xlu0 %v2032
    %v2034 = vpop.xlane.xlu0 %2033
    %v2035 = vsel %vm1504, %v2026, 0.0
    %2036 = vadd.xlane.f32.xlu0 %v2035
    %v2037 = vpop.xlane.xlu0 %2036
    %v2038 = vsel %vm1504, %v2028, 0.0
    %2039 = vadd.xlane.f32.xlu0 %v2038
    %v2040 = vpop.xlane.xlu0 %2039
    %v2041 = vrcp.pop %v2031
    %v2042 = vmul.f32 %v2022, %v2041
    %v2043 = vrcp.pop %v2034
    %v2044 = vmul.f32 %v2024, %v2043
    %v2045 = vrcp.pop %v2037
    %v2046 = vmul.f32 %v2026, %v2045
    %v2047 = vrcp.pop %v2040
    %v2048 = vmul.f32 %v2028, %v2047
    %v2049 = vpack.c.bf16 %v2044, %v2042
    %v2050 = vpack.c.bf16 %v2048, %v2046
    %2051 = vrot.lane.b32.xlu0 %v1389, 64
    %v2052 = vpop.permute.xlu0 %2051
    %v2055 = vsel %vm1504, %v2049, 0
    %2057 = vmatprep.subr.bf16.mxu0 0
    %2058 = vmatpush1.bf16.msra.mxu0 0
    %2059 = vmatprep.subr.bf16.mxu0 0
    %2060 = vmatpush1.bf16.msra.mxu0 0
    %2061 = vmatprep.subr.bf16.mxu0 0
    %2062 = vmatpush1.bf16.msra.mxu0 0
    %2063 = vmatprep.subr.bf16.mxu0 0
    %2064 = vmatpush1.bf16.msra.mxu0 0
    %2065 = vmatprep.subr.bf16.mxu0 0
    %2066 = vmatpush1.bf16.msra.mxu0 0
    %2067 = vmatprep.subr.bf16.mxu0 0
    %2068 = vmatpush1.bf16.msra.mxu0 0
    %2069 = vmatprep.subr.bf16.mxu0 0
    %2070 = vmatpush1.bf16.msra.mxu0 0
    %2071 = vmatprep.subr.bf16.mxu0 0
    %2072 = vmatpush1.bf16.msra.mxu0 %v2052
    %2073 = vmatprep.subr.bf16.mxu0 0
    %2074 = vmatpush2.bf16.msra.mxu0 0
    %2075 = vmatprep.subr.bf16.mxu0 0
    %2076 = vmatpush2.bf16.msra.mxu0 0
    %2077 = vmatprep.subr.bf16.mxu0 0
    %2078 = vmatpush2.bf16.msra.mxu0 0
    %2079 = vmatprep.subr.bf16.mxu0 0
    %2080 = vmatpush2.bf16.msra.mxu0 0
    %2081 = vmatprep.subr.bf16.mxu0 0
    %2082 = vmatpush2.bf16.msra.mxu0 0
    %2083 = vmatprep.subr.bf16.mxu0 0
    %2084 = vmatpush2.bf16.msra.mxu0 0
    %2085 = vmatprep.subr.bf16.mxu0 0
    %2086 = vmatpush2.bf16.msra.mxu0 0
    %2087 = vmatprep.subr.bf16.mxu0 0
    %2088 = vmatpush2.bf16.msra.mxu0 0
    %2089 = vmatprep.mubr.bf16.mxu0 0
    %2090 = vmatmul.mubr.bf16.gmra.mxu0 %v2055
    %v2091 = vpop.f32.mrf.mxu0
    %v2092 = vadd.f32 0.0, %v2091
    %v2093 = vpop.f32.mrf.mxu0
    %v2094 = vpop.f32.mrf.mxu0
    %v2095 = vadd.f32 0.0, %v2094
    %v2096 = vpop.f32.mrf.mxu0
    %2097 = vdwg.mxu0
    %2098 = vrot.lane.b32.xlu0 %v1390, 64
    %v2099 = vpop.permute.xlu0 %2098
    %v2102 = vsel %vm1504, %v2050, 0
    %2104 = vmatprep.subr.bf16.mxu0 0
    %2105 = vmatpush1.bf16.msra.mxu0 0
    %2106 = vmatprep.subr.bf16.mxu0 0
    %2107 = vmatpush1.bf16.msra.mxu0 0
    %2108 = vmatprep.subr.bf16.mxu0 0
    %2109 = vmatpush1.bf16.msra.mxu0 0
    %2110 = vmatprep.subr.bf16.mxu0 0
    %2111 = vmatpush1.bf16.msra.mxu0 0
    %2112 = vmatprep.subr.bf16.mxu0 0
    %2113 = vmatpush1.bf16.msra.mxu0 0
    %2114 = vmatprep.subr.bf16.mxu0 0
    %2115 = vmatpush1.bf16.msra.mxu0 0
    %2116 = vmatprep.subr.bf16.mxu0 0
    %2117 = vmatpush1.bf16.msra.mxu0 0
    %2118 = vmatprep.subr.bf16.mxu0 0
    %2119 = vmatpush1.bf16.msra.mxu0 %v2099
    %2120 = vmatprep.subr.bf16.mxu0 0
    %2121 = vmatpush2.bf16.msra.mxu0 0
    %2122 = vmatprep.subr.bf16.mxu0 0
    %2123 = vmatpush2.bf16.msra.mxu0 0
    %2124 = vmatprep.subr.bf16.mxu0 0
    %2125 = vmatpush2.bf16.msra.mxu0 0
    %2126 = vmatprep.subr.bf16.mxu0 0
    %2127 = vmatpush2.bf16.msra.mxu0 0
    %2128 = vmatprep.subr.bf16.mxu0 0
    %2129 = vmatpush2.bf16.msra.mxu0 0
    %2130 = vmatprep.subr.bf16.mxu0 0
    %2131 = vmatpush2.bf16.msra.mxu0 0
    %2132 = vmatprep.subr.bf16.mxu0 0
    %2133 = vmatpush2.bf16.msra.mxu0 0
    %2134 = vmatprep.subr.bf16.mxu0 0
    %2135 = vmatpush2.bf16.msra.mxu0 0
    %2136 = vmatprep.mubr.bf16.mxu0 0
    %2137 = vmatmul.mubr.bf16.gmra.mxu0 %v2102
    %v2138 = vpop.f32.mrf.mxu0
    %v2139 = vadd.f32 0.0, %v2138
    %v2140 = vpop.f32.mrf.mxu0
    %v2141 = vpop.f32.mrf.mxu0
    %v2142 = vadd.f32 0.0, %v2141
    %v2143 = vpop.f32.mrf.mxu0
    %2144 = vdwg.mxu0
    %2145 = vrot.lane.b32.xlu0 %v1385, 32
    %v2146 = vpop.permute.xlu0 %2145
    %2147 = vrot.lane.b32.xlu0 %v1387, 32
    %v2148 = vpop.permute.xlu0 %2147
    %v2150 = vsel %vm1391, %v2146, 0
    %v2153 = vsel %vm1391, %v2148, 0
    %2155 = vmatprep.subr.bf16.mxu0 0
    %2156 = vmatpush1.bf16.xpose.msra.mxu0 0
    %2157 = vmatprep.subr.bf16.mxu0 0
    %2158 = vmatpush1.bf16.xpose.msra.mxu0 0
    %2159 = vmatprep.subr.bf16.mxu0 0
    %2160 = vmatpush1.bf16.xpose.msra.mxu0 0
    %2161 = vmatprep.subr.bf16.mxu0 0
    %2162 = vmatpush1.bf16.xpose.msra.mxu0 0
    %2163 = vmatprep.subr.bf16.mxu0 0
    %2164 = vmatpush1.bf16.xpose.msra.mxu0 0
    %2165 = vmatprep.subr.bf16.mxu0 0
    %2166 = vmatpush1.bf16.xpose.msra.mxu0 0
    %2167 = vmatprep.subr.bf16.mxu0 0
    %2168 = vmatpush1.bf16.xpose.msra.mxu0 0
    %2169 = vmatprep.subr.bf16.mxu0 0
    %2170 = vmatpush1.bf16.xpose.msra.mxu0 %v2153
    %2171 = vmatprep.subr.bf16.mxu0 0
    %2172 = vmatpush2.bf16.xpose.msra.mxu0 0
    %2173 = vmatprep.subr.bf16.mxu0 0
    %2174 = vmatpush2.bf16.xpose.msra.mxu0 0
    %2175 = vmatprep.subr.bf16.mxu0 0
    %2176 = vmatpush2.bf16.xpose.msra.mxu0 0
    %2177 = vmatprep.subr.bf16.mxu0 0
    %2178 = vmatpush2.bf16.xpose.msra.mxu0 0
    %2179 = vmatprep.subr.bf16.mxu0 0
    %2180 = vmatpush2.bf16.xpose.msra.mxu0 0
    %2181 = vmatprep.subr.bf16.mxu0 0
    %2182 = vmatpush2.bf16.xpose.msra.mxu0 0
    %2183 = vmatprep.subr.bf16.mxu0 0
    %2184 = vmatpush2.bf16.xpose.msra.mxu0 0
    %2185 = vmatprep.subr.bf16.mxu0 0
    %2186 = vmatpush2.bf16.xpose.msra.mxu0 0
    %2187 = vmatprep.mubr.bf16.mxu0 0
    %2188 = vmatmul.mubr.bf16.gmra.mxu0 %v2150
    %v2189 = vpop.f32.mrf.mxu0
    %v2190 = vadd.f32 0.0, %v2189
    %v2191 = vpop.f32.mrf.mxu0
    %v2192 = vpop.f32.mrf.mxu0
    %v2193 = vadd.f32 0.0, %v2192
    %v2194 = vpop.f32.mrf.mxu0
    %2195 = vdwg.mxu0
    %2196 = vrot.lane.b32.xlu0 %v1386, 32
    %v2197 = vpop.permute.xlu0 %2196
    %2198 = vrot.lane.b32.xlu0 %v1388, 32
    %v2199 = vpop.permute.xlu0 %2198
    %v2201 = vsel %vm1391, %v2197, 0
    %v2204 = vsel %vm1391, %v2199, 0
    %2206 = vmatprep.subr.bf16.mxu0 0
    %2207 = vmatpush1.bf16.xpose.msra.mxu0 0
    %2208 = vmatprep.subr.bf16.mxu0 0
    %2209 = vmatpush1.bf16.xpose.msra.mxu0 0
    %2210 = vmatprep.subr.bf16.mxu0 0
    %2211 = vmatpush1.bf16.xpose.msra.mxu0 0
    %2212 = vmatprep.subr.bf16.mxu0 0
    %2213 = vmatpush1.bf16.xpose.msra.mxu0 0
    %2214 = vmatprep.subr.bf16.mxu0 0
    %2215 = vmatpush1.bf16.xpose.msra.mxu0 0
    %2216 = vmatprep.subr.bf16.mxu0 0
    %2217 = vmatpush1.bf16.xpose.msra.mxu0 0
    %2218 = vmatprep.subr.bf16.mxu0 0
    %2219 = vmatpush1.bf16.xpose.msra.mxu0 0
    %2220 = vmatprep.subr.bf16.mxu0 0
    %2221 = vmatpush1.bf16.xpose.msra.mxu0 %v2204
    %2222 = vmatprep.subr.bf16.mxu0 0
    %2223 = vmatpush2.bf16.xpose.msra.mxu0 0
    %2224 = vmatprep.subr.bf16.mxu0 0
    %2225 = vmatpush2.bf16.xpose.msra.mxu0 0
    %2226 = vmatprep.subr.bf16.mxu0 0
    %2227 = vmatpush2.bf16.xpose.msra.mxu0 0
    %2228 = vmatprep.subr.bf16.mxu0 0
    %2229 = vmatpush2.bf16.xpose.msra.mxu0 0
    %2230 = vmatprep.subr.bf16.mxu0 0
    %2231 = vmatpush2.bf16.xpose.msra.mxu0 0
    %2232 = vmatprep.subr.bf16.mxu0 0
    %2233 = vmatpush2.bf16.xpose.msra.mxu0 0
    %2234 = vmatprep.subr.bf16.mxu0 0
    %2235 = vmatpush2.bf16.xpose.msra.mxu0 0
    %2236 = vmatprep.subr.bf16.mxu0 0
    %2237 = vmatpush2.bf16.xpose.msra.mxu0 0
    %2238 = vmatprep.mubr.bf16.mxu0 0
    %2239 = vmatmul.mubr.bf16.gmra.mxu0 %v2201
    %v2240 = vpop.f32.mrf.mxu0
    %v2241 = vadd.f32 0.0, %v2240
    %v2242 = vpop.f32.mrf.mxu0
    %v2243 = vpop.f32.mrf.mxu0
    %v2244 = vadd.f32 0.0, %v2243
    %v2245 = vpop.f32.mrf.mxu0
    %2246 = vdwg.mxu0
    %v2247 = vmul.f32 %v2190, 0.17677669
    %v2248 = vmul.f32 %v2193, 0.17677669
    %v2249 = vmul.f32 %v2241, 0.17677669
    %v2250 = vmul.f32 %v2244, 0.17677669
    %v2251 = vadd.f32 %v2247, %v1493
    %v2252 = vadd.f32 %v2248, %v1493
    %v2253 = vadd.f32 %v2249, %v1497
    %v2254 = vadd.f32 %v2250, %v1497
    %v2255 = vsel %vm1504, %v2251, -inf
    %2256 = vmax.xlane.f32.xlu0 %v2255
    %v2257 = vpop.xlane.xlu0 %2256
    %v2258 = vsel %vm1504, %v2252, -inf
    %2259 = vmax.xlane.f32.xlu0 %v2258
    %v2260 = vpop.xlane.xlu0 %2259
    %v2261 = vsel %vm1504, %v2253, -inf
    %2262 = vmax.xlane.f32.xlu0 %v2261
    %v2263 = vpop.xlane.xlu0 %2262
    %v2264 = vsel %vm1504, %v2254, -inf
    %2265 = vmax.xlane.f32.xlu0 %v2264
    %v2266 = vpop.xlane.xlu0 %2265
    %v2267 = vsub.f32 %v2251, %v2257
    %v2268 = vsub.f32 %v2252, %v2260
    %v2269 = vsub.f32 %v2253, %v2263
    %v2270 = vsub.f32 %v2254, %v2266
    %v2271 = vmul.f32 %v2267, 1.442695
    %v2272 = vpow.pop %v2271
    %v2273 = vmul.f32 %v2268, 1.442695
    %v2274 = vpow.pop %v2273
    %v2275 = vmul.f32 %v2269, 1.442695
    %v2276 = vpow.pop %v2275
    %v2277 = vmul.f32 %v2270, 1.442695
    %v2278 = vpow.pop %v2277
    %v2279 = vsel %vm1504, %v2272, 0.0
    %2280 = vadd.xlane.f32.xlu0 %v2279
    %v2281 = vpop.xlane.xlu0 %2280
    %v2282 = vsel %vm1504, %v2274, 0.0
    %2283 = vadd.xlane.f32.xlu0 %v2282
    %v2284 = vpop.xlane.xlu0 %2283
    %v2285 = vsel %vm1504, %v2276, 0.0
    %2286 = vadd.xlane.f32.xlu0 %v2285
    %v2287 = vpop.xlane.xlu0 %2286
    %v2288 = vsel %vm1504, %v2278, 0.0
    %2289 = vadd.xlane.f32.xlu0 %v2288
    %v2290 = vpop.xlane.xlu0 %2289
    %v2291 = vrcp.pop %v2281
    %v2292 = vmul.f32 %v2272, %v2291
    %v2293 = vrcp.pop %v2284
    %v2294 = vmul.f32 %v2274, %v2293
    %v2295 = vrcp.pop %v2287
    %v2296 = vmul.f32 %v2276, %v2295
    %v2297 = vrcp.pop %v2290
    %v2298 = vmul.f32 %v2278, %v2297
    %v2299 = vpack.c.bf16 %v2294, %v2292
    %v2300 = vpack.c.bf16 %v2298, %v2296
    %2301 = vrot.lane.b32.xlu0 %v1389, 32
    %v2302 = vpop.permute.xlu0 %2301
    %v2305 = vsel %vm1504, %v2299, 0
    %2307 = vmatprep.subr.bf16.mxu0 0
    %2308 = vmatpush1.bf16.msra.mxu0 0
    %2309 = vmatprep.subr.bf16.mxu0 0
    %2310 = vmatpush1.bf16.msra.mxu0 0
    %2311 = vmatprep.subr.bf16.mxu0 0
    %2312 = vmatpush1.bf16.msra.mxu0 0
    %2313 = vmatprep.subr.bf16.mxu0 0
    %2314 = vmatpush1.bf16.msra.mxu0 0
    %2315 = vmatprep.subr.bf16.mxu0 0
    %2316 = vmatpush1.bf16.msra.mxu0 0
    %2317 = vmatprep.subr.bf16.mxu0 0
    %2318 = vmatpush1.bf16.msra.mxu0 0
    %2319 = vmatprep.subr.bf16.mxu0 0
    %2320 = vmatpush1.bf16.msra.mxu0 0
    %2321 = vmatprep.subr.bf16.mxu0 0
    %2322 = vmatpush1.bf16.msra.mxu0 %v2302
    %2323 = vmatprep.subr.bf16.mxu0 0
    %2324 = vmatpush2.bf16.msra.mxu0 0
    %2325 = vmatprep.subr.bf16.mxu0 0
    %2326 = vmatpush2.bf16.msra.mxu0 0
    %2327 = vmatprep.subr.bf16.mxu0 0
    %2328 = vmatpush2.bf16.msra.mxu0 0
    %2329 = vmatprep.subr.bf16.mxu0 0
    %2330 = vmatpush2.bf16.msra.mxu0 0
    %2331 = vmatprep.subr.bf16.mxu0 0
    %2332 = vmatpush2.bf16.msra.mxu0 0
    %2333 = vmatprep.subr.bf16.mxu0 0
    %2334 = vmatpush2.bf16.msra.mxu0 0
    %2335 = vmatprep.subr.bf16.mxu0 0
    %2336 = vmatpush2.bf16.msra.mxu0 0
    %2337 = vmatprep.subr.bf16.mxu0 0
    %2338 = vmatpush2.bf16.msra.mxu0 0
    %2339 = vmatprep.mubr.bf16.mxu0 0
    %2340 = vmatmul.mubr.bf16.gmra.mxu0 %v2305
    %v2341 = vpop.f32.mrf.mxu0
    %v2342 = vadd.f32 0.0, %v2341
    %v2343 = vpop.f32.mrf.mxu0
    %v2344 = vpop.f32.mrf.mxu0
    %v2345 = vadd.f32 0.0, %v2344
    %v2346 = vpop.f32.mrf.mxu0
    %2347 = vdwg.mxu0
    %2348 = vrot.lane.b32.xlu0 %v1390, 32
    %v2349 = vpop.permute.xlu0 %2348
    %v2352 = vsel %vm1504, %v2300, 0
    %2354 = vmatprep.subr.bf16.mxu0 0
    %2355 = vmatpush1.bf16.msra.mxu0 0
    %2356 = vmatprep.subr.bf16.mxu0 0
    %2357 = vmatpush1.bf16.msra.mxu0 0
    %2358 = vmatprep.subr.bf16.mxu0 0
    %2359 = vmatpush1.bf16.msra.mxu0 0
    %2360 = vmatprep.subr.bf16.mxu0 0
    %2361 = vmatpush1.bf16.msra.mxu0 0
    %2362 = vmatprep.subr.bf16.mxu0 0
    %2363 = vmatpush1.bf16.msra.mxu0 0
    %2364 = vmatprep.subr.bf16.mxu0 0
    %2365 = vmatpush1.bf16.msra.mxu0 0
    %2366 = vmatprep.subr.bf16.mxu0 0
    %2367 = vmatpush1.bf16.msra.mxu0 0
    %2368 = vmatprep.subr.bf16.mxu0 0
    %2369 = vmatpush1.bf16.msra.mxu0 %v2349
    %2370 = vmatprep.subr.bf16.mxu0 0
    %2371 = vmatpush2.bf16.msra.mxu0 0
    %2372 = vmatprep.subr.bf16.mxu0 0
    %2373 = vmatpush2.bf16.msra.mxu0 0
    %2374 = vmatprep.subr.bf16.mxu0 0
    %2375 = vmatpush2.bf16.msra.mxu0 0
    %2376 = vmatprep.subr.bf16.mxu0 0
    %2377 = vmatpush2.bf16.msra.mxu0 0
    %2378 = vmatprep.subr.bf16.mxu0 0
    %2379 = vmatpush2.bf16.msra.mxu0 0
    %2380 = vmatprep.subr.bf16.mxu0 0
    %2381 = vmatpush2.bf16.msra.mxu0 0
    %2382 = vmatprep.subr.bf16.mxu0 0
    %2383 = vmatpush2.bf16.msra.mxu0 0
    %2384 = vmatprep.subr.bf16.mxu0 0
    %2385 = vmatpush2.bf16.msra.mxu0 0
    %2386 = vmatprep.mubr.bf16.mxu0 0
    %2387 = vmatmul.mubr.bf16.gmra.mxu0 %v2352
    %v2388 = vpop.f32.mrf.mxu0
    %v2389 = vadd.f32 0.0, %v2388
    %v2390 = vpop.f32.mrf.mxu0
    %v2391 = vpop.f32.mrf.mxu0
    %v2392 = vadd.f32 0.0, %v2391
    %v2393 = vpop.f32.mrf.mxu0
    %2394 = vdwg.mxu0
    %2399 = vrot.lane.b32.xlu0 %v1841, 32
    %v2400 = vpop.permute.xlu0 %2399
    %2401 = vrot.lane.b32.xlu0 %v1844, 32
    %v2402 = vpop.permute.xlu0 %2401
    %2403 = vrot.lane.b32.xlu0 %v1889, 32
    %v2404 = vpop.permute.xlu0 %2403
    %2405 = vrot.lane.b32.xlu0 %v1892, 32
    %v2406 = vpop.permute.xlu0 %2405
    %2415 = vrot.lane.b32.xlu0 %v2092, 64
    %v2416 = vpop.permute.xlu0 %2415
    %2417 = vrot.lane.b32.xlu0 %v2095, 64
    %v2418 = vpop.permute.xlu0 %2417
    %2419 = vrot.lane.b32.xlu0 %v2139, 64
    %v2420 = vpop.permute.xlu0 %2419
    %2421 = vrot.lane.b32.xlu0 %v2142, 64
    %v2422 = vpop.permute.xlu0 %2421
    %2431 = vrot.lane.b32.xlu0 %v2342, 96
    %v2432 = vpop.permute.xlu0 %2431
    %2433 = vrot.lane.b32.xlu0 %v2345, 96
    %v2434 = vpop.permute.xlu0 %2433
    %2435 = vrot.lane.b32.xlu0 %v2389, 96
    %v2436 = vpop.permute.xlu0 %2435
    %2437 = vrot.lane.b32.xlu0 %v2392, 96
    %v2438 = vpop.permute.xlu0 %2437
    %v2443 = vsel %vm1391, %v1589, %v2400
    %v2444 = vsel %vm1391, %v1592, %v2402
    %v2445 = vsel %vm1391, %v1633, %v2404
    %v2446 = vsel %vm1391, %v1636, %v2406
    %vm2447 = vcmask 523264
    %v2448 = vsel %vm2447, %v2443, %v2416
    %v2449 = vsel %vm2447, %v2444, %v2418
    %v2450 = vsel %vm2447, %v2445, %v2420
    %v2451 = vsel %vm2447, %v2446, %v2422
    %vm2452 = vcmask 785408
    %v2453 = vsel %vm2452, %v2448, %v2432
    %v2454 = vsel %vm2452, %v2449, %v2434
    %v2455 = vsel %vm2452, %v2450, %v2436
    %v2456 = vsel %vm2452, %v2451, %v2438
    %v2457 = vpack.c.bf16 %v2454, %v2453
    %v2458 = vpack.c.bf16 %v2456, %v2455
    %v2459 = vld [vmem:[#allocation2 + $0x10] sm:$0xf]
    %v2460 = vld [vmem:[#allocation2 + $0x30] sm:$0xf]
    %v2461 = vld [vmem:[#allocation2 + $0x50] sm:$0xf]
    %v2462 = vld [vmem:[#allocation2 + $0x70] sm:$0xf]
    %v2463 = vld [vmem:[#allocation2 + $0x90] sm:$0xf]
    %v2464 = vld [vmem:[#allocation2 + $0xb0] sm:$0xf]
    %v2465 = vld [vmem:[#allocation2 + $0xd0] sm:$0xf]
    %v2466 = vld [vmem:[#allocation2 + $0xf0] sm:$0xf]
    %v2467 = vld [vmem:[#allocation2 + $0x110] sm:$0xf]
    %v2468 = vld [vmem:[#allocation2 + $0x130] sm:$0xf]
    %v2469 = vld [vmem:[#allocation2 + $0x150] sm:$0xf]
    %v2470 = vld [vmem:[#allocation2 + $0x170] sm:$0xf]
    %v2471 = vld [vmem:[#allocation2 + $0x190] sm:$0xf]
    %v2472 = vld [vmem:[#allocation2 + $0x1b0] sm:$0xf]
    %v2473 = vld [vmem:[#allocation2 + $0x1d0] sm:$0xf]
    %v2474 = vld [vmem:[#allocation2 + $0x1f0] sm:$0xf]
    %v2475 = vld [vmem:[%s5 + $0x3] ss:$0 sm:$0xff]
    %v2492 = vunpack.c.l.b16 %v2459
    %v2493 = vunpack.c.l.b16 %v2460
    %v2494 = vunpack.c.l.b16 %v2461
    %v2495 = vunpack.c.l.b16 %v2462
    %v2496 = vunpack.c.l.b16 %v2463
    %v2497 = vunpack.c.l.b16 %v2464
    %v2498 = vunpack.c.l.b16 %v2465
    %v2499 = vunpack.c.l.b16 %v2466
    %v2500 = vunpack.c.l.b16 %v2467
    %v2501 = vunpack.c.l.b16 %v2468
    %v2502 = vunpack.c.l.b16 %v2469
    %v2503 = vunpack.c.l.b16 %v2470
    %v2504 = vunpack.c.l.b16 %v2471
    %v2505 = vunpack.c.l.b16 %v2472
    %v2506 = vunpack.c.l.b16 %v2473
    %v2507 = vunpack.c.l.b16 %v2474
    %v2508 = vpack.c.b16 %v2493, %v2492
    %v2509 = vpack.c.b16 %v2495, %v2494
    %v2510 = vpack.c.b16 %v2497, %v2496
    %v2511 = vpack.c.b16 %v2499, %v2498
    %v2512 = vpack.c.b16 %v2501, %v2500
    %v2513 = vpack.c.b16 %v2503, %v2502
    %v2514 = vpack.c.b16 %v2505, %v2504
    %v2515 = vpack.c.b16 %v2507, %v2506
    %2524 = vmatprep.subr.bf16.mxu0 0
    %2525 = vmatpush1.bf16.msra.mxu0 %v2515
    %2526 = vmatprep.subr.bf16.mxu0 0
    %2527 = vmatpush1.bf16.msra.mxu0 %v2514
    %2528 = vmatprep.subr.bf16.mxu0 0
    %2529 = vmatpush1.bf16.msra.mxu0 %v2513
    %2530 = vmatprep.subr.bf16.mxu0 0
    %2531 = vmatpush1.bf16.msra.mxu0 %v2512
    %2532 = vmatprep.subr.bf16.mxu0 0
    %2533 = vmatpush1.bf16.msra.mxu0 %v2511
    %2534 = vmatprep.subr.bf16.mxu0 0
    %2535 = vmatpush1.bf16.msra.mxu0 %v2510
    %2536 = vmatprep.subr.bf16.mxu0 0
    %2537 = vmatpush1.bf16.msra.mxu0 %v2509
    %2538 = vmatprep.subr.bf16.mxu0 0
    %2539 = vmatpush1.bf16.msra.mxu0 %v2508
    %2540 = vmatprep.subr.bf16.mxu0 0
    %2541 = vmatpush2.bf16.msra.mxu0 0
    %2542 = vmatprep.subr.bf16.mxu0 0
    %2543 = vmatpush2.bf16.msra.mxu0 0
    %2544 = vmatprep.subr.bf16.mxu0 0
    %2545 = vmatpush2.bf16.msra.mxu0 0
    %2546 = vmatprep.subr.bf16.mxu0 0
    %2547 = vmatpush2.bf16.msra.mxu0 0
    %2548 = vmatprep.subr.bf16.mxu0 0
    %2549 = vmatpush2.bf16.msra.mxu0 0
    %2550 = vmatprep.subr.bf16.mxu0 0
    %2551 = vmatpush2.bf16.msra.mxu0 0
    %2552 = vmatprep.subr.bf16.mxu0 0
    %2553 = vmatpush2.bf16.msra.mxu0 0
    %2554 = vmatprep.subr.bf16.mxu0 0
    %2555 = vmatpush2.bf16.msra.mxu0 0
    %2556 = vmatprep.mubr.bf16.mxu0 0
    %2557 = vmatmul.mubr.bf16.gmra.mxu0 %v2457
    %v2558 = vpop.f32.mrf.mxu0
    %v2559 = vadd.f32 %v2475, %v2558
    %v2560 = vpop.f32.mrf.mxu0
    %v2561 = vpop.f32.mrf.mxu0
    %v2562 = vadd.f32 %v2475, %v2561
    %v2563 = vpop.f32.mrf.mxu0
    %2564 = vmatprep.mubr.bf16.mxu0 0
    %2565 = vmatmul.mubr.bf16.gmra.mxu0 %v2458
    %v2566 = vpop.f32.mrf.mxu0
    %v2567 = vadd.f32 %v2475, %v2566
    %v2568 = vpop.f32.mrf.mxu0
    %v2569 = vpop.f32.mrf.mxu0
    %v2570 = vadd.f32 %v2475, %v2569
    %v2571 = vpop.f32.mrf.mxu0
    %2572 = vdwg.mxu0
    %v2573 = vadd.f32 %v1089, %v2559
    %v2574 = vadd.f32 %v1092, %v2562
    %v2575 = vadd.f32 %v1097, %v2567
    %v2576 = vadd.f32 %v1100, %v2570
    %2577 = vadd.xlane.f32.xlu0 %v2573
    %v2578 = vpop.xlane.xlu0 %2577
    %2579 = vadd.xlane.f32.xlu0 %v2574
    %v2580 = vpop.xlane.xlu0 %2579
    %2581 = vadd.xlane.f32.xlu0 %v2575
    %v2582 = vpop.xlane.xlu0 %2581
    %2583 = vadd.xlane.f32.xlu0 %v2576
    %v2584 = vpop.xlane.xlu0 %2583
    %v2585 = vrcp.pop 128.0
    %v2586 = vmul.f32 %v2578, %v2585
    %v2587 = vmul.f32 %v2580, %v2585
    %v2588 = vmul.f32 %v2582, %v2585
    %v2589 = vmul.f32 %v2584, %v2585
    %v2590 = vsub.f32 %v2573, %v2586
    %v2591 = vsub.f32 %v2574, %v2587
    %v2592 = vsub.f32 %v2575, %v2588
    %v2593 = vsub.f32 %v2576, %v2589
    %v2594 = vmul.f32 %v2590, %v2590
    %v2595 = vmul.f32 %v2591, %v2591
    %v2596 = vmul.f32 %v2592, %v2592
    %v2597 = vmul.f32 %v2593, %v2593
    %2598 = vadd.xlane.f32.xlu0 %v2594
    %v2599 = vpop.xlane.xlu0 %2598
    %2600 = vadd.xlane.f32.xlu0 %v2595
    %v2601 = vpop.xlane.xlu0 %2600
    %2602 = vadd.xlane.f32.xlu0 %v2596
    %v2603 = vpop.xlane.xlu0 %2602
    %2604 = vadd.xlane.f32.xlu0 %v2597
    %v2605 = vpop.xlane.xlu0 %2604
    %v2606 = vmul.f32 %v2599, %v2585
    %v2607 = vmul.f32 %v2601, %v2585
    %v2608 = vmul.f32 %v2603, %v2585
    %v2609 = vmul.f32 %v2605, %v2585
    %v2610 = vadd.f32 %v2606, 1e-05
    %v2611 = vadd.f32 %v2607, 1e-05
    %v2612 = vadd.f32 %v2608, 1e-05
    %v2613 = vadd.f32 %v2609, 1e-05
    %v2614 = vrsqrt.pop %v2610
    %v2615 = vrsqrt.pop %v2611
    %v2616 = vrsqrt.pop %v2612
    %v2617 = vrsqrt.pop %v2613
    %v2618 = vmul.f32 %v2590, %v2614
    %v2619 = vmul.f32 %v2591, %v2615
    %v2620 = vmul.f32 %v2592, %v2616
    %v2621 = vmul.f32 %v2593, %v2617
    %v2622 = vld [vmem:[%s5 + $0x4] ss:$0 sm:$0xff]
    %v2623 = vmul.f32 %v2618, %v2622
    %v2624 = vmul.f32 %v2619, %v2622
    %v2625 = vmul.f32 %v2620, %v2622
    %v2626 = vmul.f32 %v2621, %v2622
    %v2627 = vld [vmem:[%s5 + $0x5] ss:$0 sm:$0xff]
    %v2628 = vadd.f32 %v2623, %v2627
    %v2629 = vadd.f32 %v2624, %v2627
    %v2630 = vadd.f32 %v2625, %v2627
    %v2631 = vadd.f32 %v2626, %v2627
    %v2632 = vpack.c.bf16 %v2629, %v2628
    %v2633 = vpack.c.bf16 %v2631, %v2630
    %v2634 = vld [vmem:[#allocation2 + $0x14] sm:$0xff]
    %v2635 = vld [vmem:[#allocation2 + $0x34] sm:$0xff]
    %v2636 = vld [vmem:[#allocation2 + $0x54] sm:$0xff]
    %v2637 = vld [vmem:[#allocation2 + $0x74] sm:$0xff]
    %v2638 = vld [vmem:[#allocation2 + $0x94] sm:$0xff]
    %v2639 = vld [vmem:[#allocation2 + $0xb4] sm:$0xff]
    %v2640 = vld [vmem:[#allocation2 + $0xd4] sm:$0xff]
    %v2641 = vld [vmem:[#allocation2 + $0xf4] sm:$0xff]
    %v2642 = vld [vmem:[#allocation2 + $0x114] sm:$0xff]
    %v2643 = vld [vmem:[#allocation2 + $0x134] sm:$0xff]
    %v2644 = vld [vmem:[#allocation2 + $0x154] sm:$0xff]
    %v2645 = vld [vmem:[#allocation2 + $0x174] sm:$0xff]
    %v2646 = vld [vmem:[#allocation2 + $0x194] sm:$0xff]
    %v2647 = vld [vmem:[#allocation2 + $0x1b4] sm:$0xff]
    %v2648 = vld [vmem:[#allocation2 + $0x1d4] sm:$0xff]
    %v2649 = vld [vmem:[#allocation2 + $0x1f4] sm:$0xff]
    %s2650 = scalar_lea.vmem %s5, 6
    %v2651 = vld [vmem:[%s2650] ss:$8 sm:$0x3]
    %v2653 = vlaneseq
    %v2654 = vshrl.u32 %v2653, 7
    %v2655 = vsub.s32 0, %v2654
    %v2656 = vrot.slane %v2651, %v2655
    %v2657 = vlaneseq
    %v2658 = vshrl.u32 %v2657, 7
    %v2659 = vsub.s32 1, %v2658
    %v2660 = vrot.slane %v2651, %v2659
    %v2679 = vunpack.c.l.b16 %v2634
    %v2680 = vunpack.c.h.b16 %v2634
    %v2681 = vunpack.c.l.b16 %v2635
    %v2682 = vunpack.c.h.b16 %v2635
    %v2683 = vunpack.c.l.b16 %v2636
    %v2684 = vunpack.c.h.b16 %v2636
    %v2685 = vunpack.c.l.b16 %v2637
    %v2686 = vunpack.c.h.b16 %v2637
    %v2687 = vunpack.c.l.b16 %v2638
    %v2688 = vunpack.c.h.b16 %v2638
    %v2689 = vunpack.c.l.b16 %v2639
    %v2690 = vunpack.c.h.b16 %v2639
    %v2691 = vunpack.c.l.b16 %v2640
    %v2692 = vunpack.c.h.b16 %v2640
    %v2693 = vunpack.c.l.b16 %v2641
    %v2694 = vunpack.c.h.b16 %v2641
    %v2695 = vunpack.c.l.b16 %v2642
    %v2696 = vunpack.c.h.b16 %v2642
    %v2697 = vunpack.c.l.b16 %v2643
    %v2698 = vunpack.c.h.b16 %v2643
    %v2699 = vunpack.c.l.b16 %v2644
    %v2700 = vunpack.c.h.b16 %v2644
    %v2701 = vunpack.c.l.b16 %v2645
    %v2702 = vunpack.c.h.b16 %v2645
    %v2703 = vunpack.c.l.b16 %v2646
    %v2704 = vunpack.c.h.b16 %v2646
    %v2705 = vunpack.c.l.b16 %v2647
    %v2706 = vunpack.c.h.b16 %v2647
    %v2707 = vunpack.c.l.b16 %v2648
    %v2708 = vunpack.c.h.b16 %v2648
    %v2709 = vunpack.c.l.b16 %v2649
    %v2710 = vunpack.c.h.b16 %v2649
    %v2711 = vpack.c.b16 %v2681, %v2679
    %v2712 = vpack.c.b16 %v2682, %v2680
    %v2713 = vpack.c.b16 %v2685, %v2683
    %v2714 = vpack.c.b16 %v2686, %v2684
    %v2715 = vpack.c.b16 %v2689, %v2687
    %v2716 = vpack.c.b16 %v2690, %v2688
    %v2717 = vpack.c.b16 %v2693, %v2691
    %v2718 = vpack.c.b16 %v2694, %v2692
    %v2719 = vpack.c.b16 %v2697, %v2695
    %v2720 = vpack.c.b16 %v2698, %v2696
    %v2721 = vpack.c.b16 %v2701, %v2699
    %v2722 = vpack.c.b16 %v2702, %v2700
    %v2723 = vpack.c.b16 %v2705, %v2703
    %v2724 = vpack.c.b16 %v2706, %v2704
    %v2725 = vpack.c.b16 %v2709, %v2707
    %v2726 = vpack.c.b16 %v2710, %v2708
    %2743 = vmatprep.subr.bf16.mxu0 %v2726
    %2744 = vmatpush1.bf16.msra.mxu0 %v2725
    %2745 = vmatprep.subr.bf16.mxu0 %v2724
    %2746 = vmatpush1.bf16.msra.mxu0 %v2723
    %2747 = vmatprep.subr.bf16.mxu0 %v2722
    %2748 = vmatpush1.bf16.msra.mxu0 %v2721
    %2749 = vmatprep.subr.bf16.mxu0 %v2720
    %2750 = vmatpush1.bf16.msra.mxu0 %v2719
    %2751 = vmatprep.subr.bf16.mxu0 %v2718
    %2752 = vmatpush1.bf16.msra.mxu0 %v2717
    %2753 = vmatprep.subr.bf16.mxu0 %v2716
    %2754 = vmatpush1.bf16.msra.mxu0 %v2715
    %2755 = vmatprep.subr.bf16.mxu0 %v2714
    %2756 = vmatpush1.bf16.msra.mxu0 %v2713
    %2757 = vmatprep.subr.bf16.mxu0 %v2712
    %2758 = vmatpush1.bf16.msra.mxu0 %v2711
    %2759 = vmatprep.subr.bf16.mxu0 0
    %2760 = vmatpush2.bf16.msra.mxu0 0
    %2761 = vmatprep.subr.bf16.mxu0 0
    %2762 = vmatpush2.bf16.msra.mxu0 0
    %2763 = vmatprep.subr.bf16.mxu0 0
    %2764 = vmatpush2.bf16.msra.mxu0 0
    %2765 = vmatprep.subr.bf16.mxu0 0
    %2766 = vmatpush2.bf16.msra.mxu0 0
    %2767 = vmatprep.subr.bf16.mxu0 0
    %2768 = vmatpush2.bf16.msra.mxu0 0
    %2769 = vmatprep.subr.bf16.mxu0 0
    %2770 = vmatpush2.bf16.msra.mxu0 0
    %2771 = vmatprep.subr.bf16.mxu0 0
    %2772 = vmatpush2.bf16.msra.mxu0 0
    %2773 = vmatprep.subr.bf16.mxu0 0
    %2774 = vmatpush2.bf16.msra.mxu0 0
    %2775 = vmatprep.mubr.bf16.mxu0 0
    %2776 = vmatmul.mubr.bf16.gmra.mxu0 %v2632
    %v2777 = vpop.f32.mrf.mxu0
    %v2778 = vadd.f32 %v2656, %v2777
    %v2779 = vpop.f32.mrf.mxu0
    %v2780 = vadd.f32 %v2660, %v2779
    %v2781 = vpop.f32.mrf.mxu0
    %v2782 = vadd.f32 %v2656, %v2781
    %v2783 = vpop.f32.mrf.mxu0
    %v2784 = vadd.f32 %v2660, %v2783
    %2785 = vmatprep.mubr.bf16.mxu0 0
    %2786 = vmatmul.mubr.bf16.gmra.mxu0 %v2633
    %v2787 = vpop.f32.mrf.mxu0
    %v2788 = vadd.f32 %v2656, %v2787
    %v2789 = vpop.f32.mrf.mxu0
    %v2790 = vadd.f32 %v2660, %v2789
    %v2791 = vpop.f32.mrf.mxu0
    %v2792 = vadd.f32 %v2656, %v2791
    %v2793 = vpop.f32.mrf.mxu0
    %v2794 = vadd.f32 %v2660, %v2793
    %2795 = vdwg.mxu0
    %v2796 = vmax.f32 %v2778, 0.0
    %v2797 = vmax.f32 %v2780, 0.0
    %v2798 = vmax.f32 %v2782, 0.0
    %v2799 = vmax.f32 %v2784, 0.0
    %v2800 = vmax.f32 %v2788, 0.0
    %v2801 = vmax.f32 %v2790, 0.0
    %v2802 = vmax.f32 %v2792, 0.0
    %v2803 = vmax.f32 %v2794, 0.0
    %v2804 = vpack.c.bf16 %v2798, %v2796
    %v2805 = vpack.c.bf16 %v2799, %v2797
    %v2806 = vpack.c.bf16 %v2802, %v2800
    %v2807 = vpack.c.bf16 %v2803, %v2801
    %v2808 = vld [vmem:[#allocation5 + $0x200] sm:$0xf]
    %v2809 = vld [vmem:[#allocation5 + $0x204] sm:$0xf]
    %v2810 = vld [vmem:[#allocation5 + $0x208] sm:$0xf]
    %v2811 = vld [vmem:[#allocation5 + $0x20c] sm:$0xf]
    %v2812 = vld [vmem:[#allocation5 + $0x210] sm:$0xf]
    %v2813 = vld [vmem:[#allocation5 + $0x214] sm:$0xf]
    %v2814 = vld [vmem:[#allocation5 + $0x218] sm:$0xf]
    %v2815 = vld [vmem:[#allocation5 + $0x21c] sm:$0xf]
    %v2816 = vld [vmem:[#allocation5 + $0x220] sm:$0xf]
    %v2817 = vld [vmem:[#allocation5 + $0x224] sm:$0xf]
    %v2818 = vld [vmem:[#allocation5 + $0x228] sm:$0xf]
    %v2819 = vld [vmem:[#allocation5 + $0x22c] sm:$0xf]
    %v2820 = vld [vmem:[#allocation5 + $0x230] sm:$0xf]
    %v2821 = vld [vmem:[#allocation5 + $0x234] sm:$0xf]
    %v2822 = vld [vmem:[#allocation5 + $0x238] sm:$0xf]
    %v2823 = vld [vmem:[#allocation5 + $0x23c] sm:$0xf]
    %v2824 = vld [vmem:[#allocation5 + $0x240] sm:$0xf]
    %v2825 = vld [vmem:[#allocation5 + $0x244] sm:$0xf]
    %v2826 = vld [vmem:[#allocation5 + $0x248] sm:$0xf]
    %v2827 = vld [vmem:[#allocation5 + $0x24c] sm:$0xf]
    %v2828 = vld [vmem:[#allocation5 + $0x250] sm:$0xf]
    %v2829 = vld [vmem:[#allocation5 + $0x254] sm:$0xf]
    %v2830 = vld [vmem:[#allocation5 + $0x258] sm:$0xf]
    %v2831 = vld [vmem:[#allocation5 + $0x25c] sm:$0xf]
    %v2832 = vld [vmem:[#allocation5 + $0x260] sm:$0xf]
    %v2833 = vld [vmem:[#allocation5 + $0x264] sm:$0xf]
    %v2834 = vld [vmem:[#allocation5 + $0x268] sm:$0xf]
    %v2835 = vld [vmem:[#allocation5 + $0x26c] sm:$0xf]
    %v2836 = vld [vmem:[#allocation5 + $0x270] sm:$0xf]
    %v2837 = vld [vmem:[#allocation5 + $0x274] sm:$0xf]
    %v2838 = vld [vmem:[#allocation5 + $0x278] sm:$0xf]
    %v2839 = vld [vmem:[#allocation5 + $0x27c] sm:$0xf]
    %v2840 = vld [vmem:[%s5 + $0x7] ss:$0 sm:$0xff]
    %v2873 = vunpack.c.l.b16 %v2808
    %v2874 = vunpack.c.l.b16 %v2809
    %v2875 = vunpack.c.l.b16 %v2810
    %v2876 = vunpack.c.l.b16 %v2811
    %v2877 = vunpack.c.l.b16 %v2812
    %v2878 = vunpack.c.l.b16 %v2813
    %v2879 = vunpack.c.l.b16 %v2814
    %v2880 = vunpack.c.l.b16 %v2815
    %v2881 = vunpack.c.l.b16 %v2816
    %v2882 = vunpack.c.l.b16 %v2817
    %v2883 = vunpack.c.l.b16 %v2818
    %v2884 = vunpack.c.l.b16 %v2819
    %v2885 = vunpack.c.l.b16 %v2820
    %v2886 = vunpack.c.l.b16 %v2821
    %v2887 = vunpack.c.l.b16 %v2822
    %v2888 = vunpack.c.l.b16 %v2823
    %v2889 = vunpack.c.l.b16 %v2824
    %v2890 = vunpack.c.l.b16 %v2825
    %v2891 = vunpack.c.l.b16 %v2826
    %v2892 = vunpack.c.l.b16 %v2827
    %v2893 = vunpack.c.l.b16 %v2828
    %v2894 = vunpack.c.l.b16 %v2829
    %v2895 = vunpack.c.l.b16 %v2830
    %v2896 = vunpack.c.l.b16 %v2831
    %v2897 = vunpack.c.l.b16 %v2832
    %v2898 = vunpack.c.l.b16 %v2833
    %v2899 = vunpack.c.l.b16 %v2834
    %v2900 = vunpack.c.l.b16 %v2835
    %v2901 = vunpack.c.l.b16 %v2836
    %v2902 = vunpack.c.l.b16 %v2837
    %v2903 = vunpack.c.l.b16 %v2838
    %v2904 = vunpack.c.l.b16 %v2839
    %v2905 = vpack.c.b16 %v2874, %v2873
    %v2906 = vpack.c.b16 %v2876, %v2875
    %v2907 = vpack.c.b16 %v2878, %v2877
    %v2908 = vpack.c.b16 %v2880, %v2879
    %v2909 = vpack.c.b16 %v2882, %v2881
    %v2910 = vpack.c.b16 %v2884, %v2883
    %v2911 = vpack.c.b16 %v2886, %v2885
    %v2912 = vpack.c.b16 %v2888, %v2887
    %v2913 = vpack.c.b16 %v2890, %v2889
    %v2914 = vpack.c.b16 %v2892, %v2891
    %v2915 = vpack.c.b16 %v2894, %v2893
    %v2916 = vpack.c.b16 %v2896, %v2895
    %v2917 = vpack.c.b16 %v2898, %v2897
    %v2918 = vpack.c.b16 %v2900, %v2899
    %v2919 = vpack.c.b16 %v2902, %v2901
    %v2920 = vpack.c.b16 %v2904, %v2903
    %2937 = vmatprep.subr.bf16.mxu0 0
    %2938 = vmatpush1.bf16.msra.mxu0 %v2912
    %2939 = vmatprep.subr.bf16.mxu0 0
    %2940 = vmatpush1.bf16.msra.mxu0 %v2911
    %2941 = vmatprep.subr.bf16.mxu0 0
    %2942 = vmatpush1.bf16.msra.mxu0 %v2910
    %2943 = vmatprep.subr.bf16.mxu0 0
    %2944 = vmatpush1.bf16.msra.mxu0 %v2909
    %2945 = vmatprep.subr.bf16.mxu0 0
    %2946 = vmatpush1.bf16.msra.mxu0 %v2908
    %2947 = vmatprep.subr.bf16.mxu0 0
    %2948 = vmatpush1.bf16.msra.mxu0 %v2907
    %2949 = vmatprep.subr.bf16.mxu0 0
    %2950 = vmatpush1.bf16.msra.mxu0 %v2906
    %2951 = vmatprep.subr.bf16.mxu0 0
    %2952 = vmatpush1.bf16.msra.mxu0 %v2905
    %2953 = vmatprep.subr.bf16.mxu0 0
    %2954 = vmatpush2.bf16.msra.mxu0 %v2920
    %2955 = vmatprep.subr.bf16.mxu0 0
    %2956 = vmatpush2.bf16.msra.mxu0 %v2919
    %2957 = vmatprep.subr.bf16.mxu0 0
    %2958 = vmatpush2.bf16.msra.mxu0 %v2918
    %2959 = vmatprep.subr.bf16.mxu0 0
    %2960 = vmatpush2.bf16.msra.mxu0 %v2917
    %2961 = vmatprep.subr.bf16.mxu0 0
    %2962 = vmatpush2.bf16.msra.mxu0 %v2916
    %2963 = vmatprep.subr.bf16.mxu0 0
    %2964 = vmatpush2.bf16.msra.mxu0 %v2915
    %2965 = vmatprep.subr.bf16.mxu0 0
    %2966 = vmatpush2.bf16.msra.mxu0 %v2914
    %2967 = vmatprep.subr.bf16.mxu0 0
    %2968 = vmatpush2.bf16.msra.mxu0 %v2913
    %2969 = vmatprep.mubr.bf16.mxu0 %v2805
    %2970 = vmatmul.mubr.bf16.gmra.mxu0 %v2804
    %v2971 = vpop.f32.mrf.mxu0
    %v2972 = vadd.f32 %v2840, %v2971
    %v2973 = vpop.f32.mrf.mxu0
    %v2974 = vpop.f32.mrf.mxu0
    %v2975 = vadd.f32 %v2840, %v2974
    %v2976 = vpop.f32.mrf.mxu0
    %2977 = vmatprep.mubr.bf16.mxu0 %v2807
    %2978 = vmatmul.mubr.bf16.gmra.mxu0 %v2806
    %v2979 = vpop.f32.mrf.mxu0
    %v2980 = vadd.f32 %v2840, %v2979
    %v2981 = vpop.f32.mrf.mxu0
    %v2982 = vpop.f32.mrf.mxu0
    %v2983 = vadd.f32 %v2840, %v2982
    %v2984 = vpop.f32.mrf.mxu0
    %2985 = vdwg.mxu0
    %v2986 = vadd.f32 %v2628, %v2972
    %v2987 = vadd.f32 %v2629, %v2975
    %v2988 = vadd.f32 %v2630, %v2980
    %v2989 = vadd.f32 %v2631, %v2983
    %2990 = vadd.xlane.f32.xlu0 %v2986
    %v2991 = vpop.xlane.xlu0 %2990
    %2992 = vadd.xlane.f32.xlu0 %v2987
    %v2993 = vpop.xlane.xlu0 %2992
    %2994 = vadd.xlane.f32.xlu0 %v2988
    %v2995 = vpop.xlane.xlu0 %2994
    %2996 = vadd.xlane.f32.xlu0 %v2989
    %v2997 = vpop.xlane.xlu0 %2996
    %v2998 = vmul.f32 %v2991, %v2585
    %v2999 = vmul.f32 %v2993, %v2585
    %v3000 = vmul.f32 %v2995, %v2585
    %v3001 = vmul.f32 %v2997, %v2585
    %v3002 = vsub.f32 %v2986, %v2998
    %v3003 = vsub.f32 %v2987, %v2999
    %v3004 = vsub.f32 %v2988, %v3000
    %v3005 = vsub.f32 %v2989, %v3001
    %v3006 = vmul.f32 %v3002, %v3002
    %v3007 = vmul.f32 %v3003, %v3003
    %v3008 = vmul.f32 %v3004, %v3004
    %v3009 = vmul.f32 %v3005, %v3005
    %3010 = vadd.xlane.f32.xlu0 %v3006
    %v3011 = vpop.xlane.xlu0 %3010
    %3012 = vadd.xlane.f32.xlu0 %v3007
    %v3013 = vpop.xlane.xlu0 %3012
    %3014 = vadd.xlane.f32.xlu0 %v3008
    %v3015 = vpop.xlane.xlu0 %3014
    %3016 = vadd.xlane.f32.xlu0 %v3009
    %v3017 = vpop.xlane.xlu0 %3016
    %v3018 = vmul.f32 %v3011, %v2585
    %v3019 = vmul.f32 %v3013, %v2585
    %v3020 = vmul.f32 %v3015, %v2585
    %v3021 = vmul.f32 %v3017, %v2585
    %v3022 = vadd.f32 %v3018, 1e-05
    %v3023 = vadd.f32 %v3019, 1e-05
    %v3024 = vadd.f32 %v3020, 1e-05
    %v3025 = vadd.f32 %v3021, 1e-05
    %v3026 = vrsqrt.pop %v3022
    %v3027 = vrsqrt.pop %v3023
    %v3028 = vrsqrt.pop %v3024
    %v3029 = vrsqrt.pop %v3025
    %v3030 = vmul.f32 %v3002, %v3026
    %v3031 = vmul.f32 %v3003, %v3027
    %v3032 = vmul.f32 %v3004, %v3028
    %v3033 = vmul.f32 %v3005, %v3029
    %v3034 = vld [vmem:[%s5 + $0x18] ss:$0 sm:$0xff]
    %v3035 = vmul.f32 %v3030, %v3034
    %v3036 = vmul.f32 %v3031, %v3034
    %v3037 = vmul.f32 %v3032, %v3034
    %v3038 = vmul.f32 %v3033, %v3034
    %v3039 = vld [vmem:[%s5 + $0x19] ss:$0 sm:$0xff]
    %v3040 = vadd.f32 %v3035, %v3039
    %v3041 = vadd.f32 %v3036, %v3039
    %v3042 = vadd.f32 %v3037, %v3039
    %v3043 = vadd.f32 %v3038, %v3039
    %v3044 = vlaneseq
    %v3045 = vshrl.u32 %v3044, 7
    %v3046 = vsub.s32 0, %v3045
    %v3047 = vrot.slane %v64, %v3046
    %3049 = vbcast.lane.b32.xlu0 %v3047, 256
    %v3050 = vpop.permute.xlu0 %3049
    %s3052 = sor.u32 256, 8
    %3053 = vbcast.lane.b32.xlu0 %v3047, %s3052
    %v3054 = vpop.permute.xlu0 %3053
    %v3055 = vlaneseq
    %v3056 = vshrl.u32 %v3055, 7
    %v3057 = vsub.s32 1, %v3056
    %v3058 = vrot.slane %v64, %v3057
    %3060 = vbcast.lane.b32.xlu0 %v3058, 256
    %v3061 = vpop.permute.xlu0 %3060
    %s3063 = sor.u32 256, 8
    %3064 = vbcast.lane.b32.xlu0 %v3058, %s3063
    %v3065 = vpop.permute.xlu0 %3064
    %v3066 = vmul.f32 %v3040, %v3050
    %v3067 = vmul.f32 %v3041, %v3054
    %v3068 = vmul.f32 %v3042, %v3061
    %v3069 = vmul.f32 %v3043, %v3065
    %v3070 = vadd.f32 %v3066, %v3067
    %v3071 = vrot.slane %v3070, 4
    %v3072 = vadd.f32 %v3070, %v3071
    %v3073 = vrot.slane %v3072, 2
    %v3074 = vadd.f32 %v3072, %v3073
    %v3075 = vrot.slane %v3074, 1
    %v3076 = vadd.f32 %v3074, %v3075
    %v3077 = vadd.f32 %v3068, %v3069
    %v3078 = vrot.slane %v3077, 4
    %v3079 = vadd.f32 %v3077, %v3078
    %v3080 = vrot.slane %v3079, 2
    %v3081 = vadd.f32 %v3079, %v3080
    %v3082 = vrot.slane %v3081, 1
    %v3083 = vadd.f32 %v3081, %v3082
    %vm3084 = vcmask 123904
    %v3085 = vsel %vm3084, %v64, 0.0
    %3086 = vadd.xlane.f32.xlu0 %v3085
    %v3087 = vpop.xlane.xlu0 %3086
    %v3089 = vrot.slane %v3087, 1
    %v3092 = vrcp.pop %v3087
    %v3093 = vmul.f32 %v3076, %v3092
    %v3094 = vrcp.pop %v3089
    %v3095 = vmul.f32 %v3083, %v3094
    %v3096 = vpack.c.bf16 %v3093, %v3093
    %v3097 = vpack.c.bf16 %v3095, %v3095
    %v3098 = vld [vmem:[#allocation2 + $0x1c] sm:$0xf]
    %v3099 = vld [vmem:[#allocation2 + $0x3c] sm:$0xf]
    %v3100 = vld [vmem:[#allocation2 + $0x5c] sm:$0xf]
    %v3101 = vld [vmem:[#allocation2 + $0x7c] sm:$0xf]
    %v3102 = vld [vmem:[#allocation2 + $0x9c] sm:$0xf]
    %v3103 = vld [vmem:[#allocation2 + $0xbc] sm:$0xf]
    %v3104 = vld [vmem:[#allocation2 + $0xdc] sm:$0xf]
    %v3105 = vld [vmem:[#allocation2 + $0xfc] sm:$0xf]
    %v3106 = vld [vmem:[#allocation2 + $0x11c] sm:$0xf]
    %v3107 = vld [vmem:[#allocation2 + $0x13c] sm:$0xf]
    %v3108 = vld [vmem:[#allocation2 + $0x15c] sm:$0xf]
    %v3109 = vld [vmem:[#allocation2 + $0x17c] sm:$0xf]
    %v3110 = vld [vmem:[#allocation2 + $0x19c] sm:$0xf]
    %v3111 = vld [vmem:[#allocation2 + $0x1bc] sm:$0xf]
    %v3112 = vld [vmem:[#allocation2 + $0x1dc] sm:$0xf]
    %v3113 = vld [vmem:[#allocation2 + $0x1fc] sm:$0xf]
    %v3114 = vld [vmem:[%s5 + $0x1a] ss:$0 sm:$0xff]
    %v3117 = vunpack.c.l.b16 %v3096
    %v3118 = vunpack.c.l.b16 %v3097
    %v3119 = vrot.slane %v3118, 7
    %vm3120 = vcmask 1041409
    %v3121 = vsel %vm3120, %v3119, %v3117
    %v3122 = vpack.c.b16 %v3121, %v3121
    %v3140 = vunpack.c.l.b16 %v3098
    %v3141 = vunpack.c.l.b16 %v3099
    %v3142 = vunpack.c.l.b16 %v3100
    %v3143 = vunpack.c.l.b16 %v3101
    %v3144 = vunpack.c.l.b16 %v3102
    %v3145 = vunpack.c.l.b16 %v3103
    %v3146 = vunpack.c.l.b16 %v3104
    %v3147 = vunpack.c.l.b16 %v3105
    %v3148 = vunpack.c.l.b16 %v3106
    %v3149 = vunpack.c.l.b16 %v3107
    %v3150 = vunpack.c.l.b16 %v3108
    %v3151 = vunpack.c.l.b16 %v3109
    %v3152 = vunpack.c.l.b16 %v3110
    %v3153 = vunpack.c.l.b16 %v3111
    %v3154 = vunpack.c.l.b16 %v3112
    %v3155 = vunpack.c.l.b16 %v3113
    %v3156 = vpack.c.b16 %v3141, %v3140
    %v3157 = vpack.c.b16 %v3143, %v3142
    %v3158 = vpack.c.b16 %v3145, %v3144
    %v3159 = vpack.c.b16 %v3147, %v3146
    %v3160 = vpack.c.b16 %v3149, %v3148
    %v3161 = vpack.c.b16 %v3151, %v3150
    %v3162 = vpack.c.b16 %v3153, %v3152
    %v3163 = vpack.c.b16 %v3155, %v3154
    %3172 = vmatprep.subr.bf16.mxu0 0
    %3173 = vmatpush1.bf16.msra.mxu0 %v3163
    %3174 = vmatprep.subr.bf16.mxu0 0
    %3175 = vmatpush1.bf16.msra.mxu0 %v3162
    %3176 = vmatprep.subr.bf16.mxu0 0
    %3177 = vmatpush1.bf16.msra.mxu0 %v3161
    %3178 = vmatprep.subr.bf16.mxu0 0
    %3179 = vmatpush1.bf16.msra.mxu0 %v3160
    %3180 = vmatprep.subr.bf16.mxu0 0
    %3181 = vmatpush1.bf16.msra.mxu0 %v3159
    %3182 = vmatprep.subr.bf16.mxu0 0
    %3183 = vmatpush1.bf16.msra.mxu0 %v3158
    %3184 = vmatprep.subr.bf16.mxu0 0
    %3185 = vmatpush1.bf16.msra.mxu0 %v3157
    %3186 = vmatprep.subr.bf16.mxu0 0
    %3187 = vmatpush1.bf16.msra.mxu0 %v3156
    %3188 = vmatprep.subr.bf16.mxu0 0
    %3189 = vmatpush2.bf16.msra.mxu0 0
    %3190 = vmatprep.subr.bf16.mxu0 0
    %3191 = vmatpush2.bf16.msra.mxu0 0
    %3192 = vmatprep.subr.bf16.mxu0 0
    %3193 = vmatpush2.bf16.msra.mxu0 0
    %3194 = vmatprep.subr.bf16.mxu0 0
    %3195 = vmatpush2.bf16.msra.mxu0 0
    %3196 = vmatprep.subr.bf16.mxu0 0
    %3197 = vmatpush2.bf16.msra.mxu0 0
    %3198 = vmatprep.subr.bf16.mxu0 0
    %3199 = vmatpush2.bf16.msra.mxu0 0
    %3200 = vmatprep.subr.bf16.mxu0 0
    %3201 = vmatpush2.bf16.msra.mxu0 0
    %3202 = vmatprep.subr.bf16.mxu0 0
    %3203 = vmatpush2.bf16.msra.mxu0 0
    %3204 = vmatprep.mubr.bf16.mxu0 0
    %3205 = vmatmul.mubr.bf16.gmra.mxu0 %v3122
    %v3206 = vpop.f32.mrf.mxu0
    %v3207 = vadd.f32 %v3114, %v3206
    %v3208 = vpop.f32.mrf.mxu0
    %v3209 = vpop.f32.mrf.mxu0
    %v3210 = vpop.f32.mrf.mxu0
    %3211 = vdwg.mxu0
    %3212 = vst [vmem:[#allocation7] sm:$0x3] %v3207
    // Predicated region
    $region34: #{model_v0_forward.1} parent=1 // pred_check
      _
    $region35: #{model_v0_forward.1} parent=1 // pred_check_branch
      %3214 = sbr.rel (0) target = $region37
    $region36: #{model_v0_forward.1} parent=1 // pred_region
      %s3216 = ssub.s32 32, 32
      %3217 = vsyncadd [#allocation4], %s3216
      %s3219 = sshll.u32 [#allocation7], 4
      %s3220 = int_to_ptr.vmem [resolvable:$true] %s3219
      %3222 = dma.vmem_to_hbm [thread:$0]  %s3220, 32, %s6, [#allocation4]
    $region37: #{model_v0_forward.1} parent=1 // pred_fallthru
      _
    // Predicated region
    $region38: #{model_v0_forward.1} parent=1 // pred_check
      _
    $region39: #{model_v0_forward.1} parent=1 // pred_check_branch
      %3224 = sbr.rel (0) target = $region41
    $region40: #{model_v0_forward.1} parent=1 // pred_region
      %3225 = dma.done [#allocation4], 32
    $region41: #{model_v0_forward.1} parent=1 // pred_fallthru
      _
    %3226 = vsyncpa [#allocation3], 1
    %3227 = vsyncpa [#allocation6], 1
    %3228 = vsyncpa [#allocation4], 1

</llo_original>
